<compile_context>
chip_gen: v7x
topology: tpu7x:2x2x1
jax: 0.10.0
libtpu: 0.0.40
codegen_flags: <defaults>
</compile_context>

<pallas_src>
import functools
import numpy as np

import jax
import jax.numpy as jnp
from jax import lax
from jax.experimental import pallas as pl
from jax.experimental.pallas import tpu as pltpu


# ----------------------------- tiling helpers ------------------------------

def _pick_tile(dim, candidates):
    """Largest candidate that evenly divides `dim`, else the full dim."""
    for c in candidates:
        if c <= dim and dim % c == 0:
            return c
    return dim


# ----------------------------- dense (matmul) -------------------------------

def _dense_kernel(x_ref, w_ref, b_ref, o_ref, acc_ref, *, relu):
    @pl.when(pl.program_id(2) == 0)
    def _init():
        acc_ref[...] = jnp.zeros_like(acc_ref)

    acc_ref[...] += jnp.dot(
        x_ref[...].astype(jnp.bfloat16),
        w_ref[...].astype(jnp.bfloat16),
        preferred_element_type=jnp.float32)

    @pl.when(pl.program_id(2) == pl.num_programs(2) - 1)
    def _finalize():
        y = acc_ref[...] + b_ref[...]
        if relu:
            y = jnp.maximum(y, 0.0)
        o_ref[...] = y.astype(o_ref.dtype)


def dense(x2d, w, b, *, relu=False):
    """y = x2d @ w + b (optional ReLU). x2d: [M, K] f32, w: [K, N] (bf16 ok)."""
    M, K = x2d.shape
    Kw, N = w.shape
    assert K == Kw
    tm = _pick_tile(M, (256, 128, 64, 32, 16, 8))
    tn = _pick_tile(N, (512, 256, 128))
    tk = _pick_tile(K, (512, 256, 128))
    grid = (M // tm, N // tn, K // tk)

    return pl.pallas_call(
        functools.partial(_dense_kernel, relu=relu),
        grid=grid,
        in_specs=[
            pl.BlockSpec((tm, tk), lambda i, j, k: (i, k)),
            pl.BlockSpec((tk, tn), lambda i, j, k: (k, j)),
            pl.BlockSpec((1, tn), lambda i, j, k: (0, j)),
        ],
        out_specs=pl.BlockSpec((tm, tn), lambda i, j, k: (i, j)),
        out_shape=jax.ShapeDtypeStruct((M, N), jnp.float32),
        scratch_shapes=[pltpu.VMEM((tm, tn), jnp.float32)],
        compiler_params=pltpu.CompilerParams(
            dimension_semantics=("parallel", "parallel", "arbitrary")),
    )(x2d, w, b.reshape(1, N))


# ------------------------ residual add + LayerNorm ---------------------------

def _add_ln_kernel(x_ref, r_ref, g_ref, b_ref, o_ref):
    x = x_ref[...] + r_ref[...]
    mu = jnp.mean(x, axis=-1, keepdims=True)
    xc = x - mu
    var = jnp.mean(xc * xc, axis=-1, keepdims=True)
    o_ref[...] = xc * lax.rsqrt(var + 1e-5) * g_ref[...] + b_ref[...]


def add_layer_norm(x, sub, g, b):
    """LayerNorm(x + sub), row-tiled. x, sub: [B, S, D]."""
    B, S, D = x.shape
    N = B * S
    x2 = x.reshape(N, D)
    r2 = sub.reshape(N, D)
    tm = _pick_tile(N, (512, 256, 128, 64, 32, 16, 8))
    y = pl.pallas_call(
        _add_ln_kernel,
        grid=(N // tm,),
        in_specs=[
            pl.BlockSpec((tm, D), lambda i: (i, 0)),
            pl.BlockSpec((tm, D), lambda i: (i, 0)),
            pl.BlockSpec((1, D), lambda i: (0, 0)),
            pl.BlockSpec((1, D), lambda i: (0, 0)),
        ],
        out_specs=pl.BlockSpec((tm, D), lambda i: (i, 0)),
        out_shape=jax.ShapeDtypeStruct((N, D), jnp.float32),
        compiler_params=pltpu.CompilerParams(
            dimension_semantics=("parallel",)),
    )(x2, r2, g.reshape(1, D), b.reshape(1, D))
    return y.reshape(B, S, D)


# ------------------------------- attention -----------------------------------

def _attn_kernel(q_ref, kv_ref, o_ref, *, num_heads, scale, causal):
    q_all = q_ref[0]            # (Sq, D)  f32
    kv_all = kv_ref[0]          # (Sk, 2D) f32
    Sq, D = q_all.shape
    Sk = kv_all.shape[0]
    dh = D // num_heads
    k_all = kv_all[:, :D]
    v_all = kv_all[:, D:]

    if causal:
        rows = lax.broadcasted_iota(jnp.int32, (Sq, Sk), 0)
        cols = lax.broadcasted_iota(jnp.int32, (Sq, Sk), 1)
        neg = jnp.where(cols > rows, jnp.float32(-1e9), jnp.float32(0.0))

    outs = []
    for h in range(num_heads):                      # static unrolled head loop
        sl = slice(h * dh, (h + 1) * dh)
        qh = q_all[:, sl].astype(jnp.bfloat16)
        kh = k_all[:, sl].astype(jnp.bfloat16)
        vh = v_all[:, sl].astype(jnp.bfloat16)
        # contract on the feature dim of both operands -> no in-kernel k.T
        s = lax.dot_general(qh, kh, (((1,), (1,)), ((), ())),
                            preferred_element_type=jnp.float32) * scale
        if causal:
            s = s + neg
        s = s - jnp.max(s, axis=-1, keepdims=True)
        p = jnp.exp(s)
        inv = pl.reciprocal(jnp.sum(p, axis=-1, keepdims=True), approx=True)
        p = p * inv
        outs.append(jnp.dot(p.astype(jnp.bfloat16), vh,
                            preferred_element_type=jnp.float32))
    # single lane-dense [Sq, H*dh] store
    o_ref[0] = jnp.concatenate(outs, axis=-1)


def attention(q, kv, num_heads, causal=False):
    """q: [B, Sq, D]; kv: [B, Sk, 2D] (K and V concatenated on last dim)."""
    B, Sq, D = q.shape
    Sk = kv.shape[1]
    scale = 1.0 / float(np.sqrt(D // num_heads))
    return pl.pallas_call(
        functools.partial(_attn_kernel, num_heads=num_heads,
                          scale=scale, causal=causal),
        grid=(B,),
        in_specs=[
            pl.BlockSpec((1, Sq, D), lambda b: (b, 0, 0)),
            pl.BlockSpec((1, Sk, 2 * D), lambda b: (b, 0, 0)),
        ],
        out_specs=pl.BlockSpec((1, Sq, D), lambda b: (b, 0, 0)),
        out_shape=jax.ShapeDtypeStruct((B, Sq, D), jnp.float32),
        compiler_params=pltpu.CompilerParams(
            dimension_semantics=("parallel",)),
    )(q, kv)


# ----------------------------- model pieces ---------------------------------

def positional_encoding(max_len, d_model):
    pos = np.arange(max_len, dtype=np.float32)[:, None]
    i = np.arange(d_model, dtype=np.float32)[None, :]
    angle = pos / np.power(10000.0, (2.0 * np.floor(i / 2.0)) / d_model)
    pe = np.zeros((max_len, d_model), np.float32)
    pe[:, 0::2] = np.sin(angle[:, 0::2])
    pe[:, 1::2] = np.cos(angle[:, 1::2])
    return jnp.asarray(pe)


def self_attention(x, p, num_heads, causal=False):
    B, S, D = x.shape
    # fused QKV projection: one [D, 3D] matmul, one HBM read of x
    qkv = dense(x.reshape(B * S, D), p["w_qkv"], p["b_qkv"]).reshape(B, S, 3 * D)
    q = qkv[..., :D]
    kv = qkv[..., D:]
    o = attention(q, kv, num_heads, causal=causal)
    o = dense(o.reshape(B * S, D), p["wo"], p["bo"])
    return o.reshape(B, S, D)


def cross_attention(x_q, x_kv, p, num_heads):
    B, Sq, D = x_q.shape
    Sk = x_kv.shape[1]
    q = dense(x_q.reshape(B * Sq, D), p["wq"], p["bq"]).reshape(B, Sq, D)
    # fused KV projection: one [D, 2D] matmul on the encoder states
    kv = dense(x_kv.reshape(B * Sk, D), p["w_kv"], p["b_kv"]).reshape(B, Sk, 2 * D)
    o = attention(q, kv, num_heads, causal=False)
    o = dense(o.reshape(B * Sq, D), p["wo"], p["bo"])
    return o.reshape(B, Sq, D)


def feed_forward(x, p):
    B, S, D = x.shape
    h = dense(x.reshape(B * S, D), p["w1"], p["b1"], relu=True)
    o = dense(h, p["w2"], p["b2"])
    return o.reshape(B, S, D)


def encoder_block(x, p, num_heads):
    a = self_attention(x, p["self_attn"], num_heads, causal=False)
    x = add_layer_norm(x, a, p["ln1_g"], p["ln1_b"])
    f = feed_forward(x, p["ffn"])
    x = add_layer_norm(x, f, p["ln2_g"], p["ln2_b"])
    return x


def decoder_block(y, enc, p, num_heads):
    a = self_attention(y, p["self_attn"], num_heads, causal=True)
    y = add_layer_norm(y, a, p["ln1_g"], p["ln1_b"])
    c = cross_attention(y, enc, p["cross_attn"], num_heads)
    y = add_layer_norm(y, c, p["ln2_g"], p["ln2_b"])
    f = feed_forward(y, p["ffn"])
    y = add_layer_norm(y, f, p["ln3_g"], p["ln3_b"])
    return y


def transformer_forward(params, src_tokens, tgt_tokens, *, num_heads, max_len):
    d_model = params["emb"].shape[1]
    pe = positional_encoding(max_len, d_model)

    s_src = src_tokens.shape[1]
    s_tgt = tgt_tokens.shape[1]
    # embedding gather + PE add left to XLA (no clean dense Pallas win here)
    src = jnp.take(params["emb"], src_tokens, axis=0) + pe[None, :s_src, :]
    tgt = jnp.take(params["emb"], tgt_tokens, axis=0) + pe[None, :s_tgt, :]

    enc = src
    for p in params["encoders"]:
        enc = encoder_block(enc, p, num_heads)

    dec = tgt
    for p in params["decoders"]:
        dec = decoder_block(dec, enc, p, num_heads)

    B, S, D = dec.shape
    vocab = params["out_w"].shape[1]
    logits = dense(dec.reshape(B * S, D), params["out_w"], params["out_b"])
    return logits.reshape(B, S, vocab)


# ----------------------------- parameter init -------------------------------

def _init_linear(key, din, dout):
    w = jax.random.normal(key, (din, dout), jnp.float32) * 0.02
    return w, jnp.zeros((dout,), jnp.float32)


def init_params(key, vocab_size, max_len, d_model, num_heads,
                num_encoders=1, num_decoders=1, d_ff=None):
    d_ff = d_ff or 4 * d_model
    keys = iter(jax.random.split(key, 256))

    def self_attn_params():
        wq, bq = _init_linear(next(keys), d_model, d_model)
        wk, bk = _init_linear(next(keys), d_model, d_model)
        wv, bv = _init_linear(next(keys), d_model, d_model)
        wo, bo = _init_linear(next(keys), d_model, d_model)
        return dict(
            w_qkv=jnp.concatenate([wq, wk, wv], axis=1).astype(jnp.bfloat16),
            b_qkv=jnp.concatenate([bq, bk, bv], axis=0),
            wo=wo.astype(jnp.bfloat16), bo=bo)

    def cross_attn_params():
        wq, bq = _init_linear(next(keys), d_model, d_model)
        wk, bk = _init_linear(next(keys), d_model, d_model)
        wv, bv = _init_linear(next(keys), d_model, d_model)
        wo, bo = _init_linear(next(keys), d_model, d_model)
        return dict(
            wq=wq.astype(jnp.bfloat16), bq=bq,
            w_kv=jnp.concatenate([wk, wv], axis=1).astype(jnp.bfloat16),
            b_kv=jnp.concatenate([bk, bv], axis=0),
            wo=wo.astype(jnp.bfloat16), bo=bo)

    def ffn_params():
        w1, b1 = _init_linear(next(keys), d_model, d_ff)
        w2, b2 = _init_linear(next(keys), d_ff, d_model)
        return dict(w1=w1.astype(jnp.bfloat16), b1=b1,
                    w2=w2.astype(jnp.bfloat16), b2=b2)

    def ln():
        return (jnp.ones((d_model,), jnp.float32),
                jnp.zeros((d_model,), jnp.float32))

    encoders = []
    for _ in range(num_encoders):
        g1, b1 = ln(); g2, b2 = ln()
        encoders.append(dict(self_attn=self_attn_params(), ffn=ffn_params(),
                             ln1_g=g1, ln1_b=b1, ln2_g=g2, ln2_b=b2))

    decoders = []
    for _ in range(num_decoders):
        g1, b1 = ln(); g2, b2 = ln(); g3, b3 = ln()
        decoders.append(dict(self_attn=self_attn_params(),
                             cross_attn=cross_attn_params(),
                             ffn=ffn_params(),
                             ln1_g=g1, ln1_b=b1, ln2_g=g2, ln2_b=b2,
                             ln3_g=g3, ln3_b=b3))

    emb = jax.random.normal(next(keys), (vocab_size, d_model), jnp.float32) * 0.02
    out_w, out_b = _init_linear(next(keys), d_model, vocab_size)

    return dict(emb=emb, encoders=encoders, decoders=decoders,
                out_w=out_w.astype(jnp.bfloat16), out_b=out_b)


# --------------------------------- main --------------------------------------

if __name__ == "__main__":
    vocab_size = 64
    max_len = 8
    d_model = 32
    num_heads = 4
    batch = 2

    key = jax.random.PRNGKey(0)
    kp, ks, kt = jax.random.split(key, 3)

    params = init_params(kp, vocab_size, max_len, d_model, num_heads,
                         num_encoders=1, num_decoders=1)

    src_tokens = jax.random.randint(ks, (batch, max_len), 0, vocab_size, jnp.int32)
    tgt_tokens = jax.random.randint(kt, (batch, max_len), 0, vocab_size, jnp.int32)

    fwd = jax.jit(functools.partial(transformer_forward,
                                    num_heads=num_heads, max_len=max_len))
    logits = fwd(params, src_tokens, tgt_tokens)
    jax.block_until_ready(logits)

    assert logits.shape == (batch, max_len, vocab_size)
    assert jnp.all(jnp.isfinite(logits))
    print("KERNEL_OK")
</pallas_src>

<mosaic_0001>
module attributes {stable_mosaic.version = 11 : i64} {
  func.func @_dense_kernel(%arg0: i32, %arg1: i32, %arg2: i32, %arg3: memref<16x32xf32, #tpu.memory_space<vmem>>, %arg4: memref<32x96xbf16, #tpu.memory_space<vmem>>, %arg5: memref<1x96xf32, #tpu.memory_space<vmem>>, %arg6: memref<16x96xf32, #tpu.memory_space<vmem>>, %arg7: memref<16x96xf32, #tpu.memory_space<vmem>>) attributes {dimension_semantics = [#tpu.dimension_semantics<parallel>, #tpu.dimension_semantics<parallel>, #tpu.dimension_semantics<arbitrary>], iteration_bounds = array<i64: 1, 1, 1>, scalar_prefetch = 0 : i64, scratch_operands = 1 : i64, tpu.core_type = #tpu.core_type<tc>, window_params = [{transform_indices = @transform_0, window_bounds = array<i64: 16, 32>}, {transform_indices = @transform_1, window_bounds = array<i64: 32, 96>}, {transform_indices = @transform_2, window_bounds = array<i64: 1, 96>}, {transform_indices = @transform_3, window_bounds = array<i64: 16, 96>}]} {
    %c0_i32 = arith.constant 0 : i32
    %0 = arith.cmpi eq, %arg2, %c0_i32 : i32
    %1 = arith.extui %0 : i1 to i32
    %c0_i32_0 = arith.constant 0 : i32
    %2 = arith.cmpi ne, %1, %c0_i32_0 : i32
    scf.if %2 {
      %cst_10 = arith.constant 0.000000e+00 : f32
      %13 = vector.broadcast %cst_10 : f32 to vector<16x96xf32>
      %c0_11 = arith.constant 0 : index
      %c0_12 = arith.constant 0 : index
      %14 = vector.load %arg7[%c0_11, %c0_12] : memref<16x96xf32, #tpu.memory_space<vmem>>, vector<16x96xf32>
      tpu.vector_store %arg7[%c0_11, %c0_12], %13 {strides = array<i32>} : memref<16x96xf32, #tpu.memory_space<vmem>>, vector<16x96xf32>,
    } else {
    }
    %c0 = arith.constant 0 : index
    %c0_1 = arith.constant 0 : index
    %3 = vector.load %arg7[%c0, %c0_1] : memref<16x96xf32, #tpu.memory_space<vmem>>, vector<16x96xf32>
    %c0_2 = arith.constant 0 : index
    %c0_3 = arith.constant 0 : index
    %4 = vector.load %arg3[%c0_2, %c0_3] : memref<16x32xf32, #tpu.memory_space<vmem>>, vector<16x32xf32>
    %5 = arith.truncf %4 : vector<16x32xf32> to vector<16x32xbf16>
    %c0_4 = arith.constant 0 : index
    %c0_5 = arith.constant 0 : index
    %6 = vector.load %arg4[%c0_4, %c0_5] : memref<32x96xbf16, #tpu.memory_space<vmem>>, vector<32x96xbf16>
    %cst = arith.constant dense<0.000000e+00> : vector<16x96xf32>
    %7 = tpu.matmul %5, %6, %cst {dimension_numbers = #tpu.dot_dimension_numbers<[1], [0], [0], [1], [0, 0, 1, 1], [], []>} : vector<16x32xbf16>, vector<32x96xbf16>, vector<16x96xf32> -> vector<16x96xf32>
    %8 = arith.addf %3, %7 : vector<16x96xf32>
    %c0_6 = arith.constant 0 : index
    %c0_7 = arith.constant 0 : index
    %9 = vector.load %arg7[%c0_6, %c0_7] : memref<16x96xf32, #tpu.memory_space<vmem>>, vector<16x96xf32>
    tpu.vector_store %arg7[%c0_6, %c0_7], %8 {strides = array<i32>} : memref<16x96xf32, #tpu.memory_space<vmem>>, vector<16x96xf32>,
    %c0_i32_8 = arith.constant 0 : i32
    %10 = arith.cmpi eq, %arg2, %c0_i32_8 : i32
    %11 = arith.extui %10 : i1 to i32
    %c0_i32_9 = arith.constant 0 : i32
    %12 = arith.cmpi ne, %11, %c0_i32_9 : i32
    scf.if %12 {
      %c0_10 = arith.constant 0 : index
      %c0_11 = arith.constant 0 : index
      %13 = vector.load %arg7[%c0_10, %c0_11] : memref<16x96xf32, #tpu.memory_space<vmem>>, vector<16x96xf32>
      %c0_12 = arith.constant 0 : index
      %c0_13 = arith.constant 0 : index
      %14 = vector.load %arg5[%c0_12, %c0_13] : memref<1x96xf32, #tpu.memory_space<vmem>>, vector<1x96xf32>
      %15 = vector.broadcast %14 : vector<1x96xf32> to vector<16x96xf32>
      %16 = arith.addf %13, %15 : vector<16x96xf32>
      %c0_14 = arith.constant 0 : index
      %c0_15 = arith.constant 0 : index
      %17 = vector.load %arg6[%c0_14, %c0_15] : memref<16x96xf32, #tpu.memory_space<vmem>>, vector<16x96xf32>
      tpu.vector_store %arg6[%c0_14, %c0_15], %16 {strides = array<i32>} : memref<16x96xf32, #tpu.memory_space<vmem>>, vector<16x96xf32>,
    } else {
    }
    return
  }
  func.func @transform_0(%arg0: i32, %arg1: i32, %arg2: i32) -> (i32, i32) {
    %c0_i32 = arith.constant 0 : i32
    return %arg0, %arg2 : i32, i32
  }
  func.func @transform_1(%arg0: i32, %arg1: i32, %arg2: i32) -> (i32, i32) {
    %c0_i32 = arith.constant 0 : i32
    return %arg2, %arg1 : i32, i32
  }
  func.func @transform_2(%arg0: i32, %arg1: i32, %arg2: i32) -> (i32, i32) {
    %c0_i32 = arith.constant 0 : i32
    %c0_i32_0 = arith.constant 0 : i32
    return %c0_i32, %arg1 : i32, i32
  }
  func.func @transform_3(%arg0: i32, %arg1: i32, %arg2: i32) -> (i32, i32) {
    %c0_i32 = arith.constant 0 : i32
    return %arg0, %arg1 : i32, i32
  }
}

module attributes {stable_mosaic.version = 11 : i64} {
  func.func @_dense_kernel(%arg0: i32, %arg1: i32, %arg2: i32, %arg3: memref<16x32xf32, #tpu.memory_space<vmem>>, %arg4: memref<32x32xbf16, #tpu.memory_space<vmem>>, %arg5: memref<1x32xf32, #tpu.memory_space<vmem>>, %arg6: memref<16x32xf32, #tpu.memory_space<vmem>>, %arg7: memref<16x32xf32, #tpu.memory_space<vmem>>) attributes {dimension_semantics = [#tpu.dimension_semantics<parallel>, #tpu.dimension_semantics<parallel>, #tpu.dimension_semantics<arbitrary>], iteration_bounds = array<i64: 1, 1, 1>, scalar_prefetch = 0 : i64, scratch_operands = 1 : i64, tpu.core_type = #tpu.core_type<tc>, window_params = [{transform_indices = @transform_0, window_bounds = array<i64: 16, 32>}, {transform_indices = @transform_1, window_bounds = array<i64: 32, 32>}, {transform_indices = @transform_2, window_bounds = array<i64: 1, 32>}, {transform_indices = @transform_3, window_bounds = array<i64: 16, 32>}]} {
    %c0_i32 = arith.constant 0 : i32
    %0 = arith.cmpi eq, %arg2, %c0_i32 : i32
    %1 = arith.extui %0 : i1 to i32
    %c0_i32_0 = arith.constant 0 : i32
    %2 = arith.cmpi ne, %1, %c0_i32_0 : i32
    scf.if %2 {
      %cst_10 = arith.constant 0.000000e+00 : f32
      %13 = vector.broadcast %cst_10 : f32 to vector<16x32xf32>
      %c0_11 = arith.constant 0 : index
      %c0_12 = arith.constant 0 : index
      %14 = vector.load %arg7[%c0_11, %c0_12] : memref<16x32xf32, #tpu.memory_space<vmem>>, vector<16x32xf32>
      tpu.vector_store %arg7[%c0_11, %c0_12], %13 {strides = array<i32>} : memref<16x32xf32, #tpu.memory_space<vmem>>, vector<16x32xf32>,
    } else {
    }
    %c0 = arith.constant 0 : index
    %c0_1 = arith.constant 0 : index
    %3 = vector.load %arg7[%c0, %c0_1] : memref<16x32xf32, #tpu.memory_space<vmem>>, vector<16x32xf32>
    %c0_2 = arith.constant 0 : index
    %c0_3 = arith.constant 0 : index
    %4 = vector.load %arg3[%c0_2, %c0_3] : memref<16x32xf32, #tpu.memory_space<vmem>>, vector<16x32xf32>
    %5 = arith.truncf %4 : vector<16x32xf32> to vector<16x32xbf16>
    %c0_4 = arith.constant 0 : index
    %c0_5 = arith.constant 0 : index
    %6 = vector.load %arg4[%c0_4, %c0_5] : memref<32x32xbf16, #tpu.memory_space<vmem>>, vector<32x32xbf16>
    %cst = arith.constant dense<0.000000e+00> : vector<16x32xf32>
    %7 = tpu.matmul %5, %6, %cst {dimension_numbers = #tpu.dot_dimension_numbers<[1], [0], [0], [1], [0, 0, 1, 1], [], []>} : vector<16x32xbf16>, vector<32x32xbf16>, vector<16x32xf32> -> vector<16x32xf32>
    %8 = arith.addf %3, %7 : vector<16x32xf32>
    %c0_6 = arith.constant 0 : index
    %c0_7 = arith.constant 0 : index
    %9 = vector.load %arg7[%c0_6, %c0_7] : memref<16x32xf32, #tpu.memory_space<vmem>>, vector<16x32xf32>
    tpu.vector_store %arg7[%c0_6, %c0_7], %8 {strides = array<i32>} : memref<16x32xf32, #tpu.memory_space<vmem>>, vector<16x32xf32>,
    %c0_i32_8 = arith.constant 0 : i32
    %10 = arith.cmpi eq, %arg2, %c0_i32_8 : i32
    %11 = arith.extui %10 : i1 to i32
    %c0_i32_9 = arith.constant 0 : i32
    %12 = arith.cmpi ne, %11, %c0_i32_9 : i32
    scf.if %12 {
      %c0_10 = arith.constant 0 : index
      %c0_11 = arith.constant 0 : index
      %13 = vector.load %arg7[%c0_10, %c0_11] : memref<16x32xf32, #tpu.memory_space<vmem>>, vector<16x32xf32>
      %c0_12 = arith.constant 0 : index
      %c0_13 = arith.constant 0 : index
      %14 = vector.load %arg5[%c0_12, %c0_13] : memref<1x32xf32, #tpu.memory_space<vmem>>, vector<1x32xf32>
      %15 = vector.broadcast %14 : vector<1x32xf32> to vector<16x32xf32>
      %16 = arith.addf %13, %15 : vector<16x32xf32>
      %c0_14 = arith.constant 0 : index
      %c0_15 = arith.constant 0 : index
      %17 = vector.load %arg6[%c0_14, %c0_15] : memref<16x32xf32, #tpu.memory_space<vmem>>, vector<16x32xf32>
      tpu.vector_store %arg6[%c0_14, %c0_15], %16 {strides = array<i32>} : memref<16x32xf32, #tpu.memory_space<vmem>>, vector<16x32xf32>,
    } else {
    }
    return
  }
  func.func @transform_0(%arg0: i32, %arg1: i32, %arg2: i32) -> (i32, i32) {
    %c0_i32 = arith.constant 0 : i32
    return %arg0, %arg2 : i32, i32
  }
  func.func @transform_1(%arg0: i32, %arg1: i32, %arg2: i32) -> (i32, i32) {
    %c0_i32 = arith.constant 0 : i32
    return %arg2, %arg1 : i32, i32
  }
  func.func @transform_2(%arg0: i32, %arg1: i32, %arg2: i32) -> (i32, i32) {
    %c0_i32 = arith.constant 0 : i32
    %c0_i32_0 = arith.constant 0 : i32
    return %c0_i32, %arg1 : i32, i32
  }
  func.func @transform_3(%arg0: i32, %arg1: i32, %arg2: i32) -> (i32, i32) {
    %c0_i32 = arith.constant 0 : i32
    return %arg0, %arg1 : i32, i32
  }
}

module attributes {stable_mosaic.version = 11 : i64} {
  func.func @_add_ln_kernel(%arg0: i32, %arg1: memref<16x32xf32, #tpu.memory_space<vmem>>, %arg2: memref<16x32xf32, #tpu.memory_space<vmem>>, %arg3: memref<1x32xf32, #tpu.memory_space<vmem>>, %arg4: memref<1x32xf32, #tpu.memory_space<vmem>>, %arg5: memref<16x32xf32, #tpu.memory_space<vmem>>) attributes {dimension_semantics = [#tpu.dimension_semantics<parallel>], iteration_bounds = array<i64: 1>, scalar_prefetch = 0 : i64, scratch_operands = 0 : i64, tpu.core_type = #tpu.core_type<tc>, window_params = [{transform_indices = @transform_0, window_bounds = array<i64: 16, 32>}, {transform_indices = @transform_1, window_bounds = array<i64: 16, 32>}, {pipeline_mode = #tpu.pipeline_mode<synchronous>, transform_indices = @transform_2, window_bounds = array<i64: 1, 32>}, {pipeline_mode = #tpu.pipeline_mode<synchronous>, transform_indices = @transform_3, window_bounds = array<i64: 1, 32>}, {transform_indices = @transform_4, window_bounds = array<i64: 16, 32>}]} {
    %c0 = arith.constant 0 : index
    %c0_0 = arith.constant 0 : index
    %0 = vector.load %arg1[%c0, %c0_0] : memref<16x32xf32, #tpu.memory_space<vmem>>, vector<16x32xf32>
    %c0_1 = arith.constant 0 : index
    %c0_2 = arith.constant 0 : index
    %1 = vector.load %arg2[%c0_1, %c0_2] : memref<16x32xf32, #tpu.memory_space<vmem>>, vector<16x32xf32>
    %2 = arith.addf %0, %1 : vector<16x32xf32>
    %cst = arith.constant dense<0.000000e+00> : vector<16xf32>
    %3 = vector.multi_reduction <add>, %2, %cst [1] : vector<16x32xf32> to vector<16xf32>
    %4 = vector.shape_cast %3 : vector<16xf32> to vector<16x1xf32>
    %cst_3 = arith.constant 3.200000e+01 : f32
    %5 = vector.broadcast %cst_3 : f32 to vector<16x1xf32>
    %6 = arith.divf %4, %5 : vector<16x1xf32>
    %7 = vector.broadcast %6 : vector<16x1xf32> to vector<16x32xf32>
    %8 = arith.subf %2, %7 : vector<16x32xf32>
    %9 = arith.mulf %8, %8 : vector<16x32xf32>
    %cst_4 = arith.constant dense<0.000000e+00> : vector<16xf32>
    %10 = vector.multi_reduction <add>, %9, %cst_4 [1] : vector<16x32xf32> to vector<16xf32>
    %11 = vector.shape_cast %10 : vector<16xf32> to vector<16x1xf32>
    %cst_5 = arith.constant 3.200000e+01 : f32
    %12 = vector.broadcast %cst_5 : f32 to vector<16x1xf32>
    %13 = arith.divf %11, %12 : vector<16x1xf32>
    %cst_6 = arith.constant 9.99999974E-6 : f32
    %14 = vector.broadcast %cst_6 : f32 to vector<16x1xf32>
    %15 = arith.addf %13, %14 : vector<16x1xf32>
    %16 = math.rsqrt %15 : vector<16x1xf32>
    %17 = vector.broadcast %16 : vector<16x1xf32> to vector<16x32xf32>
    %18 = arith.mulf %8, %17 : vector<16x32xf32>
    %c0_7 = arith.constant 0 : index
    %c0_8 = arith.constant 0 : index
    %19 = vector.load %arg3[%c0_7, %c0_8] : memref<1x32xf32, #tpu.memory_space<vmem>>, vector<1x32xf32>
    %20 = vector.broadcast %19 : vector<1x32xf32> to vector<16x32xf32>
    %21 = arith.mulf %18, %20 : vector<16x32xf32>
    %c0_9 = arith.constant 0 : index
    %c0_10 = arith.constant 0 : index
    %22 = vector.load %arg4[%c0_9, %c0_10] : memref<1x32xf32, #tpu.memory_space<vmem>>, vector<1x32xf32>
    %23 = vector.broadcast %22 : vector<1x32xf32> to vector<16x32xf32>
    %24 = arith.addf %21, %23 : vector<16x32xf32>
    %c0_11 = arith.constant 0 : index
    %c0_12 = arith.constant 0 : index
    %25 = vector.load %arg5[%c0_11, %c0_12] : memref<16x32xf32, #tpu.memory_space<vmem>>, vector<16x32xf32>
    tpu.vector_store %arg5[%c0_11, %c0_12], %24 {strides = array<i32>} : memref<16x32xf32, #tpu.memory_space<vmem>>, vector<16x32xf32>,
    return
  }
  func.func @transform_0(%arg0: i32) -> (i32, i32) {
    %c0_i32 = arith.constant 0 : i32
    %c0_i32_0 = arith.constant 0 : i32
    return %arg0, %c0_i32 : i32, i32
  }
  func.func @transform_1(%arg0: i32) -> (i32, i32) {
    %c0_i32 = arith.constant 0 : i32
    %c0_i32_0 = arith.constant 0 : i32
    return %arg0, %c0_i32 : i32, i32
  }
  func.func @transform_2(%arg0: i32) -> (i32, i32) {
    %c0_i32 = arith.constant 0 : i32
    %c0_i32_0 = arith.constant 0 : i32
    %c0_i32_1 = arith.constant 0 : i32
    return %c0_i32, %c0_i32_0 : i32, i32
  }
  func.func @transform_3(%arg0: i32) -> (i32, i32) {
    %c0_i32 = arith.constant 0 : i32
    %c0_i32_0 = arith.constant 0 : i32
    %c0_i32_1 = arith.constant 0 : i32
    return %c0_i32, %c0_i32_0 : i32, i32
  }
  func.func @transform_4(%arg0: i32) -> (i32, i32) {
    %c0_i32 = arith.constant 0 : i32
    %c0_i32_0 = arith.constant 0 : i32
    return %arg0, %c0_i32 : i32, i32
  }
}

module attributes {stable_mosaic.version = 11 : i64} {
  func.func @_attn_kernel(%arg0: i32, %arg1: memref<1x8x32xf32, #tpu.memory_space<vmem>>, %arg2: memref<1x8x64xf32, #tpu.memory_space<vmem>>, %arg3: memref<1x8x32xf32, #tpu.memory_space<vmem>>) attributes {dimension_semantics = [#tpu.dimension_semantics<parallel>], iteration_bounds = array<i64: 2>, scalar_prefetch = 0 : i64, scratch_operands = 0 : i64, tpu.core_type = #tpu.core_type<tc>, window_params = [{transform_indices = @transform_0, window_bounds = array<i64: 1, 8, 32>}, {transform_indices = @transform_1, window_bounds = array<i64: 1, 8, 64>}, {transform_indices = @transform_2, window_bounds = array<i64: 1, 8, 32>}]} {
    %c0 = arith.constant 0 : index
    %c0_0 = arith.constant 0 : index
    %c0_1 = arith.constant 0 : index
    %0 = vector.load %arg1[%c0, %c0_0, %c0_1] : memref<1x8x32xf32, #tpu.memory_space<vmem>>, vector<1x8x32xf32>
    %1 = vector.shape_cast %0 : vector<1x8x32xf32> to vector<8x32xf32>
    %c0_2 = arith.constant 0 : index
    %c0_3 = arith.constant 0 : index
    %c0_4 = arith.constant 0 : index
    %2 = vector.load %arg2[%c0_2, %c0_3, %c0_4] : memref<1x8x64xf32, #tpu.memory_space<vmem>>, vector<1x8x64xf32>
    %3 = vector.shape_cast %2 : vector<1x8x64xf32> to vector<8x64xf32>
    %4 = vector.extract_strided_slice %3 {offsets = [0, 0], sizes = [8, 32], strides = [1, 1]} : vector<8x64xf32> to vector<8x32xf32>
    %5 = vector.extract_strided_slice %3 {offsets = [0, 32], sizes = [8, 32], strides = [1, 1]} : vector<8x64xf32> to vector<8x32xf32>
    %6 = vector.extract_strided_slice %1 {offsets = [0, 0], sizes = [8, 8], strides = [1, 1]} : vector<8x32xf32> to vector<8x8xf32>
    %7 = arith.truncf %6 : vector<8x8xf32> to vector<8x8xbf16>
    %8 = vector.extract_strided_slice %4 {offsets = [0, 0], sizes = [8, 8], strides = [1, 1]} : vector<8x32xf32> to vector<8x8xf32>
    %9 = arith.truncf %8 : vector<8x8xf32> to vector<8x8xbf16>
    %10 = vector.extract_strided_slice %5 {offsets = [0, 0], sizes = [8, 8], strides = [1, 1]} : vector<8x32xf32> to vector<8x8xf32>
    %11 = arith.truncf %10 : vector<8x8xf32> to vector<8x8xbf16>
    %cst = arith.constant dense<0.000000e+00> : vector<8x8xf32>
    %12 = tpu.matmul %7, %9, %cst {dimension_numbers = #tpu.dot_dimension_numbers<[1], [1], [0], [0], [0, 0, 1, 0], [], []>} : vector<8x8xbf16>, vector<8x8xbf16>, vector<8x8xf32> -> vector<8x8xf32>
    %cst_5 = arith.constant 0.353553385 : f32
    %13 = vector.broadcast %cst_5 : f32 to vector<8x8xf32>
    %14 = arith.mulf %12, %13 : vector<8x8xf32>
    %cst_6 = arith.constant dense<0xFF800000> : vector<8xf32>
    %15 = vector.multi_reduction <maximumf>, %14, %cst_6 [1] : vector<8x8xf32> to vector<8xf32>
    %16 = vector.shape_cast %15 : vector<8xf32> to vector<8x1xf32>
    %17 = vector.broadcast %16 : vector<8x1xf32> to vector<8x8xf32>
    %18 = arith.subf %14, %17 : vector<8x8xf32>
    %19 = math.exp %18 : vector<8x8xf32>
    %cst_7 = arith.constant dense<0.000000e+00> : vector<8xf32>
    %20 = vector.multi_reduction <add>, %19, %cst_7 [1] : vector<8x8xf32> to vector<8xf32>
    %21 = vector.shape_cast %20 : vector<8xf32> to vector<8x1xf32>
    %22 = tpu.reciprocal %21 {approx = true} : vector<8x1xf32> -> vector<8x1xf32>
    %23 = vector.broadcast %22 : vector<8x1xf32> to vector<8x8xf32>
    %24 = arith.mulf %19, %23 : vector<8x8xf32>
    %25 = arith.truncf %24 : vector<8x8xf32> to vector<8x8xbf16>
    %cst_8 = arith.constant dense<0.000000e+00> : vector<8x8xf32>
    %26 = tpu.matmul %25, %11, %cst_8 {dimension_numbers = #tpu.dot_dimension_numbers<[1], [0], [0], [1], [0, 0, 1, 1], [], []>} : vector<8x8xbf16>, vector<8x8xbf16>, vector<8x8xf32> -> vector<8x8xf32>
    %27 = vector.extract_strided_slice %1 {offsets = [0, 8], sizes = [8, 8], strides = [1, 1]} : vector<8x32xf32> to vector<8x8xf32>
    %28 = arith.truncf %27 : vector<8x8xf32> to vector<8x8xbf16>
    %29 = vector.extract_strided_slice %4 {offsets = [0, 8], sizes = [8, 8], strides = [1, 1]} : vector<8x32xf32> to vector<8x8xf32>
    %30 = arith.truncf %29 : vector<8x8xf32> to vector<8x8xbf16>
    %31 = vector.extract_strided_slice %5 {offsets = [0, 8], sizes = [8, 8], strides = [1, 1]} : vector<8x32xf32> to vector<8x8xf32>
    %32 = arith.truncf %31 : vector<8x8xf32> to vector<8x8xbf16>
    %cst_9 = arith.constant dense<0.000000e+00> : vector<8x8xf32>
    %33 = tpu.matmul %28, %30, %cst_9 {dimension_numbers = #tpu.dot_dimension_numbers<[1], [1], [0], [0], [0, 0, 1, 0], [], []>} : vector<8x8xbf16>, vector<8x8xbf16>, vector<8x8xf32> -> vector<8x8xf32>
    %cst_10 = arith.constant 0.353553385 : f32
    %34 = vector.broadcast %cst_10 : f32 to vector<8x8xf32>
    %35 = arith.mulf %33, %34 : vector<8x8xf32>
    %cst_11 = arith.constant dense<0xFF800000> : vector<8xf32>
    %36 = vector.multi_reduction <maximumf>, %35, %cst_11 [1] : vector<8x8xf32> to vector<8xf32>
    %37 = vector.shape_cast %36 : vector<8xf32> to vector<8x1xf32>
    %38 = vector.broadcast %37 : vector<8x1xf32> to vector<8x8xf32>
    %39 = arith.subf %35, %38 : vector<8x8xf32>
    %40 = math.exp %39 : vector<8x8xf32>
    %cst_12 = arith.constant dense<0.000000e+00> : vector<8xf32>
    %41 = vector.multi_reduction <add>, %40, %cst_12 [1] : vector<8x8xf32> to vector<8xf32>
    %42 = vector.shape_cast %41 : vector<8xf32> to vector<8x1xf32>
    %43 = tpu.reciprocal %42 {approx = true} : vector<8x1xf32> -> vector<8x1xf32>
    %44 = vector.broadcast %43 : vector<8x1xf32> to vector<8x8xf32>
    %45 = arith.mulf %40, %44 : vector<8x8xf32>
    %46 = arith.truncf %45 : vector<8x8xf32> to vector<8x8xbf16>
    %cst_13 = arith.constant dense<0.000000e+00> : vector<8x8xf32>
    %47 = tpu.matmul %46, %32, %cst_13 {dimension_numbers = #tpu.dot_dimension_numbers<[1], [0], [0], [1], [0, 0, 1, 1], [], []>} : vector<8x8xbf16>, vector<8x8xbf16>, vector<8x8xf32> -> vector<8x8xf32>
    %48 = vector.extract_strided_slice %1 {offsets = [0, 16], sizes = [8, 8], strides = [1, 1]} : vector<8x32xf32> to vector<8x8xf32>
    %49 = arith.truncf %48 : vector<8x8xf32> to vector<8x8xbf16>
    %50 = vector.extract_strided_slice %4 {offsets = [0, 16], sizes = [8, 8], strides = [1, 1]} : vector<8x32xf32> to vector<8x8xf32>
    %51 = arith.truncf %50 : vector<8x8xf32> to vector<8x8xbf16>
    %52 = vector.extract_strided_slice %5 {offsets = [0, 16], sizes = [8, 8], strides = [1, 1]} : vector<8x32xf32> to vector<8x8xf32>
    %53 = arith.truncf %52 : vector<8x8xf32> to vector<8x8xbf16>
    %cst_14 = arith.constant dense<0.000000e+00> : vector<8x8xf32>
    %54 = tpu.matmul %49, %51, %cst_14 {dimension_numbers = #tpu.dot_dimension_numbers<[1], [1], [0], [0], [0, 0, 1, 0], [], []>} : vector<8x8xbf16>, vector<8x8xbf16>, vector<8x8xf32> -> vector<8x8xf32>
    %cst_15 = arith.constant 0.353553385 : f32
    %55 = vector.broadcast %cst_15 : f32 to vector<8x8xf32>
    %56 = arith.mulf %54, %55 : vector<8x8xf32>
    %cst_16 = arith.constant dense<0xFF800000> : vector<8xf32>
    %57 = vector.multi_reduction <maximumf>, %56, %cst_16 [1] : vector<8x8xf32> to vector<8xf32>
    %58 = vector.shape_cast %57 : vector<8xf32> to vector<8x1xf32>
    %59 = vector.broadcast %58 : vector<8x1xf32> to vector<8x8xf32>
    %60 = arith.subf %56, %59 : vector<8x8xf32>
    %61 = math.exp %60 : vector<8x8xf32>
    %cst_17 = arith.constant dense<0.000000e+00> : vector<8xf32>
    %62 = vector.multi_reduction <add>, %61, %cst_17 [1] : vector<8x8xf32> to vector<8xf32>
    %63 = vector.shape_cast %62 : vector<8xf32> to vector<8x1xf32>
    %64 = tpu.reciprocal %63 {approx = true} : vector<8x1xf32> -> vector<8x1xf32>
    %65 = vector.broadcast %64 : vector<8x1xf32> to vector<8x8xf32>
    %66 = arith.mulf %61, %65 : vector<8x8xf32>
    %67 = arith.truncf %66 : vector<8x8xf32> to vector<8x8xbf16>
    %cst_18 = arith.constant dense<0.000000e+00> : vector<8x8xf32>
    %68 = tpu.matmul %67, %53, %cst_18 {dimension_numbers = #tpu.dot_dimension_numbers<[1], [0], [0], [1], [0, 0, 1, 1], [], []>} : vector<8x8xbf16>, vector<8x8xbf16>, vector<8x8xf32> -> vector<8x8xf32>
    %69 = vector.extract_strided_slice %1 {offsets = [0, 24], sizes = [8, 8], strides = [1, 1]} : vector<8x32xf32> to vector<8x8xf32>
    %70 = arith.truncf %69 : vector<8x8xf32> to vector<8x8xbf16>
    %71 = vector.extract_strided_slice %4 {offsets = [0, 24], sizes = [8, 8], strides = [1, 1]} : vector<8x32xf32> to vector<8x8xf32>
    %72 = arith.truncf %71 : vector<8x8xf32> to vector<8x8xbf16>
    %73 = vector.extract_strided_slice %5 {offsets = [0, 24], sizes = [8, 8], strides = [1, 1]} : vector<8x32xf32> to vector<8x8xf32>
    %74 = arith.truncf %73 : vector<8x8xf32> to vector<8x8xbf16>
    %cst_19 = arith.constant dense<0.000000e+00> : vector<8x8xf32>
    %75 = tpu.matmul %70, %72, %cst_19 {dimension_numbers = #tpu.dot_dimension_numbers<[1], [1], [0], [0], [0, 0, 1, 0], [], []>} : vector<8x8xbf16>, vector<8x8xbf16>, vector<8x8xf32> -> vector<8x8xf32>
    %cst_20 = arith.constant 0.353553385 : f32
    %76 = vector.broadcast %cst_20 : f32 to vector<8x8xf32>
    %77 = arith.mulf %75, %76 : vector<8x8xf32>
    %cst_21 = arith.constant dense<0xFF800000> : vector<8xf32>
    %78 = vector.multi_reduction <maximumf>, %77, %cst_21 [1] : vector<8x8xf32> to vector<8xf32>
    %79 = vector.shape_cast %78 : vector<8xf32> to vector<8x1xf32>
    %80 = vector.broadcast %79 : vector<8x1xf32> to vector<8x8xf32>
    %81 = arith.subf %77, %80 : vector<8x8xf32>
    %82 = math.exp %81 : vector<8x8xf32>
    %cst_22 = arith.constant dense<0.000000e+00> : vector<8xf32>
    %83 = vector.multi_reduction <add>, %82, %cst_22 [1] : vector<8x8xf32> to vector<8xf32>
    %84 = vector.shape_cast %83 : vector<8xf32> to vector<8x1xf32>
    %85 = tpu.reciprocal %84 {approx = true} : vector<8x1xf32> -> vector<8x1xf32>
    %86 = vector.broadcast %85 : vector<8x1xf32> to vector<8x8xf32>
    %87 = arith.mulf %82, %86 : vector<8x8xf32>
    %88 = arith.truncf %87 : vector<8x8xf32> to vector<8x8xbf16>
    %cst_23 = arith.constant dense<0.000000e+00> : vector<8x8xf32>
    %89 = tpu.matmul %88, %74, %cst_23 {dimension_numbers = #tpu.dot_dimension_numbers<[1], [0], [0], [1], [0, 0, 1, 1], [], []>} : vector<8x8xbf16>, vector<8x8xbf16>, vector<8x8xf32> -> vector<8x8xf32>
    %90 = tpu.concatenate %26, %47, %68, %89 in 1 : vector<8x8xf32>, vector<8x8xf32>, vector<8x8xf32>, vector<8x8xf32> -> vector<8x32xf32>
    %c0_24 = arith.constant 0 : index
    %c0_25 = arith.constant 0 : index
    %c0_26 = arith.constant 0 : index
    %91 = vector.load %arg3[%c0_24, %c0_25, %c0_26] : memref<1x8x32xf32, #tpu.memory_space<vmem>>, vector<1x8x32xf32>
    %92 = vector.shape_cast %91 : vector<1x8x32xf32> to vector<8x32xf32>
    %93 = vector.shape_cast %90 : vector<8x32xf32> to vector<1x8x32xf32>
    tpu.vector_store %arg3[%c0_24, %c0_25, %c0_26], %93 {strides = array<i32>} : memref<1x8x32xf32, #tpu.memory_space<vmem>>, vector<1x8x32xf32>,
    return
  }
  func.func @transform_0(%arg0: i32) -> (i32, i32, i32) {
    %c0_i32 = arith.constant 0 : i32
    %c0_i32_0 = arith.constant 0 : i32
    %c0_i32_1 = arith.constant 0 : i32
    return %arg0, %c0_i32, %c0_i32_0 : i32, i32, i32
  }
  func.func @transform_1(%arg0: i32) -> (i32, i32, i32) {
    %c0_i32 = arith.constant 0 : i32
    %c0_i32_0 = arith.constant 0 : i32
    %c0_i32_1 = arith.constant 0 : i32
    return %arg0, %c0_i32, %c0_i32_0 : i32, i32, i32
  }
  func.func @transform_2(%arg0: i32) -> (i32, i32, i32) {
    %c0_i32 = arith.constant 0 : i32
    %c0_i32_0 = arith.constant 0 : i32
    %c0_i32_1 = arith.constant 0 : i32
    return %arg0, %c0_i32, %c0_i32_0 : i32, i32, i32
  }
}

module attributes {stable_mosaic.version = 11 : i64} {
  func.func @_dense_kernel(%arg0: i32, %arg1: i32, %arg2: i32, %arg3: memref<16x128xf32, #tpu.memory_space<vmem>>, %arg4: memref<128x32xbf16, #tpu.memory_space<vmem>>, %arg5: memref<1x32xf32, #tpu.memory_space<vmem>>, %arg6: memref<16x32xf32, #tpu.memory_space<vmem>>, %arg7: memref<16x32xf32, #tpu.memory_space<vmem>>) attributes {dimension_semantics = [#tpu.dimension_semantics<parallel>, #tpu.dimension_semantics<parallel>, #tpu.dimension_semantics<arbitrary>], iteration_bounds = array<i64: 1, 1, 1>, scalar_prefetch = 0 : i64, scratch_operands = 1 : i64, tpu.core_type = #tpu.core_type<tc>, window_params = [{transform_indices = @transform_0, window_bounds = array<i64: 16, 128>}, {transform_indices = @transform_1, window_bounds = array<i64: 128, 32>}, {transform_indices = @transform_2, window_bounds = array<i64: 1, 32>}, {transform_indices = @transform_3, window_bounds = array<i64: 16, 32>}]} {
    %c0_i32 = arith.constant 0 : i32
    %0 = arith.cmpi eq, %arg2, %c0_i32 : i32
    %1 = arith.extui %0 : i1 to i32
    %c0_i32_0 = arith.constant 0 : i32
    %2 = arith.cmpi ne, %1, %c0_i32_0 : i32
    scf.if %2 {
      %cst_10 = arith.constant 0.000000e+00 : f32
      %13 = vector.broadcast %cst_10 : f32 to vector<16x32xf32>
      %c0_11 = arith.constant 0 : index
      %c0_12 = arith.constant 0 : index
      %14 = vector.load %arg7[%c0_11, %c0_12] : memref<16x32xf32, #tpu.memory_space<vmem>>, vector<16x32xf32>
      tpu.vector_store %arg7[%c0_11, %c0_12], %13 {strides = array<i32>} : memref<16x32xf32, #tpu.memory_space<vmem>>, vector<16x32xf32>,
    } else {
    }
    %c0 = arith.constant 0 : index
    %c0_1 = arith.constant 0 : index
    %3 = vector.load %arg7[%c0, %c0_1] : memref<16x32xf32, #tpu.memory_space<vmem>>, vector<16x32xf32>
    %c0_2 = arith.constant 0 : index
    %c0_3 = arith.constant 0 : index
    %4 = vector.load %arg3[%c0_2, %c0_3] : memref<16x128xf32, #tpu.memory_space<vmem>>, vector<16x128xf32>
    %5 = arith.truncf %4 : vector<16x128xf32> to vector<16x128xbf16>
    %c0_4 = arith.constant 0 : index
    %c0_5 = arith.constant 0 : index
    %6 = vector.load %arg4[%c0_4, %c0_5] : memref<128x32xbf16, #tpu.memory_space<vmem>>, vector<128x32xbf16>
    %cst = arith.constant dense<0.000000e+00> : vector<16x32xf32>
    %7 = tpu.matmul %5, %6, %cst {dimension_numbers = #tpu.dot_dimension_numbers<[1], [0], [0], [1], [0, 0, 1, 1], [], []>} : vector<16x128xbf16>, vector<128x32xbf16>, vector<16x32xf32> -> vector<16x32xf32>
    %8 = arith.addf %3, %7 : vector<16x32xf32>
    %c0_6 = arith.constant 0 : index
    %c0_7 = arith.constant 0 : index
    %9 = vector.load %arg7[%c0_6, %c0_7] : memref<16x32xf32, #tpu.memory_space<vmem>>, vector<16x32xf32>
    tpu.vector_store %arg7[%c0_6, %c0_7], %8 {strides = array<i32>} : memref<16x32xf32, #tpu.memory_space<vmem>>, vector<16x32xf32>,
    %c0_i32_8 = arith.constant 0 : i32
    %10 = arith.cmpi eq, %arg2, %c0_i32_8 : i32
    %11 = arith.extui %10 : i1 to i32
    %c0_i32_9 = arith.constant 0 : i32
    %12 = arith.cmpi ne, %11, %c0_i32_9 : i32
    scf.if %12 {
      %c0_10 = arith.constant 0 : index
      %c0_11 = arith.constant 0 : index
      %13 = vector.load %arg7[%c0_10, %c0_11] : memref<16x32xf32, #tpu.memory_space<vmem>>, vector<16x32xf32>
      %c0_12 = arith.constant 0 : index
      %c0_13 = arith.constant 0 : index
      %14 = vector.load %arg5[%c0_12, %c0_13] : memref<1x32xf32, #tpu.memory_space<vmem>>, vector<1x32xf32>
      %15 = vector.broadcast %14 : vector<1x32xf32> to vector<16x32xf32>
      %16 = arith.addf %13, %15 : vector<16x32xf32>
      %c0_14 = arith.constant 0 : index
      %c0_15 = arith.constant 0 : index
      %17 = vector.load %arg6[%c0_14, %c0_15] : memref<16x32xf32, #tpu.memory_space<vmem>>, vector<16x32xf32>
      tpu.vector_store %arg6[%c0_14, %c0_15], %16 {strides = array<i32>} : memref<16x32xf32, #tpu.memory_space<vmem>>, vector<16x32xf32>,
    } else {
    }
    return
  }
  func.func @transform_0(%arg0: i32, %arg1: i32, %arg2: i32) -> (i32, i32) {
    %c0_i32 = arith.constant 0 : i32
    return %arg0, %arg2 : i32, i32
  }
  func.func @transform_1(%arg0: i32, %arg1: i32, %arg2: i32) -> (i32, i32) {
    %c0_i32 = arith.constant 0 : i32
    return %arg2, %arg1 : i32, i32
  }
  func.func @transform_2(%arg0: i32, %arg1: i32, %arg2: i32) -> (i32, i32) {
    %c0_i32 = arith.constant 0 : i32
    %c0_i32_0 = arith.constant 0 : i32
    return %c0_i32, %arg1 : i32, i32
  }
  func.func @transform_3(%arg0: i32, %arg1: i32, %arg2: i32) -> (i32, i32) {
    %c0_i32 = arith.constant 0 : i32
    return %arg0, %arg1 : i32, i32
  }
}

module attributes {stable_mosaic.version = 11 : i64} {
  func.func @_dense_kernel(%arg0: i32, %arg1: i32, %arg2: i32, %arg3: memref<16x32xf32, #tpu.memory_space<vmem>>, %arg4: memref<32x64xbf16, #tpu.memory_space<vmem>>, %arg5: memref<1x64xf32, #tpu.memory_space<vmem>>, %arg6: memref<16x64xf32, #tpu.memory_space<vmem>>, %arg7: memref<16x64xf32, #tpu.memory_space<vmem>>) attributes {dimension_semantics = [#tpu.dimension_semantics<parallel>, #tpu.dimension_semantics<parallel>, #tpu.dimension_semantics<arbitrary>], iteration_bounds = array<i64: 1, 1, 1>, scalar_prefetch = 0 : i64, scratch_operands = 1 : i64, tpu.core_type = #tpu.core_type<tc>, window_params = [{transform_indices = @transform_0, window_bounds = array<i64: 16, 32>}, {transform_indices = @transform_1, window_bounds = array<i64: 32, 64>}, {transform_indices = @transform_2, window_bounds = array<i64: 1, 64>}, {transform_indices = @transform_3, window_bounds = array<i64: 16, 64>}]} {
    %c0_i32 = arith.constant 0 : i32
    %0 = arith.cmpi eq, %arg2, %c0_i32 : i32
    %1 = arith.extui %0 : i1 to i32
    %c0_i32_0 = arith.constant 0 : i32
    %2 = arith.cmpi ne, %1, %c0_i32_0 : i32
    scf.if %2 {
      %cst_10 = arith.constant 0.000000e+00 : f32
      %13 = vector.broadcast %cst_10 : f32 to vector<16x64xf32>
      %c0_11 = arith.constant 0 : index
      %c0_12 = arith.constant 0 : index
      %14 = vector.load %arg7[%c0_11, %c0_12] : memref<16x64xf32, #tpu.memory_space<vmem>>, vector<16x64xf32>
      tpu.vector_store %arg7[%c0_11, %c0_12], %13 {strides = array<i32>} : memref<16x64xf32, #tpu.memory_space<vmem>>, vector<16x64xf32>,
    } else {
    }
    %c0 = arith.constant 0 : index
    %c0_1 = arith.constant 0 : index
    %3 = vector.load %arg7[%c0, %c0_1] : memref<16x64xf32, #tpu.memory_space<vmem>>, vector<16x64xf32>
    %c0_2 = arith.constant 0 : index
    %c0_3 = arith.constant 0 : index
    %4 = vector.load %arg3[%c0_2, %c0_3] : memref<16x32xf32, #tpu.memory_space<vmem>>, vector<16x32xf32>
    %5 = arith.truncf %4 : vector<16x32xf32> to vector<16x32xbf16>
    %c0_4 = arith.constant 0 : index
    %c0_5 = arith.constant 0 : index
    %6 = vector.load %arg4[%c0_4, %c0_5] : memref<32x64xbf16, #tpu.memory_space<vmem>>, vector<32x64xbf16>
    %cst = arith.constant dense<0.000000e+00> : vector<16x64xf32>
    %7 = tpu.matmul %5, %6, %cst {dimension_numbers = #tpu.dot_dimension_numbers<[1], [0], [0], [1], [0, 0, 1, 1], [], []>} : vector<16x32xbf16>, vector<32x64xbf16>, vector<16x64xf32> -> vector<16x64xf32>
    %8 = arith.addf %3, %7 : vector<16x64xf32>
    %c0_6 = arith.constant 0 : index
    %c0_7 = arith.constant 0 : index
    %9 = vector.load %arg7[%c0_6, %c0_7] : memref<16x64xf32, #tpu.memory_space<vmem>>, vector<16x64xf32>
    tpu.vector_store %arg7[%c0_6, %c0_7], %8 {strides = array<i32>} : memref<16x64xf32, #tpu.memory_space<vmem>>, vector<16x64xf32>,
    %c0_i32_8 = arith.constant 0 : i32
    %10 = arith.cmpi eq, %arg2, %c0_i32_8 : i32
    %11 = arith.extui %10 : i1 to i32
    %c0_i32_9 = arith.constant 0 : i32
    %12 = arith.cmpi ne, %11, %c0_i32_9 : i32
    scf.if %12 {
      %c0_10 = arith.constant 0 : index
      %c0_11 = arith.constant 0 : index
      %13 = vector.load %arg7[%c0_10, %c0_11] : memref<16x64xf32, #tpu.memory_space<vmem>>, vector<16x64xf32>
      %c0_12 = arith.constant 0 : index
      %c0_13 = arith.constant 0 : index
      %14 = vector.load %arg5[%c0_12, %c0_13] : memref<1x64xf32, #tpu.memory_space<vmem>>, vector<1x64xf32>
      %15 = vector.broadcast %14 : vector<1x64xf32> to vector<16x64xf32>
      %16 = arith.addf %13, %15 : vector<16x64xf32>
      %c0_14 = arith.constant 0 : index
      %c0_15 = arith.constant 0 : index
      %17 = vector.load %arg6[%c0_14, %c0_15] : memref<16x64xf32, #tpu.memory_space<vmem>>, vector<16x64xf32>
      tpu.vector_store %arg6[%c0_14, %c0_15], %16 {strides = array<i32>} : memref<16x64xf32, #tpu.memory_space<vmem>>, vector<16x64xf32>,
    } else {
    }
    return
  }
  func.func @transform_0(%arg0: i32, %arg1: i32, %arg2: i32) -> (i32, i32) {
    %c0_i32 = arith.constant 0 : i32
    return %arg0, %arg2 : i32, i32
  }
  func.func @transform_1(%arg0: i32, %arg1: i32, %arg2: i32) -> (i32, i32) {
    %c0_i32 = arith.constant 0 : i32
    return %arg2, %arg1 : i32, i32
  }
  func.func @transform_2(%arg0: i32, %arg1: i32, %arg2: i32) -> (i32, i32) {
    %c0_i32 = arith.constant 0 : i32
    %c0_i32_0 = arith.constant 0 : i32
    return %c0_i32, %arg1 : i32, i32
  }
  func.func @transform_3(%arg0: i32, %arg1: i32, %arg2: i32) -> (i32, i32) {
    %c0_i32 = arith.constant 0 : i32
    return %arg0, %arg1 : i32, i32
  }
}

module attributes {stable_mosaic.version = 11 : i64} {
  func.func @_dense_kernel(%arg0: i32, %arg1: i32, %arg2: i32, %arg3: memref<16x32xf32, #tpu.memory_space<vmem>>, %arg4: memref<32x128xbf16, #tpu.memory_space<vmem>>, %arg5: memref<1x128xf32, #tpu.memory_space<vmem>>, %arg6: memref<16x128xf32, #tpu.memory_space<vmem>>, %arg7: memref<16x128xf32, #tpu.memory_space<vmem>>) attributes {dimension_semantics = [#tpu.dimension_semantics<parallel>, #tpu.dimension_semantics<parallel>, #tpu.dimension_semantics<arbitrary>], iteration_bounds = array<i64: 1, 1, 1>, scalar_prefetch = 0 : i64, scratch_operands = 1 : i64, tpu.core_type = #tpu.core_type<tc>, window_params = [{transform_indices = @transform_0, window_bounds = array<i64: 16, 32>}, {transform_indices = @transform_1, window_bounds = array<i64: 32, 128>}, {transform_indices = @transform_2, window_bounds = array<i64: 1, 128>}, {transform_indices = @transform_3, window_bounds = array<i64: 16, 128>}]} {
    %c0_i32 = arith.constant 0 : i32
    %0 = arith.cmpi eq, %arg2, %c0_i32 : i32
    %1 = arith.extui %0 : i1 to i32
    %c0_i32_0 = arith.constant 0 : i32
    %2 = arith.cmpi ne, %1, %c0_i32_0 : i32
    scf.if %2 {
      %cst_10 = arith.constant 0.000000e+00 : f32
      %13 = vector.broadcast %cst_10 : f32 to vector<16x128xf32>
      %c0_11 = arith.constant 0 : index
      %c0_12 = arith.constant 0 : index
      %14 = vector.load %arg7[%c0_11, %c0_12] : memref<16x128xf32, #tpu.memory_space<vmem>>, vector<16x128xf32>
      tpu.vector_store %arg7[%c0_11, %c0_12], %13 {strides = array<i32>} : memref<16x128xf32, #tpu.memory_space<vmem>>, vector<16x128xf32>,
    } else {
    }
    %c0 = arith.constant 0 : index
    %c0_1 = arith.constant 0 : index
    %3 = vector.load %arg7[%c0, %c0_1] : memref<16x128xf32, #tpu.memory_space<vmem>>, vector<16x128xf32>
    %c0_2 = arith.constant 0 : index
    %c0_3 = arith.constant 0 : index
    %4 = vector.load %arg3[%c0_2, %c0_3] : memref<16x32xf32, #tpu.memory_space<vmem>>, vector<16x32xf32>
    %5 = arith.truncf %4 : vector<16x32xf32> to vector<16x32xbf16>
    %c0_4 = arith.constant 0 : index
    %c0_5 = arith.constant 0 : index
    %6 = vector.load %arg4[%c0_4, %c0_5] : memref<32x128xbf16, #tpu.memory_space<vmem>>, vector<32x128xbf16>
    %cst = arith.constant dense<0.000000e+00> : vector<16x128xf32>
    %7 = tpu.matmul %5, %6, %cst {dimension_numbers = #tpu.dot_dimension_numbers<[1], [0], [0], [1], [0, 0, 1, 1], [], []>} : vector<16x32xbf16>, vector<32x128xbf16>, vector<16x128xf32> -> vector<16x128xf32>
    %8 = arith.addf %3, %7 : vector<16x128xf32>
    %c0_6 = arith.constant 0 : index
    %c0_7 = arith.constant 0 : index
    %9 = vector.load %arg7[%c0_6, %c0_7] : memref<16x128xf32, #tpu.memory_space<vmem>>, vector<16x128xf32>
    tpu.vector_store %arg7[%c0_6, %c0_7], %8 {strides = array<i32>} : memref<16x128xf32, #tpu.memory_space<vmem>>, vector<16x128xf32>,
    %c0_i32_8 = arith.constant 0 : i32
    %10 = arith.cmpi eq, %arg2, %c0_i32_8 : i32
    %11 = arith.extui %10 : i1 to i32
    %c0_i32_9 = arith.constant 0 : i32
    %12 = arith.cmpi ne, %11, %c0_i32_9 : i32
    scf.if %12 {
      %c0_10 = arith.constant 0 : index
      %c0_11 = arith.constant 0 : index
      %13 = vector.load %arg7[%c0_10, %c0_11] : memref<16x128xf32, #tpu.memory_space<vmem>>, vector<16x128xf32>
      %c0_12 = arith.constant 0 : index
      %c0_13 = arith.constant 0 : index
      %14 = vector.load %arg5[%c0_12, %c0_13] : memref<1x128xf32, #tpu.memory_space<vmem>>, vector<1x128xf32>
      %15 = vector.broadcast %14 : vector<1x128xf32> to vector<16x128xf32>
      %16 = arith.addf %13, %15 : vector<16x128xf32>
      %cst_14 = arith.constant 0.000000e+00 : f32
      %17 = vector.broadcast %cst_14 : f32 to vector<16x128xf32>
      %18 = arith.maximumf %16, %17 : vector<16x128xf32>
      %c0_15 = arith.constant 0 : index
      %c0_16 = arith.constant 0 : index
      %19 = vector.load %arg6[%c0_15, %c0_16] : memref<16x128xf32, #tpu.memory_space<vmem>>, vector<16x128xf32>
      tpu.vector_store %arg6[%c0_15, %c0_16], %18 {strides = array<i32>} : memref<16x128xf32, #tpu.memory_space<vmem>>, vector<16x128xf32>,
    } else {
    }
    return
  }
  func.func @transform_0(%arg0: i32, %arg1: i32, %arg2: i32) -> (i32, i32) {
    %c0_i32 = arith.constant 0 : i32
    return %arg0, %arg2 : i32, i32
  }
  func.func @transform_1(%arg0: i32, %arg1: i32, %arg2: i32) -> (i32, i32) {
    %c0_i32 = arith.constant 0 : i32
    return %arg2, %arg1 : i32, i32
  }
  func.func @transform_2(%arg0: i32, %arg1: i32, %arg2: i32) -> (i32, i32) {
    %c0_i32 = arith.constant 0 : i32
    %c0_i32_0 = arith.constant 0 : i32
    return %c0_i32, %arg1 : i32, i32
  }
  func.func @transform_3(%arg0: i32, %arg1: i32, %arg2: i32) -> (i32, i32) {
    %c0_i32 = arith.constant 0 : i32
    return %arg0, %arg1 : i32, i32
  }
}

module attributes {stable_mosaic.version = 11 : i64} {
  func.func @_attn_kernel(%arg0: i32, %arg1: memref<1x8x32xf32, #tpu.memory_space<vmem>>, %arg2: memref<1x8x64xf32, #tpu.memory_space<vmem>>, %arg3: memref<1x8x32xf32, #tpu.memory_space<vmem>>) attributes {dimension_semantics = [#tpu.dimension_semantics<parallel>], iteration_bounds = array<i64: 2>, scalar_prefetch = 0 : i64, scratch_operands = 0 : i64, tpu.core_type = #tpu.core_type<tc>, window_params = [{transform_indices = @transform_0, window_bounds = array<i64: 1, 8, 32>}, {transform_indices = @transform_1, window_bounds = array<i64: 1, 8, 64>}, {transform_indices = @transform_2, window_bounds = array<i64: 1, 8, 32>}]} {
    %c0 = arith.constant 0 : index
    %c0_0 = arith.constant 0 : index
    %c0_1 = arith.constant 0 : index
    %0 = vector.load %arg1[%c0, %c0_0, %c0_1] : memref<1x8x32xf32, #tpu.memory_space<vmem>>, vector<1x8x32xf32>
    %1 = vector.shape_cast %0 : vector<1x8x32xf32> to vector<8x32xf32>
    %c0_2 = arith.constant 0 : index
    %c0_3 = arith.constant 0 : index
    %c0_4 = arith.constant 0 : index
    %2 = vector.load %arg2[%c0_2, %c0_3, %c0_4] : memref<1x8x64xf32, #tpu.memory_space<vmem>>, vector<1x8x64xf32>
    %3 = vector.shape_cast %2 : vector<1x8x64xf32> to vector<8x64xf32>
    %4 = vector.extract_strided_slice %3 {offsets = [0, 0], sizes = [8, 32], strides = [1, 1]} : vector<8x64xf32> to vector<8x32xf32>
    %5 = vector.extract_strided_slice %3 {offsets = [0, 32], sizes = [8, 32], strides = [1, 1]} : vector<8x64xf32> to vector<8x32xf32>
    %6 = tpu.iota {dimensions = array<i32: 0>} : vector<8x8xi32>
    %7 = tpu.iota {dimensions = array<i32: 1>} : vector<8x8xi32>
    %8 = arith.cmpi sgt, %7, %6 : vector<8x8xi32>
    %cst = arith.constant -1.000000e+09 : f32
    %cst_5 = arith.constant 0.000000e+00 : f32
    %9 = vector.broadcast %cst : f32 to vector<8x8xf32>
    %10 = vector.broadcast %cst_5 : f32 to vector<8x8xf32>
    %11 = arith.select %8, %9, %10 : vector<8x8xi1>, vector<8x8xf32>
    %12 = vector.extract_strided_slice %1 {offsets = [0, 0], sizes = [8, 8], strides = [1, 1]} : vector<8x32xf32> to vector<8x8xf32>
    %13 = arith.truncf %12 : vector<8x8xf32> to vector<8x8xbf16>
    %14 = vector.extract_strided_slice %4 {offsets = [0, 0], sizes = [8, 8], strides = [1, 1]} : vector<8x32xf32> to vector<8x8xf32>
    %15 = arith.truncf %14 : vector<8x8xf32> to vector<8x8xbf16>
    %16 = vector.extract_strided_slice %5 {offsets = [0, 0], sizes = [8, 8], strides = [1, 1]} : vector<8x32xf32> to vector<8x8xf32>
    %17 = arith.truncf %16 : vector<8x8xf32> to vector<8x8xbf16>
    %cst_6 = arith.constant dense<0.000000e+00> : vector<8x8xf32>
    %18 = tpu.matmul %13, %15, %cst_6 {dimension_numbers = #tpu.dot_dimension_numbers<[1], [1], [0], [0], [0, 0, 1, 0], [], []>} : vector<8x8xbf16>, vector<8x8xbf16>, vector<8x8xf32> -> vector<8x8xf32>
    %cst_7 = arith.constant 0.353553385 : f32
    %19 = vector.broadcast %cst_7 : f32 to vector<8x8xf32>
    %20 = arith.mulf %18, %19 : vector<8x8xf32>
    %21 = arith.addf %20, %11 : vector<8x8xf32>
    %cst_8 = arith.constant dense<0xFF800000> : vector<8xf32>
    %22 = vector.multi_reduction <maximumf>, %21, %cst_8 [1] : vector<8x8xf32> to vector<8xf32>
    %23 = vector.shape_cast %22 : vector<8xf32> to vector<8x1xf32>
    %24 = vector.broadcast %23 : vector<8x1xf32> to vector<8x8xf32>
    %25 = arith.subf %21, %24 : vector<8x8xf32>
    %26 = math.exp %25 : vector<8x8xf32>
    %cst_9 = arith.constant dense<0.000000e+00> : vector<8xf32>
    %27 = vector.multi_reduction <add>, %26, %cst_9 [1] : vector<8x8xf32> to vector<8xf32>
    %28 = vector.shape_cast %27 : vector<8xf32> to vector<8x1xf32>
    %29 = tpu.reciprocal %28 {approx = true} : vector<8x1xf32> -> vector<8x1xf32>
    %30 = vector.broadcast %29 : vector<8x1xf32> to vector<8x8xf32>
    %31 = arith.mulf %26, %30 : vector<8x8xf32>
    %32 = arith.truncf %31 : vector<8x8xf32> to vector<8x8xbf16>
    %cst_10 = arith.constant dense<0.000000e+00> : vector<8x8xf32>
    %33 = tpu.matmul %32, %17, %cst_10 {dimension_numbers = #tpu.dot_dimension_numbers<[1], [0], [0], [1], [0, 0, 1, 1], [], []>} : vector<8x8xbf16>, vector<8x8xbf16>, vector<8x8xf32> -> vector<8x8xf32>
    %34 = vector.extract_strided_slice %1 {offsets = [0, 8], sizes = [8, 8], strides = [1, 1]} : vector<8x32xf32> to vector<8x8xf32>
    %35 = arith.truncf %34 : vector<8x8xf32> to vector<8x8xbf16>
    %36 = vector.extract_strided_slice %4 {offsets = [0, 8], sizes = [8, 8], strides = [1, 1]} : vector<8x32xf32> to vector<8x8xf32>
    %37 = arith.truncf %36 : vector<8x8xf32> to vector<8x8xbf16>
    %38 = vector.extract_strided_slice %5 {offsets = [0, 8], sizes = [8, 8], strides = [1, 1]} : vector<8x32xf32> to vector<8x8xf32>
    %39 = arith.truncf %38 : vector<8x8xf32> to vector<8x8xbf16>
    %cst_11 = arith.constant dense<0.000000e+00> : vector<8x8xf32>
    %40 = tpu.matmul %35, %37, %cst_11 {dimension_numbers = #tpu.dot_dimension_numbers<[1], [1], [0], [0], [0, 0, 1, 0], [], []>} : vector<8x8xbf16>, vector<8x8xbf16>, vector<8x8xf32> -> vector<8x8xf32>
    %cst_12 = arith.constant 0.353553385 : f32
    %41 = vector.broadcast %cst_12 : f32 to vector<8x8xf32>
    %42 = arith.mulf %40, %41 : vector<8x8xf32>
    %43 = arith.addf %42, %11 : vector<8x8xf32>
    %cst_13 = arith.constant dense<0xFF800000> : vector<8xf32>
    %44 = vector.multi_reduction <maximumf>, %43, %cst_13 [1] : vector<8x8xf32> to vector<8xf32>
    %45 = vector.shape_cast %44 : vector<8xf32> to vector<8x1xf32>
    %46 = vector.broadcast %45 : vector<8x1xf32> to vector<8x8xf32>
    %47 = arith.subf %43, %46 : vector<8x8xf32>
    %48 = math.exp %47 : vector<8x8xf32>
    %cst_14 = arith.constant dense<0.000000e+00> : vector<8xf32>
    %49 = vector.multi_reduction <add>, %48, %cst_14 [1] : vector<8x8xf32> to vector<8xf32>
    %50 = vector.shape_cast %49 : vector<8xf32> to vector<8x1xf32>
    %51 = tpu.reciprocal %50 {approx = true} : vector<8x1xf32> -> vector<8x1xf32>
    %52 = vector.broadcast %51 : vector<8x1xf32> to vector<8x8xf32>
    %53 = arith.mulf %48, %52 : vector<8x8xf32>
    %54 = arith.truncf %53 : vector<8x8xf32> to vector<8x8xbf16>
    %cst_15 = arith.constant dense<0.000000e+00> : vector<8x8xf32>
    %55 = tpu.matmul %54, %39, %cst_15 {dimension_numbers = #tpu.dot_dimension_numbers<[1], [0], [0], [1], [0, 0, 1, 1], [], []>} : vector<8x8xbf16>, vector<8x8xbf16>, vector<8x8xf32> -> vector<8x8xf32>
    %56 = vector.extract_strided_slice %1 {offsets = [0, 16], sizes = [8, 8], strides = [1, 1]} : vector<8x32xf32> to vector<8x8xf32>
    %57 = arith.truncf %56 : vector<8x8xf32> to vector<8x8xbf16>
    %58 = vector.extract_strided_slice %4 {offsets = [0, 16], sizes = [8, 8], strides = [1, 1]} : vector<8x32xf32> to vector<8x8xf32>
    %59 = arith.truncf %58 : vector<8x8xf32> to vector<8x8xbf16>
    %60 = vector.extract_strided_slice %5 {offsets = [0, 16], sizes = [8, 8], strides = [1, 1]} : vector<8x32xf32> to vector<8x8xf32>
    %61 = arith.truncf %60 : vector<8x8xf32> to vector<8x8xbf16>
    %cst_16 = arith.constant dense<0.000000e+00> : vector<8x8xf32>
    %62 = tpu.matmul %57, %59, %cst_16 {dimension_numbers = #tpu.dot_dimension_numbers<[1], [1], [0], [0], [0, 0, 1, 0], [], []>} : vector<8x8xbf16>, vector<8x8xbf16>, vector<8x8xf32> -> vector<8x8xf32>
    %cst_17 = arith.constant 0.353553385 : f32
    %63 = vector.broadcast %cst_17 : f32 to vector<8x8xf32>
    %64 = arith.mulf %62, %63 : vector<8x8xf32>
    %65 = arith.addf %64, %11 : vector<8x8xf32>
    %cst_18 = arith.constant dense<0xFF800000> : vector<8xf32>
    %66 = vector.multi_reduction <maximumf>, %65, %cst_18 [1] : vector<8x8xf32> to vector<8xf32>
    %67 = vector.shape_cast %66 : vector<8xf32> to vector<8x1xf32>
    %68 = vector.broadcast %67 : vector<8x1xf32> to vector<8x8xf32>
    %69 = arith.subf %65, %68 : vector<8x8xf32>
    %70 = math.exp %69 : vector<8x8xf32>
    %cst_19 = arith.constant dense<0.000000e+00> : vector<8xf32>
    %71 = vector.multi_reduction <add>, %70, %cst_19 [1] : vector<8x8xf32> to vector<8xf32>
    %72 = vector.shape_cast %71 : vector<8xf32> to vector<8x1xf32>
    %73 = tpu.reciprocal %72 {approx = true} : vector<8x1xf32> -> vector<8x1xf32>
    %74 = vector.broadcast %73 : vector<8x1xf32> to vector<8x8xf32>
    %75 = arith.mulf %70, %74 : vector<8x8xf32>
    %76 = arith.truncf %75 : vector<8x8xf32> to vector<8x8xbf16>
    %cst_20 = arith.constant dense<0.000000e+00> : vector<8x8xf32>
    %77 = tpu.matmul %76, %61, %cst_20 {dimension_numbers = #tpu.dot_dimension_numbers<[1], [0], [0], [1], [0, 0, 1, 1], [], []>} : vector<8x8xbf16>, vector<8x8xbf16>, vector<8x8xf32> -> vector<8x8xf32>
    %78 = vector.extract_strided_slice %1 {offsets = [0, 24], sizes = [8, 8], strides = [1, 1]} : vector<8x32xf32> to vector<8x8xf32>
    %79 = arith.truncf %78 : vector<8x8xf32> to vector<8x8xbf16>
    %80 = vector.extract_strided_slice %4 {offsets = [0, 24], sizes = [8, 8], strides = [1, 1]} : vector<8x32xf32> to vector<8x8xf32>
    %81 = arith.truncf %80 : vector<8x8xf32> to vector<8x8xbf16>
    %82 = vector.extract_strided_slice %5 {offsets = [0, 24], sizes = [8, 8], strides = [1, 1]} : vector<8x32xf32> to vector<8x8xf32>
    %83 = arith.truncf %82 : vector<8x8xf32> to vector<8x8xbf16>
    %cst_21 = arith.constant dense<0.000000e+00> : vector<8x8xf32>
    %84 = tpu.matmul %79, %81, %cst_21 {dimension_numbers = #tpu.dot_dimension_numbers<[1], [1], [0], [0], [0, 0, 1, 0], [], []>} : vector<8x8xbf16>, vector<8x8xbf16>, vector<8x8xf32> -> vector<8x8xf32>
    %cst_22 = arith.constant 0.353553385 : f32
    %85 = vector.broadcast %cst_22 : f32 to vector<8x8xf32>
    %86 = arith.mulf %84, %85 : vector<8x8xf32>
    %87 = arith.addf %86, %11 : vector<8x8xf32>
    %cst_23 = arith.constant dense<0xFF800000> : vector<8xf32>
    %88 = vector.multi_reduction <maximumf>, %87, %cst_23 [1] : vector<8x8xf32> to vector<8xf32>
    %89 = vector.shape_cast %88 : vector<8xf32> to vector<8x1xf32>
    %90 = vector.broadcast %89 : vector<8x1xf32> to vector<8x8xf32>
    %91 = arith.subf %87, %90 : vector<8x8xf32>
    %92 = math.exp %91 : vector<8x8xf32>
    %cst_24 = arith.constant dense<0.000000e+00> : vector<8xf32>
    %93 = vector.multi_reduction <add>, %92, %cst_24 [1] : vector<8x8xf32> to vector<8xf32>
    %94 = vector.shape_cast %93 : vector<8xf32> to vector<8x1xf32>
    %95 = tpu.reciprocal %94 {approx = true} : vector<8x1xf32> -> vector<8x1xf32>
    %96 = vector.broadcast %95 : vector<8x1xf32> to vector<8x8xf32>
    %97 = arith.mulf %92, %96 : vector<8x8xf32>
    %98 = arith.truncf %97 : vector<8x8xf32> to vector<8x8xbf16>
    %cst_25 = arith.constant dense<0.000000e+00> : vector<8x8xf32>
    %99 = tpu.matmul %98, %83, %cst_25 {dimension_numbers = #tpu.dot_dimension_numbers<[1], [0], [0], [1], [0, 0, 1, 1], [], []>} : vector<8x8xbf16>, vector<8x8xbf16>, vector<8x8xf32> -> vector<8x8xf32>
    %100 = tpu.concatenate %33, %55, %77, %99 in 1 : vector<8x8xf32>, vector<8x8xf32>, vector<8x8xf32>, vector<8x8xf32> -> vector<8x32xf32>
    %c0_26 = arith.constant 0 : index
    %c0_27 = arith.constant 0 : index
    %c0_28 = arith.constant 0 : index
    %101 = vector.load %arg3[%c0_26, %c0_27, %c0_28] : memref<1x8x32xf32, #tpu.memory_space<vmem>>, vector<1x8x32xf32>
    %102 = vector.shape_cast %101 : vector<1x8x32xf32> to vector<8x32xf32>
    %103 = vector.shape_cast %100 : vector<8x32xf32> to vector<1x8x32xf32>
    tpu.vector_store %arg3[%c0_26, %c0_27, %c0_28], %103 {strides = array<i32>} : memref<1x8x32xf32, #tpu.memory_space<vmem>>, vector<1x8x32xf32>,
    return
  }
  func.func @transform_0(%arg0: i32) -> (i32, i32, i32) {
    %c0_i32 = arith.constant 0 : i32
    %c0_i32_0 = arith.constant 0 : i32
    %c0_i32_1 = arith.constant 0 : i32
    return %arg0, %c0_i32, %c0_i32_0 : i32, i32, i32
  }
  func.func @transform_1(%arg0: i32) -> (i32, i32, i32) {
    %c0_i32 = arith.constant 0 : i32
    %c0_i32_0 = arith.constant 0 : i32
    %c0_i32_1 = arith.constant 0 : i32
    return %arg0, %c0_i32, %c0_i32_0 : i32, i32, i32
  }
  func.func @transform_2(%arg0: i32) -> (i32, i32, i32) {
    %c0_i32 = arith.constant 0 : i32
    %c0_i32_0 = arith.constant 0 : i32
    %c0_i32_1 = arith.constant 0 : i32
    return %arg0, %c0_i32, %c0_i32_0 : i32, i32, i32
  }
}

module attributes {stable_mosaic.version = 11 : i64} {
  func.func @_dense_kernel(%arg0: i32, %arg1: i32, %arg2: i32, %arg3: memref<16x32xf32, #tpu.memory_space<vmem>>, %arg4: memref<32x64xbf16, #tpu.memory_space<vmem>>, %arg5: memref<1x64xf32, #tpu.memory_space<vmem>>, %arg6: memref<16x64xf32, #tpu.memory_space<vmem>>, %arg7: memref<16x64xf32, #tpu.memory_space<vmem>>) attributes {dimension_semantics = [#tpu.dimension_semantics<parallel>, #tpu.dimension_semantics<parallel>, #tpu.dimension_semantics<arbitrary>], iteration_bounds = array<i64: 1, 1, 1>, scalar_prefetch = 0 : i64, scratch_operands = 1 : i64, tpu.core_type = #tpu.core_type<tc>, window_params = [{transform_indices = @transform_0, window_bounds = array<i64: 16, 32>}, {transform_indices = @transform_1, window_bounds = array<i64: 32, 64>}, {transform_indices = @transform_2, window_bounds = array<i64: 1, 64>}, {transform_indices = @transform_3, window_bounds = array<i64: 16, 64>}]} {
    %c0_i32 = arith.constant 0 : i32
    %0 = arith.cmpi eq, %arg2, %c0_i32 : i32
    %1 = arith.extui %0 : i1 to i32
    %c0_i32_0 = arith.constant 0 : i32
    %2 = arith.cmpi ne, %1, %c0_i32_0 : i32
    scf.if %2 {
      %cst_10 = arith.constant 0.000000e+00 : f32
      %13 = vector.broadcast %cst_10 : f32 to vector<16x64xf32>
      %c0_11 = arith.constant 0 : index
      %c0_12 = arith.constant 0 : index
      %14 = vector.load %arg7[%c0_11, %c0_12] : memref<16x64xf32, #tpu.memory_space<vmem>>, vector<16x64xf32>
      tpu.vector_store %arg7[%c0_11, %c0_12], %13 {strides = array<i32>} : memref<16x64xf32, #tpu.memory_space<vmem>>, vector<16x64xf32>,
    } else {
    }
    %c0 = arith.constant 0 : index
    %c0_1 = arith.constant 0 : index
    %3 = vector.load %arg7[%c0, %c0_1] : memref<16x64xf32, #tpu.memory_space<vmem>>, vector<16x64xf32>
    %c0_2 = arith.constant 0 : index
    %c0_3 = arith.constant 0 : index
    %4 = vector.load %arg3[%c0_2, %c0_3] : memref<16x32xf32, #tpu.memory_space<vmem>>, vector<16x32xf32>
    %5 = arith.truncf %4 : vector<16x32xf32> to vector<16x32xbf16>
    %c0_4 = arith.constant 0 : index
    %c0_5 = arith.constant 0 : index
    %6 = vector.load %arg4[%c0_4, %c0_5] : memref<32x64xbf16, #tpu.memory_space<vmem>>, vector<32x64xbf16>
    %cst = arith.constant dense<0.000000e+00> : vector<16x64xf32>
    %7 = tpu.matmul %5, %6, %cst {dimension_numbers = #tpu.dot_dimension_numbers<[1], [0], [0], [1], [0, 0, 1, 1], [], []>} : vector<16x32xbf16>, vector<32x64xbf16>, vector<16x64xf32> -> vector<16x64xf32>
    %8 = arith.addf %3, %7 : vector<16x64xf32>
    %c0_6 = arith.constant 0 : index
    %c0_7 = arith.constant 0 : index
    %9 = vector.load %arg7[%c0_6, %c0_7] : memref<16x64xf32, #tpu.memory_space<vmem>>, vector<16x64xf32>
    tpu.vector_store %arg7[%c0_6, %c0_7], %8 {strides = array<i32>} : memref<16x64xf32, #tpu.memory_space<vmem>>, vector<16x64xf32>,
    %c0_i32_8 = arith.constant 0 : i32
    %10 = arith.cmpi eq, %arg2, %c0_i32_8 : i32
    %11 = arith.extui %10 : i1 to i32
    %c0_i32_9 = arith.constant 0 : i32
    %12 = arith.cmpi ne, %11, %c0_i32_9 : i32
    scf.if %12 {
      %c0_10 = arith.constant 0 : index
      %c0_11 = arith.constant 0 : index
      %13 = vector.load %arg7[%c0_10, %c0_11] : memref<16x64xf32, #tpu.memory_space<vmem>>, vector<16x64xf32>
      %c0_12 = arith.constant 0 : index
      %c0_13 = arith.constant 0 : index
      %14 = vector.load %arg5[%c0_12, %c0_13] : memref<1x64xf32, #tpu.memory_space<vmem>>, vector<1x64xf32>
      %15 = vector.broadcast %14 : vector<1x64xf32> to vector<16x64xf32>
      %16 = arith.addf %13, %15 : vector<16x64xf32>
      %c0_14 = arith.constant 0 : index
      %c0_15 = arith.constant 0 : index
      %17 = vector.load %arg6[%c0_14, %c0_15] : memref<16x64xf32, #tpu.memory_space<vmem>>, vector<16x64xf32>
      tpu.vector_store %arg6[%c0_14, %c0_15], %16 {strides = array<i32>} : memref<16x64xf32, #tpu.memory_space<vmem>>, vector<16x64xf32>,
    } else {
    }
    return
  }
  func.func @transform_0(%arg0: i32, %arg1: i32, %arg2: i32) -> (i32, i32) {
    %c0_i32 = arith.constant 0 : i32
    return %arg0, %arg2 : i32, i32
  }
  func.func @transform_1(%arg0: i32, %arg1: i32, %arg2: i32) -> (i32, i32) {
    %c0_i32 = arith.constant 0 : i32
    return %arg2, %arg1 : i32, i32
  }
  func.func @transform_2(%arg0: i32, %arg1: i32, %arg2: i32) -> (i32, i32) {
    %c0_i32 = arith.constant 0 : i32
    %c0_i32_0 = arith.constant 0 : i32
    return %c0_i32, %arg1 : i32, i32
  }
  func.func @transform_3(%arg0: i32, %arg1: i32, %arg2: i32) -> (i32, i32) {
    %c0_i32 = arith.constant 0 : i32
    return %arg0, %arg1 : i32, i32
  }
}

</mosaic_0001>

<llo_original>
// kernel: transformer_forward.20
$region0: #{transformer_forward.20}
  #allocation0 [shape = 'u32[]', space=smem, size = 0x4, offset = 0x4, fixed_abs, tag = 'smem constant byte address 0x4 - core index']
  #allocation1 [shape = 'u32[144,128]{1,0:T(1,128)}', space=vmem, size = 0x12000, scoped, tag = 'internal scratch']
  #allocation2 [shape = 'f32[16,96]{1,0:T(8,128)}', space=vmem, size = 0x2000, scoped, tag = 'scratch operand']
  %s0 = inlined_call_operand.vmem [shape: f32[16,32], index: 0, kind: input, shape index: {}]
  %s1 = inlined_call_operand.vmem [shape: bf16[32,96], index: 1, kind: input, shape index: {}]
  %s2 = inlined_call_operand.vmem [shape: f32[1,96], index: 2, kind: input, shape index: {}]
  %s3 = inlined_call_operand.vmem [shape: f32[16,96], index: 3, kind: output, shape index: {}]
  %s4 = sld [smem:[#allocation0]]
  $region30: #{transformer_forward.20} parent=0
    _
  %s6 = ssub.s32 1, %s4
  %s7 = scalar_select 0, %s6, %s4
  // Predicated region
  $region2: #{transformer_forward.20} parent=0 // pred_check
    _
  $region3: #{transformer_forward.20} parent=0 // pred_check_branch
    %9 = sbr.rel (0) target = $region5
  $region4: #{transformer_forward.20} parent=0 // pred_region
    _
  $region5: #{transformer_forward.20} parent=0 // pred_fallthru
    _
  // Predicated region
  $region6: #{transformer_forward.20} parent=0 // pred_check
    _
  $region7: #{transformer_forward.20} parent=0 // pred_check_branch
    %11 = sbr.rel (0) target = $region9
  $region8: #{transformer_forward.20} parent=0 // pred_region
    _
  $region9: #{transformer_forward.20} parent=0 // pred_fallthru
    _
  // Predicated region
  $region10: #{transformer_forward.20} parent=0 // pred_check
    _
  $region11: #{transformer_forward.20} parent=0 // pred_check_branch
    %13 = sbr.rel (0) target = $region13
  $region12: #{transformer_forward.20} parent=0 // pred_region
    _
  $region13: #{transformer_forward.20} parent=0 // pred_fallthru
    _
  %p15 = scmp.eq.s32.totalorder 0, 0
  // Predicated region
  $region14: #{transformer_forward.20} parent=0 // pred_check
    %p16 = pneg %p15
  $region15: #{transformer_forward.20} parent=0 // pred_check_branch
    %18 = sbr.rel (%p16) target = $region17
  $region16: #{transformer_forward.20} parent=0 // pred_region
    %vm19 = vcmask 785408
    %20 = vst.msk [vmem:[#allocation2] sm:$0xff] %vm19, 0.0
    %21 = vst.msk [vmem:[#allocation2 + $0x8] sm:$0xff] %vm19, 0.0
  $region17: #{transformer_forward.20} parent=0 // pred_fallthru
    _
  %v22 = vld [vmem:[#allocation2] sm:$0xff]
  %v23 = vld [vmem:[#allocation2 + $0x8] sm:$0xff]
  %v24 = vld [vmem:[%s0] sm:$0xff]
  %v25 = vld [vmem:[%s0 + $0x8] sm:$0xff]
  %v26 = vpack.c.bf16 %v25, %v24
  %v27 = vld [vmem:[%s1] sm:$0xf]
  %v28 = vld [vmem:[%s1 + $0x4] sm:$0xf]
  %v29 = vld [vmem:[%s1 + $0x8] sm:$0xf]
  %v30 = vld [vmem:[%s1 + $0xc] sm:$0xf]
  %v35 = vunpack.c.l.b16 %v27
  %v36 = vunpack.c.l.b16 %v28
  %v37 = vunpack.c.l.b16 %v29
  %v38 = vunpack.c.l.b16 %v30
  %v39 = vpack.c.b16 %v36, %v35
  %v40 = vpack.c.b16 %v38, %v37
  %vm43 = vcmask 261120
  %v45 = vsel %vm43, %v26, 0
  %47 = vmatprep.subr.bf16.mxu0 0
  %48 = vmatpush1.bf16.msra.mxu0 %v39
  %49 = vmatprep.subr.bf16.mxu0 0
  %50 = vmatpush1.bf16.msra.mxu0 %v40
  %51 = vmatprep.subr.bf16.mxu0 0
  %52 = vmatpush1.bf16.msra.mxu0 0
  %53 = vmatprep.subr.bf16.mxu0 0
  %54 = vmatpush1.bf16.msra.mxu0 0
  %55 = vmatprep.subr.bf16.mxu0 0
  %56 = vmatpush1.bf16.msra.mxu0 0
  %57 = vmatprep.subr.bf16.mxu0 0
  %58 = vmatpush1.bf16.msra.mxu0 0
  %59 = vmatprep.subr.bf16.mxu0 0
  %60 = vmatpush1.bf16.msra.mxu0 0
  %61 = vmatprep.subr.bf16.mxu0 0
  %62 = vmatpush1.bf16.msra.mxu0 0
  %63 = vmatprep.subr.bf16.mxu0 0
  %64 = vmatpush1.bf16.msra.mxu0 0
  %65 = vmatprep.subr.bf16.mxu0 0
  %66 = vmatpush1.bf16.msra.mxu0 0
  %67 = vmatprep.subr.bf16.mxu0 0
  %68 = vmatpush1.bf16.msra.mxu0 0
  %69 = vmatprep.subr.bf16.mxu0 0
  %70 = vmatpush1.bf16.msra.mxu0 0
  %71 = vmatprep.subr.bf16.mxu0 0
  %72 = vmatpush1.bf16.msra.mxu0 0
  %73 = vmatprep.subr.bf16.mxu0 0
  %74 = vmatpush1.bf16.msra.mxu0 0
  %75 = vmatprep.subr.bf16.mxu0 0
  %76 = vmatpush1.bf16.msra.mxu0 0
  %77 = vmatprep.subr.bf16.mxu0 0
  %78 = vmatpush1.bf16.msra.mxu0 0
  %79 = vmatprep.mubr.bf16.mxu0 0
  %80 = vmatmul.mubr.bf16.gmra.mrb[0].mxu0 %v45
  %v81 = vpop.f32.mrb[0].mxu0
  %v82 = vadd.f32 0.0, %v81
  %v83 = vpop.f32.mrb[0].mxu0
  %v84 = vpop.f32.mrb[0].mxu0
  %v85 = vadd.f32 0.0, %v84
  %v86 = vpop.f32.mrb[0].mxu0
  %87 = vdwg.mxu0
  %v88 = vadd.f32 %v22, %v82
  %v89 = vadd.f32 %v23, %v85
  %vm90 = vcmask 785408
  %91 = vst.msk [vmem:[#allocation2] sm:$0xff] %vm90, %v88
  %92 = vst.msk [vmem:[#allocation2 + $0x8] sm:$0xff] %vm90, %v89
  // Predicated region
  $region18: #{transformer_forward.20} parent=0 // pred_check
    %p93 = pneg %p15
  $region19: #{transformer_forward.20} parent=0 // pred_check_branch
    %95 = sbr.rel (%p93) target = $region21
  $region20: #{transformer_forward.20} parent=0 // pred_region
    %v96 = vld [vmem:[#allocation2] sm:$0xff]
    %v97 = vld [vmem:[#allocation2 + $0x8] sm:$0xff]
    %v98 = vld [vmem:[%s2] sm:$0x1]
    %v100 = vlaneseq
    %v101 = vshrl.u32 %v100, 7
    %v102 = vsub.s32 0, %v101
    %v103 = vrot.slane %v98, %v102
    %v105 = vadd.f32 %v96, %v103
    %v106 = vadd.f32 %v97, %v103
    %107 = vst.msk [vmem:[%s3] sm:$0xff] %vm90, %v105
    %108 = vst.msk [vmem:[%s3 + $0x8] sm:$0xff] %vm90, %v106
  $region21: #{transformer_forward.20} parent=0 // pred_fallthru
    _
  // Predicated region
  $region22: #{transformer_forward.20} parent=0 // pred_check
    _
  $region23: #{transformer_forward.20} parent=0 // pred_check_branch
    %110 = sbr.rel (0) target = $region25
  $region24: #{transformer_forward.20} parent=0 // pred_region
    _
  $region25: #{transformer_forward.20} parent=0 // pred_fallthru
    _
  // Predicated region
  $region26: #{transformer_forward.20} parent=0 // pred_check
    _
  $region27: #{transformer_forward.20} parent=0 // pred_check_branch
    %112 = sbr.rel (0) target = $region29
  $region28: #{transformer_forward.20} parent=0 // pred_region
    _
  $region29: #{transformer_forward.20} parent=0 // pred_fallthru
    _

// kernel: transformer_forward.23
$region0: #{transformer_forward.23}
  #allocation0 [shape = 'u32[]', space=smem, size = 0x4, offset = 0x4, fixed_abs, tag = 'smem constant byte address 0x4 - core index']
  #allocation1 [shape = 'u32[144,128]{1,0:T(1,128)}', space=vmem, size = 0x12000, scoped, tag = 'internal scratch']
  %s0 = inlined_call_operand.vmem [shape: f32[16,32], index: 0, kind: input, shape index: {}]
  %s1 = inlined_call_operand.vmem [shape: f32[16,32], index: 1, kind: input, shape index: {}]
  %s2 = inlined_call_operand.vmem [shape: f32[1,32], index: 2, kind: input, shape index: {}]
  %s3 = inlined_call_operand.vmem [shape: f32[1,32], index: 3, kind: input, shape index: {}]
  %s4 = inlined_call_operand.vmem [shape: f32[16,32], index: 4, kind: output, shape index: {}]
  %s5 = sld [smem:[#allocation0]]
  $region26: #{transformer_forward.23} parent=0
    _
  %s7 = ssub.s32 1, %s5
  %s8 = scalar_select 0, %s7, %s5
  // Predicated region
  $region2: #{transformer_forward.23} parent=0 // pred_check
    _
  $region3: #{transformer_forward.23} parent=0 // pred_check_branch
    %10 = sbr.rel (0) target = $region5
  $region4: #{transformer_forward.23} parent=0 // pred_region
    _
  $region5: #{transformer_forward.23} parent=0 // pred_fallthru
    _
  // Predicated region
  $region6: #{transformer_forward.23} parent=0 // pred_check
    _
  $region7: #{transformer_forward.23} parent=0 // pred_check_branch
    %12 = sbr.rel (0) target = $region9
  $region8: #{transformer_forward.23} parent=0 // pred_region
    _
  $region9: #{transformer_forward.23} parent=0 // pred_fallthru
    _
  // Predicated region
  $region10: #{transformer_forward.23} parent=0 // pred_check
    _
  $region11: #{transformer_forward.23} parent=0 // pred_check_branch
    %14 = sbr.rel (0) target = $region13
  $region12: #{transformer_forward.23} parent=0 // pred_region
    _
  $region13: #{transformer_forward.23} parent=0 // pred_fallthru
    _
  // Predicated region
  $region14: #{transformer_forward.23} parent=0 // pred_check
    _
  $region15: #{transformer_forward.23} parent=0 // pred_check_branch
    %16 = sbr.rel (0) target = $region17
  $region16: #{transformer_forward.23} parent=0 // pred_region
    _
  $region17: #{transformer_forward.23} parent=0 // pred_fallthru
    _
  %v17 = vld [vmem:[%s0] sm:$0xff]
  %v18 = vld [vmem:[%s0 + $0x8] sm:$0xff]
  %v19 = vld [vmem:[%s1] sm:$0xff]
  %v20 = vld [vmem:[%s1 + $0x8] sm:$0xff]
  %v21 = vadd.f32 %v17, %v19
  %v22 = vadd.f32 %v18, %v20
  %vm23 = vcmask 261120
  %v24 = vsel %vm23, %v21, 0.0
  %25 = vadd.xlane.f32.xlu0 %v24
  %v26 = vpop.xlane.xlu0 %25
  %v27 = vsel %vm23, %v22, 0.0
  %28 = vadd.xlane.f32.xlu0 %v27
  %v29 = vpop.xlane.xlu0 %28
  %v30 = vrcp.pop 32.0
  %v31 = vmul.f32 %v26, %v30
  %v32 = vmul.f32 %v29, %v30
  %v33 = vsub.f32 %v21, %v31
  %v34 = vsub.f32 %v22, %v32
  %v35 = vmul.f32 %v33, %v33
  %v36 = vmul.f32 %v34, %v34
  %v37 = vsel %vm23, %v35, 0.0
  %38 = vadd.xlane.f32.xlu0 %v37
  %v39 = vpop.xlane.xlu0 %38
  %v40 = vsel %vm23, %v36, 0.0
  %41 = vadd.xlane.f32.xlu0 %v40
  %v42 = vpop.xlane.xlu0 %41
  %v43 = vmul.f32 %v39, %v30
  %v44 = vmul.f32 %v42, %v30
  %v45 = vadd.f32 %v43, 1e-05
  %v46 = vadd.f32 %v44, 1e-05
  %v47 = vrsqrt.pop %v45
  %v48 = vrsqrt.pop %v46
  %v49 = vmul.f32 %v33, %v47
  %v50 = vmul.f32 %v34, %v48
  %v51 = vld [vmem:[%s2] sm:$0x1]
  %v53 = vlaneseq
  %v54 = vshrl.u32 %v53, 7
  %v55 = vsub.s32 0, %v54
  %v56 = vrot.slane %v51, %v55
  %v58 = vmul.f32 %v49, %v56
  %v59 = vmul.f32 %v50, %v56
  %v60 = vld [vmem:[%s3] sm:$0x1]
  %v62 = vlaneseq
  %v63 = vshrl.u32 %v62, 7
  %v64 = vsub.s32 0, %v63
  %v65 = vrot.slane %v60, %v64
  %v67 = vadd.f32 %v58, %v65
  %v68 = vadd.f32 %v59, %v65
  %69 = vst.msk [vmem:[%s4] sm:$0xff] %vm23, %v67
  %70 = vst.msk [vmem:[%s4 + $0x8] sm:$0xff] %vm23, %v68
  // Predicated region
  $region18: #{transformer_forward.23} parent=0 // pred_check
    _
  $region19: #{transformer_forward.23} parent=0 // pred_check_branch
    %72 = sbr.rel (0) target = $region21
  $region20: #{transformer_forward.23} parent=0 // pred_region
    _
  $region21: #{transformer_forward.23} parent=0 // pred_fallthru
    _
  // Predicated region
  $region22: #{transformer_forward.23} parent=0 // pred_check
    _
  $region23: #{transformer_forward.23} parent=0 // pred_check_branch
    %74 = sbr.rel (0) target = $region25
  $region24: #{transformer_forward.23} parent=0 // pred_region
    _
  $region25: #{transformer_forward.23} parent=0 // pred_fallthru
    _

// kernel: transformer_forward.22
$region0: #{transformer_forward.22}
  #allocation0 [shape = 'u32[]', space=smem, size = 0x4, offset = 0x4, fixed_abs, tag = 'smem constant byte address 0x4 - core index']
  #allocation1 [shape = 'u32[144,128]{1,0:T(1,128)}', space=vmem, size = 0x12000, scoped, tag = 'internal scratch']
  #allocation2 [shape = 'f32[16,32]{1,0:T(8,128)}', space=vmem, size = 0x2000, scoped, tag = 'scratch operand']
  %s0 = inlined_call_operand.vmem [shape: f32[16,32], index: 0, kind: input, shape index: {}]
  %s1 = inlined_call_operand.vmem [shape: bf16[32,32], index: 1, kind: input, shape index: {}]
  %s2 = inlined_call_operand.vmem [shape: f32[1,32], index: 2, kind: input, shape index: {}]
  %s3 = inlined_call_operand.vmem [shape: f32[16,32], index: 3, kind: output, shape index: {}]
  %s4 = sld [smem:[#allocation0]]
  $region30: #{transformer_forward.22} parent=0
    _
  %s6 = ssub.s32 1, %s4
  %s7 = scalar_select 0, %s6, %s4
  // Predicated region
  $region2: #{transformer_forward.22} parent=0 // pred_check
    _
  $region3: #{transformer_forward.22} parent=0 // pred_check_branch
    %9 = sbr.rel (0) target = $region5
  $region4: #{transformer_forward.22} parent=0 // pred_region
    _
  $region5: #{transformer_forward.22} parent=0 // pred_fallthru
    _
  // Predicated region
  $region6: #{transformer_forward.22} parent=0 // pred_check
    _
  $region7: #{transformer_forward.22} parent=0 // pred_check_branch
    %11 = sbr.rel (0) target = $region9
  $region8: #{transformer_forward.22} parent=0 // pred_region
    _
  $region9: #{transformer_forward.22} parent=0 // pred_fallthru
    _
  // Predicated region
  $region10: #{transformer_forward.22} parent=0 // pred_check
    _
  $region11: #{transformer_forward.22} parent=0 // pred_check_branch
    %13 = sbr.rel (0) target = $region13
  $region12: #{transformer_forward.22} parent=0 // pred_region
    _
  $region13: #{transformer_forward.22} parent=0 // pred_fallthru
    _
  %p15 = scmp.eq.s32.totalorder 0, 0
  // Predicated region
  $region14: #{transformer_forward.22} parent=0 // pred_check
    %p16 = pneg %p15
  $region15: #{transformer_forward.22} parent=0 // pred_check_branch
    %18 = sbr.rel (%p16) target = $region17
  $region16: #{transformer_forward.22} parent=0 // pred_region
    %vm19 = vcmask 261120
    %20 = vst.msk [vmem:[#allocation2] sm:$0xff] %vm19, 0.0
    %21 = vst.msk [vmem:[#allocation2 + $0x8] sm:$0xff] %vm19, 0.0
  $region17: #{transformer_forward.22} parent=0 // pred_fallthru
    _
  %v22 = vld [vmem:[#allocation2] sm:$0xff]
  %v23 = vld [vmem:[#allocation2 + $0x8] sm:$0xff]
  %v24 = vld [vmem:[%s0] sm:$0xff]
  %v25 = vld [vmem:[%s0 + $0x8] sm:$0xff]
  %v26 = vpack.c.bf16 %v25, %v24
  %v27 = vld [vmem:[%s1] sm:$0xf]
  %v28 = vld [vmem:[%s1 + $0x4] sm:$0xf]
  %v29 = vld [vmem:[%s1 + $0x8] sm:$0xf]
  %v30 = vld [vmem:[%s1 + $0xc] sm:$0xf]
  %v35 = vunpack.c.l.b16 %v27
  %v36 = vunpack.c.l.b16 %v28
  %v37 = vunpack.c.l.b16 %v29
  %v38 = vunpack.c.l.b16 %v30
  %v39 = vpack.c.b16 %v36, %v35
  %v40 = vpack.c.b16 %v38, %v37
  %vm43 = vcmask 261120
  %v45 = vsel %vm43, %v26, 0
  %47 = vmatprep.subr.bf16.mxu0 0
  %48 = vmatpush1.bf16.msra.mxu0 %v39
  %49 = vmatprep.subr.bf16.mxu0 0
  %50 = vmatpush1.bf16.msra.mxu0 %v40
  %51 = vmatprep.subr.bf16.mxu0 0
  %52 = vmatpush1.bf16.msra.mxu0 0
  %53 = vmatprep.subr.bf16.mxu0 0
  %54 = vmatpush1.bf16.msra.mxu0 0
  %55 = vmatprep.subr.bf16.mxu0 0
  %56 = vmatpush1.bf16.msra.mxu0 0
  %57 = vmatprep.subr.bf16.mxu0 0
  %58 = vmatpush1.bf16.msra.mxu0 0
  %59 = vmatprep.subr.bf16.mxu0 0
  %60 = vmatpush1.bf16.msra.mxu0 0
  %61 = vmatprep.subr.bf16.mxu0 0
  %62 = vmatpush1.bf16.msra.mxu0 0
  %63 = vmatprep.subr.bf16.mxu0 0
  %64 = vmatpush1.bf16.msra.mxu0 0
  %65 = vmatprep.subr.bf16.mxu0 0
  %66 = vmatpush1.bf16.msra.mxu0 0
  %67 = vmatprep.subr.bf16.mxu0 0
  %68 = vmatpush1.bf16.msra.mxu0 0
  %69 = vmatprep.subr.bf16.mxu0 0
  %70 = vmatpush1.bf16.msra.mxu0 0
  %71 = vmatprep.subr.bf16.mxu0 0
  %72 = vmatpush1.bf16.msra.mxu0 0
  %73 = vmatprep.subr.bf16.mxu0 0
  %74 = vmatpush1.bf16.msra.mxu0 0
  %75 = vmatprep.subr.bf16.mxu0 0
  %76 = vmatpush1.bf16.msra.mxu0 0
  %77 = vmatprep.subr.bf16.mxu0 0
  %78 = vmatpush1.bf16.msra.mxu0 0
  %79 = vmatprep.mubr.bf16.mxu0 0
  %80 = vmatmul.mubr.bf16.gmra.mrb[0].mxu0 %v45
  %v81 = vpop.f32.mrb[0].mxu0
  %v82 = vadd.f32 0.0, %v81
  %v83 = vpop.f32.mrb[0].mxu0
  %v84 = vpop.f32.mrb[0].mxu0
  %v85 = vadd.f32 0.0, %v84
  %v86 = vpop.f32.mrb[0].mxu0
  %87 = vdwg.mxu0
  %v88 = vadd.f32 %v22, %v82
  %v89 = vadd.f32 %v23, %v85
  %90 = vst.msk [vmem:[#allocation2] sm:$0xff] %vm43, %v88
  %91 = vst.msk [vmem:[#allocation2 + $0x8] sm:$0xff] %vm43, %v89
  // Predicated region
  $region18: #{transformer_forward.22} parent=0 // pred_check
    %p92 = pneg %p15
  $region19: #{transformer_forward.22} parent=0 // pred_check_branch
    %94 = sbr.rel (%p92) target = $region21
  $region20: #{transformer_forward.22} parent=0 // pred_region
    %v95 = vld [vmem:[#allocation2] sm:$0xff]
    %v96 = vld [vmem:[#allocation2 + $0x8] sm:$0xff]
    %v97 = vld [vmem:[%s2] sm:$0x1]
    %v99 = vlaneseq
    %v100 = vshrl.u32 %v99, 7
    %v101 = vsub.s32 0, %v100
    %v102 = vrot.slane %v97, %v101
    %v104 = vadd.f32 %v95, %v102
    %v105 = vadd.f32 %v96, %v102
    %106 = vst.msk [vmem:[%s3] sm:$0xff] %vm43, %v104
    %107 = vst.msk [vmem:[%s3 + $0x8] sm:$0xff] %vm43, %v105
  $region21: #{transformer_forward.22} parent=0 // pred_fallthru
    _
  // Predicated region
  $region22: #{transformer_forward.22} parent=0 // pred_check
    _
  $region23: #{transformer_forward.22} parent=0 // pred_check_branch
    %109 = sbr.rel (0) target = $region25
  $region24: #{transformer_forward.22} parent=0 // pred_region
    _
  $region25: #{transformer_forward.22} parent=0 // pred_fallthru
    _
  // Predicated region
  $region26: #{transformer_forward.22} parent=0 // pred_check
    _
  $region27: #{transformer_forward.22} parent=0 // pred_check_branch
    %111 = sbr.rel (0) target = $region29
  $region28: #{transformer_forward.22} parent=0 // pred_region
    _
  $region29: #{transformer_forward.22} parent=0 // pred_fallthru
    _

// kernel: transformer_forward.21
$region0: #{transformer_forward.21}
  #allocation0 [shape = 'u32[]', space=smem, size = 0x4, offset = 0x4, fixed_abs, tag = 'smem constant byte address 0x4 - core index']
  #allocation1 [shape = 'u32[144,128]{1,0:T(1,128)}', space=vmem, size = 0x12000, scoped, tag = 'internal scratch']
  %s0 = inlined_call_operand.vmem [shape: f32[2,8,32], index: 0, kind: input, shape index: {}]
  %s1 = inlined_call_operand.vmem [shape: f32[2,8,64], index: 1, kind: input, shape index: {}]
  %s2 = inlined_call_operand.vmem [shape: f32[2,8,32], index: 2, kind: output, shape index: {}]
  %s3 = sld [smem:[#allocation0]]
  $region41: #{transformer_forward.21} parent=0
    _
  %s5 = ssub.s32 1, %s3
  %s6 = scalar_select 0, %s5, %s3
  loop: start=0, step=1, limit=4
  $region2: #{transformer_forward.21} parent=0 // loop_pre_header
    _
  $region3: #{transformer_forward.21} parent=0 // loop_header
    %s8 = sphi 0, %s12
    %p9 = scmp.ge.s32.totalorder %s8, 4
    %s18 = sphi 0, %s20
    %s21 = sphi 0, %s18
    %s22 = sphi 0, %s21
    %s38 = sphi 0, %s22
    %s44 = sphi 0, %s46
    %s47 = sphi 0, %s44
    %s48 = sphi 0, %s47
    %s64 = sphi 0, %s48
    %s70 = sphi 0, %s72
    %s73 = sphi 0, %s70
    %s74 = sphi 0, %s73
    %s90 = sphi 0, %s74
  $region4: #{transformer_forward.21} parent=0 // loop_header_branch
    %11 = sbr.rel (%p9) target = $region8
  $region5: #{transformer_forward.21} parent=0 // loop_body
    %s13 = ssub.s32 %s8, 1
    %s14 = ssub.s32 %s8, 2
    %s15 = sadd.s32 %s8, 1
    %s16 = ssub.s32 %s8, %s15
    %p17 = scmp.eq.s32.totalorder %s16, 0
    %s19 = sadd.s32 %s18, 1
    %s20 = scalar_select %p17, %s18, %s19
    %p23 = pneg %p17
    %p24 = scmp.eq.s32.totalorder %s8, 1
    %p25 = por %p23, %p24
    %p26 = scmp.ne.s32.totalorder %s18, %s21
    %p27 = scmp.eq.s32.totalorder %s8, 0
    %p28 = por %p26, %p27
    %p29 = scmp.ne.s32.totalorder %s18, %s21
    %p30 = scmp.eq.s32.totalorder %s13, 1
    %p31 = por %p29, %p30
    %p32 = scmp.ne.s32.totalorder %s21, %s22
    %p33 = scmp.eq.s32.totalorder %s13, 0
    %p34 = por %p32, %p33
    %p35 = scmp.ne.s32.totalorder %s21, %s22
    %p36 = scmp.eq.s32.totalorder %s14, 1
    %p37 = por %p35, %p36
    %p39 = scmp.ne.s32.totalorder %s22, %s38
    %p40 = scmp.eq.s32.totalorder %s14, 0
    %p41 = por %p39, %p40
    %s42 = ssub.s32 %s8, %s15
    %p43 = scmp.eq.s32.totalorder %s42, 0
    %s45 = sadd.s32 %s44, 1
    %s46 = scalar_select %p43, %s44, %s45
    %p49 = pneg %p43
    %p50 = scmp.eq.s32.totalorder %s8, 1
    %p51 = por %p49, %p50
    %p52 = scmp.ne.s32.totalorder %s44, %s47
    %p53 = scmp.eq.s32.totalorder %s8, 0
    %p54 = por %p52, %p53
    %p55 = scmp.ne.s32.totalorder %s44, %s47
    %p56 = scmp.eq.s32.totalorder %s13, 1
    %p57 = por %p55, %p56
    %p58 = scmp.ne.s32.totalorder %s47, %s48
    %p59 = scmp.eq.s32.totalorder %s13, 0
    %p60 = por %p58, %p59
    %p61 = scmp.ne.s32.totalorder %s47, %s48
    %p62 = scmp.eq.s32.totalorder %s14, 1
    %p63 = por %p61, %p62
    %p65 = scmp.ne.s32.totalorder %s48, %s64
    %p66 = scmp.eq.s32.totalorder %s14, 0
    %p67 = por %p65, %p66
    %s68 = ssub.s32 %s8, %s15
    %p69 = scmp.eq.s32.totalorder %s68, 0
    %s71 = sadd.s32 %s70, 1
    %s72 = scalar_select %p69, %s70, %s71
    %p75 = pneg %p69
    %p76 = scmp.eq.s32.totalorder %s8, 1
    %p77 = por %p75, %p76
    %p78 = scmp.ne.s32.totalorder %s70, %s73
    %p79 = scmp.eq.s32.totalorder %s8, 0
    %p80 = por %p78, %p79
    %p81 = scmp.ne.s32.totalorder %s70, %s73
    %p82 = scmp.eq.s32.totalorder %s13, 1
    %p83 = por %p81, %p82
    %p84 = scmp.ne.s32.totalorder %s73, %s74
    %p85 = scmp.eq.s32.totalorder %s13, 0
    %p86 = por %p84, %p85
    %p87 = scmp.ne.s32.totalorder %s73, %s74
    %p88 = scmp.eq.s32.totalorder %s14, 1
    %p89 = por %p87, %p88
    %p91 = scmp.ne.s32.totalorder %s74, %s90
    %p92 = scmp.eq.s32.totalorder %s14, 0
    %p93 = por %p91, %p92
    %p94 = scmp.le.s32.totalorder 1, %s8
    %p95 = scmp.lt.s32.totalorder %s8, 3
    %p96 = pnand %p94, %p95
    %p97 = pneg %p96
    // Predicated region
    $region9: #{transformer_forward.21} parent=5 // pred_check
      _
    $region10: #{transformer_forward.21} parent=5 // pred_check_branch
      %99 = sbr.rel (%p96) target = $region12
    $region11: #{transformer_forward.21} parent=5 // pred_region
      %s100 = ssub.s32 %s8, 1
    $region12: #{transformer_forward.21} parent=5 // pred_fallthru
      _
    %p101 = scmp.lt.s32.totalorder %s8, 2
    // Predicated region
    $region13: #{transformer_forward.21} parent=5 // pred_check
      %p102 = pneg %p101
    $region14: #{transformer_forward.21} parent=5 // pred_check_branch
      %104 = sbr.rel (%p102) target = $region16
    $region15: #{transformer_forward.21} parent=5 // pred_region
      // Predicated region
      $region17: #{transformer_forward.21} parent=15 // pred_check
        %p105 = pneg %p28
      $region18: #{transformer_forward.21} parent=15 // pred_check_branch
        %107 = sbr.rel (%p105) target = $region20
      $region19: #{transformer_forward.21} parent=15 // pred_region
        %p108 = scmp.lt.s32.totalorder %s8, 1
        %s109 = scalar_select %p108, %s8, 1
        %s110 = smul.addr %s109, 8
        %s111 = scalar_lea.vmem %s0, %s110
      $region20: #{transformer_forward.21} parent=15 // pred_fallthru
        _
      // Predicated region
      $region21: #{transformer_forward.21} parent=15 // pred_check
        %p112 = pneg %p54
      $region22: #{transformer_forward.21} parent=15 // pred_check_branch
        %114 = sbr.rel (%p112) target = $region24
      $region23: #{transformer_forward.21} parent=15 // pred_region
        %p115 = scmp.lt.s32.totalorder %s8, 1
        %s116 = scalar_select %p115, %s8, 1
        %s117 = smul.addr %s116, 8
        %s118 = scalar_lea.vmem %s1, %s117
      $region24: #{transformer_forward.21} parent=15 // pred_fallthru
        _
    $region16: #{transformer_forward.21} parent=5 // pred_fallthru
      _
    %p119 = scmp.le.s32.totalorder 1, %s8
    %p120 = scmp.lt.s32.totalorder %s8, 3
    %p121 = pnand %p119, %p120
    %p122 = pneg %p121
    // Predicated region
    $region25: #{transformer_forward.21} parent=5 // pred_check
      _
    $region26: #{transformer_forward.21} parent=5 // pred_check_branch
      %124 = sbr.rel (%p121) target = $region28
    $region27: #{transformer_forward.21} parent=5 // pred_region
      %s125 = ssub.s32 %s8, 1
      %p126 = scmp.lt.s32.totalorder %s13, 1
      %s127 = scalar_select %p126, %s13, 1
      %s128 = smul.addr %s127, 8
      %s129 = scalar_lea.vmem %s0, %s128
      %p130 = pneg %p34
      %p131 = pneg %p31
      %p132 = scmp.lt.s32.totalorder %s13, 1
      %s133 = scalar_select %p132, %s13, 1
      %s134 = smul.addr %s133, 8
      %s135 = scalar_lea.vmem %s1, %s134
      %p136 = pneg %p60
      %p137 = pneg %p57
      %p138 = pneg %p86
      %p139 = pneg %p83
      %p140 = scmp.lt.s32.totalorder %s13, 1
      %s141 = scalar_select %p140, %s13, 1
      %s142 = smul.addr %s141, 8
      %s143 = scalar_lea.vmem %s2, %s142
      %p144 = scmp.lt.s32.totalorder %s13, 1
      %s145 = scalar_select %p144, %s13, 1
      %s146 = smul.addr %s145, 8
      %s147 = scalar_lea.vmem %s0, %s146
      %p148 = scmp.lt.s32.totalorder %s13, 1
      %s149 = scalar_select %p148, %s13, 1
      %s150 = smul.addr %s149, 8
      %s151 = scalar_lea.vmem %s1, %s150
      %p152 = scmp.lt.s32.totalorder %s13, 1
      %s153 = scalar_select %p152, %s13, 1
      %s154 = smul.addr %s153, 8
      %s155 = scalar_lea.vmem %s2, %s154
      %v157 = vld [vmem:[%s147] sm:$0xff]
      %v158 = vld [vmem:[%s151] sm:$0xff]
      %v159 = vpack.c.bf16 %v157, %v157
      %v160 = vpack.c.bf16 %v158, %v158
      %vm161 = vcmask 64512
      %v163 = vsel %vm161, %v159, 0
      %v166 = vsel %vm161, %v160, 0
      %168 = vmatprep.subr.bf16.mxu0 0
      %169 = vmatpush1.bf16.xpose.msra.mxu0 %v166
      %170 = vmatprep.subr.bf16.mxu0 0
      %171 = vmatpush1.bf16.xpose.msra.mxu0 0
      %172 = vmatprep.subr.bf16.mxu0 0
      %173 = vmatpush1.bf16.xpose.msra.mxu0 0
      %174 = vmatprep.subr.bf16.mxu0 0
      %175 = vmatpush1.bf16.xpose.msra.mxu0 0
      %176 = vmatprep.subr.bf16.mxu0 0
      %177 = vmatpush1.bf16.xpose.msra.mxu0 0
      %178 = vmatprep.subr.bf16.mxu0 0
      %179 = vmatpush1.bf16.xpose.msra.mxu0 0
      %180 = vmatprep.subr.bf16.mxu0 0
      %181 = vmatpush1.bf16.xpose.msra.mxu0 0
      %182 = vmatprep.subr.bf16.mxu0 0
      %183 = vmatpush1.bf16.xpose.msra.mxu0 0
      %184 = vmatprep.subr.bf16.mxu0 0
      %185 = vmatpush1.bf16.xpose.msra.mxu0 0
      %186 = vmatprep.subr.bf16.mxu0 0
      %187 = vmatpush1.bf16.xpose.msra.mxu0 0
      %188 = vmatprep.subr.bf16.mxu0 0
      %189 = vmatpush1.bf16.xpose.msra.mxu0 0
      %190 = vmatprep.subr.bf16.mxu0 0
      %191 = vmatpush1.bf16.xpose.msra.mxu0 0
      %192 = vmatprep.subr.bf16.mxu0 0
      %193 = vmatpush1.bf16.xpose.msra.mxu0 0
      %194 = vmatprep.subr.bf16.mxu0 0
      %195 = vmatpush1.bf16.xpose.msra.mxu0 0
      %196 = vmatprep.subr.bf16.mxu0 0
      %197 = vmatpush1.bf16.xpose.msra.mxu0 0
      %198 = vmatprep.subr.bf16.mxu0 0
      %199 = vmatpush1.bf16.xpose.msra.mxu0 0
      %200 = vmatprep.mubr.bf16.mxu0 0
      %201 = vmatmul.mubr.bf16.gmra.mrb[0].mxu0 %v163
      %v202 = vpop.f32.mrb[0].mxu0
      %v203 = vadd.f32 0.0, %v202
      %v204 = vpop.f32.mrb[0].mxu0
      %v205 = vpop.f32.mrb[0].mxu0
      %v206 = vpop.f32.mrb[0].mxu0
      %207 = vdwg.mxu0
      %v208 = vmul.f32 %v203, 0.35355338
      %v209 = vsel %vm161, %v208, -inf
      %210 = vmax.xlane.f32.xlu0 %v209
      %v211 = vpop.xlane.xlu0 %210
      %v212 = vsub.f32 %v208, %v211
      %v213 = vmul.f32 %v212, 1.442695
      %v214 = vpow.pop %v213
      %v215 = vsel %vm161, %v214, 0.0
      %216 = vadd.xlane.f32.xlu0 %v215
      %v217 = vpop.xlane.xlu0 %216
      %v218 = vrcp.pop %v217
      %v219 = vmul.f32 %v214, %v218
      %v220 = vpack.c.bf16 %v219, %v219
      %222 = vrot.lane.b32.xlu0 %v160, 96
      %v223 = vpop.permute.xlu0 %222
      %v225 = vsel %vm161, %v220, 0
      %vm227 = vcmask 1043456
      %v229 = vsel %vm227, %v223, 0
      %231 = vmatprep.subr.bf16.mxu0 0
      %232 = vmatpush1.bf16.msra.mxu0 %v229
      %233 = vmatprep.subr.bf16.mxu0 0
      %234 = vmatpush1.bf16.msra.mxu0 0
      %235 = vmatprep.subr.bf16.mxu0 0
      %236 = vmatpush1.bf16.msra.mxu0 0
      %237 = vmatprep.subr.bf16.mxu0 0
      %238 = vmatpush1.bf16.msra.mxu0 0
      %239 = vmatprep.subr.bf16.mxu0 0
      %240 = vmatpush1.bf16.msra.mxu0 0
      %241 = vmatprep.subr.bf16.mxu0 0
      %242 = vmatpush1.bf16.msra.mxu0 0
      %243 = vmatprep.subr.bf16.mxu0 0
      %244 = vmatpush1.bf16.msra.mxu0 0
      %245 = vmatprep.subr.bf16.mxu0 0
      %246 = vmatpush1.bf16.msra.mxu0 0
      %247 = vmatprep.subr.bf16.mxu0 0
      %248 = vmatpush1.bf16.msra.mxu0 0
      %249 = vmatprep.subr.bf16.mxu0 0
      %250 = vmatpush1.bf16.msra.mxu0 0
      %251 = vmatprep.subr.bf16.mxu0 0
      %252 = vmatpush1.bf16.msra.mxu0 0
      %253 = vmatprep.subr.bf16.mxu0 0
      %254 = vmatpush1.bf16.msra.mxu0 0
      %255 = vmatprep.subr.bf16.mxu0 0
      %256 = vmatpush1.bf16.msra.mxu0 0
      %257 = vmatprep.subr.bf16.mxu0 0
      %258 = vmatpush1.bf16.msra.mxu0 0
      %259 = vmatprep.subr.bf16.mxu0 0
      %260 = vmatpush1.bf16.msra.mxu0 0
      %261 = vmatprep.subr.bf16.mxu0 0
      %262 = vmatpush1.bf16.msra.mxu0 0
      %263 = vmatprep.mubr.bf16.mxu0 0
      %264 = vmatmul.mubr.bf16.gmra.mrb[0].mxu0 %v225
      %v265 = vpop.f32.mrb[0].mxu0
      %v266 = vadd.f32 0.0, %v265
      %v267 = vpop.f32.mrb[0].mxu0
      %v268 = vpop.f32.mrb[0].mxu0
      %v269 = vpop.f32.mrb[0].mxu0
      %270 = vdwg.mxu0
      %272 = vrot.lane.b32.xlu0 %v159, 120
      %v273 = vpop.permute.xlu0 %272
      %274 = vrot.lane.b32.xlu0 %v160, 120
      %v275 = vpop.permute.xlu0 %274
      %v277 = vsel %vm161, %v273, 0
      %v280 = vsel %vm161, %v275, 0
      %282 = vmatprep.subr.bf16.mxu0 0
      %283 = vmatpush1.bf16.xpose.msra.mxu0 %v280
      %284 = vmatprep.subr.bf16.mxu0 0
      %285 = vmatpush1.bf16.xpose.msra.mxu0 0
      %286 = vmatprep.subr.bf16.mxu0 0
      %287 = vmatpush1.bf16.xpose.msra.mxu0 0
      %288 = vmatprep.subr.bf16.mxu0 0
      %289 = vmatpush1.bf16.xpose.msra.mxu0 0
      %290 = vmatprep.subr.bf16.mxu0 0
      %291 = vmatpush1.bf16.xpose.msra.mxu0 0
      %292 = vmatprep.subr.bf16.mxu0 0
      %293 = vmatpush1.bf16.xpose.msra.mxu0 0
      %294 = vmatprep.subr.bf16.mxu0 0
      %295 = vmatpush1.bf16.xpose.msra.mxu0 0
      %296 = vmatprep.subr.bf16.mxu0 0
      %297 = vmatpush1.bf16.xpose.msra.mxu0 0
      %298 = vmatprep.subr.bf16.mxu0 0
      %299 = vmatpush1.bf16.xpose.msra.mxu0 0
      %300 = vmatprep.subr.bf16.mxu0 0
      %301 = vmatpush1.bf16.xpose.msra.mxu0 0
      %302 = vmatprep.subr.bf16.mxu0 0
      %303 = vmatpush1.bf16.xpose.msra.mxu0 0
      %304 = vmatprep.subr.bf16.mxu0 0
      %305 = vmatpush1.bf16.xpose.msra.mxu0 0
      %306 = vmatprep.subr.bf16.mxu0 0
      %307 = vmatpush1.bf16.xpose.msra.mxu0 0
      %308 = vmatprep.subr.bf16.mxu0 0
      %309 = vmatpush1.bf16.xpose.msra.mxu0 0
      %310 = vmatprep.subr.bf16.mxu0 0
      %311 = vmatpush1.bf16.xpose.msra.mxu0 0
      %312 = vmatprep.subr.bf16.mxu0 0
      %313 = vmatpush1.bf16.xpose.msra.mxu0 0
      %314 = vmatprep.mubr.bf16.mxu0 0
      %315 = vmatmul.mubr.bf16.gmra.mrb[0].mxu0 %v277
      %v316 = vpop.f32.mrb[0].mxu0
      %v317 = vadd.f32 0.0, %v316
      %v318 = vpop.f32.mrb[0].mxu0
      %v319 = vpop.f32.mrb[0].mxu0
      %v320 = vpop.f32.mrb[0].mxu0
      %321 = vdwg.mxu0
      %v322 = vmul.f32 %v317, 0.35355338
      %v323 = vsel %vm161, %v322, -inf
      %324 = vmax.xlane.f32.xlu0 %v323
      %v325 = vpop.xlane.xlu0 %324
      %v326 = vsub.f32 %v322, %v325
      %v327 = vmul.f32 %v326, 1.442695
      %v328 = vpow.pop %v327
      %v329 = vsel %vm161, %v328, 0.0
      %330 = vadd.xlane.f32.xlu0 %v329
      %v331 = vpop.xlane.xlu0 %330
      %v332 = vrcp.pop %v331
      %v333 = vmul.f32 %v328, %v332
      %v334 = vpack.c.bf16 %v333, %v333
      %335 = vrot.lane.b32.xlu0 %v160, 88
      %v336 = vpop.permute.xlu0 %335
      %v338 = vsel %vm161, %v334, 0
      %v341 = vsel %vm227, %v336, 0
      %343 = vmatprep.subr.bf16.mxu0 0
      %344 = vmatpush1.bf16.msra.mxu0 %v341
      %345 = vmatprep.subr.bf16.mxu0 0
      %346 = vmatpush1.bf16.msra.mxu0 0
      %347 = vmatprep.subr.bf16.mxu0 0
      %348 = vmatpush1.bf16.msra.mxu0 0
      %349 = vmatprep.subr.bf16.mxu0 0
      %350 = vmatpush1.bf16.msra.mxu0 0
      %351 = vmatprep.subr.bf16.mxu0 0
      %352 = vmatpush1.bf16.msra.mxu0 0
      %353 = vmatprep.subr.bf16.mxu0 0
      %354 = vmatpush1.bf16.msra.mxu0 0
      %355 = vmatprep.subr.bf16.mxu0 0
      %356 = vmatpush1.bf16.msra.mxu0 0
      %357 = vmatprep.subr.bf16.mxu0 0
      %358 = vmatpush1.bf16.msra.mxu0 0
      %359 = vmatprep.subr.bf16.mxu0 0
      %360 = vmatpush1.bf16.msra.mxu0 0
      %361 = vmatprep.subr.bf16.mxu0 0
      %362 = vmatpush1.bf16.msra.mxu0 0
      %363 = vmatprep.subr.bf16.mxu0 0
      %364 = vmatpush1.bf16.msra.mxu0 0
      %365 = vmatprep.subr.bf16.mxu0 0
      %366 = vmatpush1.bf16.msra.mxu0 0
      %367 = vmatprep.subr.bf16.mxu0 0
      %368 = vmatpush1.bf16.msra.mxu0 0
      %369 = vmatprep.subr.bf16.mxu0 0
      %370 = vmatpush1.bf16.msra.mxu0 0
      %371 = vmatprep.subr.bf16.mxu0 0
      %372 = vmatpush1.bf16.msra.mxu0 0
      %373 = vmatprep.subr.bf16.mxu0 0
      %374 = vmatpush1.bf16.msra.mxu0 0
      %375 = vmatprep.mubr.bf16.mxu0 0
      %376 = vmatmul.mubr.bf16.gmra.mrb[0].mxu0 %v338
      %v377 = vpop.f32.mrb[0].mxu0
      %v378 = vadd.f32 0.0, %v377
      %v379 = vpop.f32.mrb[0].mxu0
      %v380 = vpop.f32.mrb[0].mxu0
      %v381 = vpop.f32.mrb[0].mxu0
      %382 = vdwg.mxu0
      %383 = vrot.lane.b32.xlu0 %v159, 112
      %v384 = vpop.permute.xlu0 %383
      %385 = vrot.lane.b32.xlu0 %v160, 112
      %v386 = vpop.permute.xlu0 %385
      %v388 = vsel %vm161, %v384, 0
      %v391 = vsel %vm161, %v386, 0
      %393 = vmatprep.subr.bf16.mxu0 0
      %394 = vmatpush1.bf16.xpose.msra.mxu0 %v391
      %395 = vmatprep.subr.bf16.mxu0 0
      %396 = vmatpush1.bf16.xpose.msra.mxu0 0
      %397 = vmatprep.subr.bf16.mxu0 0
      %398 = vmatpush1.bf16.xpose.msra.mxu0 0
      %399 = vmatprep.subr.bf16.mxu0 0
      %400 = vmatpush1.bf16.xpose.msra.mxu0 0
      %401 = vmatprep.subr.bf16.mxu0 0
      %402 = vmatpush1.bf16.xpose.msra.mxu0 0
      %403 = vmatprep.subr.bf16.mxu0 0
      %404 = vmatpush1.bf16.xpose.msra.mxu0 0
      %405 = vmatprep.subr.bf16.mxu0 0
      %406 = vmatpush1.bf16.xpose.msra.mxu0 0
      %407 = vmatprep.subr.bf16.mxu0 0
      %408 = vmatpush1.bf16.xpose.msra.mxu0 0
      %409 = vmatprep.subr.bf16.mxu0 0
      %410 = vmatpush1.bf16.xpose.msra.mxu0 0
      %411 = vmatprep.subr.bf16.mxu0 0
      %412 = vmatpush1.bf16.xpose.msra.mxu0 0
      %413 = vmatprep.subr.bf16.mxu0 0
      %414 = vmatpush1.bf16.xpose.msra.mxu0 0
      %415 = vmatprep.subr.bf16.mxu0 0
      %416 = vmatpush1.bf16.xpose.msra.mxu0 0
      %417 = vmatprep.subr.bf16.mxu0 0
      %418 = vmatpush1.bf16.xpose.msra.mxu0 0
      %419 = vmatprep.subr.bf16.mxu0 0
      %420 = vmatpush1.bf16.xpose.msra.mxu0 0
      %421 = vmatprep.subr.bf16.mxu0 0
      %422 = vmatpush1.bf16.xpose.msra.mxu0 0
      %423 = vmatprep.subr.bf16.mxu0 0
      %424 = vmatpush1.bf16.xpose.msra.mxu0 0
      %425 = vmatprep.mubr.bf16.mxu0 0
      %426 = vmatmul.mubr.bf16.gmra.mrb[0].mxu0 %v388
      %v427 = vpop.f32.mrb[0].mxu0
      %v428 = vadd.f32 0.0, %v427
      %v429 = vpop.f32.mrb[0].mxu0
      %v430 = vpop.f32.mrb[0].mxu0
      %v431 = vpop.f32.mrb[0].mxu0
      %432 = vdwg.mxu0
      %v433 = vmul.f32 %v428, 0.35355338
      %v434 = vsel %vm161, %v433, -inf
      %435 = vmax.xlane.f32.xlu0 %v434
      %v436 = vpop.xlane.xlu0 %435
      %v437 = vsub.f32 %v433, %v436
      %v438 = vmul.f32 %v437, 1.442695
      %v439 = vpow.pop %v438
      %v440 = vsel %vm161, %v439, 0.0
      %441 = vadd.xlane.f32.xlu0 %v440
      %v442 = vpop.xlane.xlu0 %441
      %v443 = vrcp.pop %v442
      %v444 = vmul.f32 %v439, %v443
      %v445 = vpack.c.bf16 %v444, %v444
      %446 = vrot.lane.b32.xlu0 %v160, 80
      %v447 = vpop.permute.xlu0 %446
      %v449 = vsel %vm161, %v445, 0
      %v452 = vsel %vm227, %v447, 0
      %454 = vmatprep.subr.bf16.mxu0 0
      %455 = vmatpush1.bf16.msra.mxu0 %v452
      %456 = vmatprep.subr.bf16.mxu0 0
      %457 = vmatpush1.bf16.msra.mxu0 0
      %458 = vmatprep.subr.bf16.mxu0 0
      %459 = vmatpush1.bf16.msra.mxu0 0
      %460 = vmatprep.subr.bf16.mxu0 0
      %461 = vmatpush1.bf16.msra.mxu0 0
      %462 = vmatprep.subr.bf16.mxu0 0
      %463 = vmatpush1.bf16.msra.mxu0 0
      %464 = vmatprep.subr.bf16.mxu0 0
      %465 = vmatpush1.bf16.msra.mxu0 0
      %466 = vmatprep.subr.bf16.mxu0 0
      %467 = vmatpush1.bf16.msra.mxu0 0
      %468 = vmatprep.subr.bf16.mxu0 0
      %469 = vmatpush1.bf16.msra.mxu0 0
      %470 = vmatprep.subr.bf16.mxu0 0
      %471 = vmatpush1.bf16.msra.mxu0 0
      %472 = vmatprep.subr.bf16.mxu0 0
      %473 = vmatpush1.bf16.msra.mxu0 0
      %474 = vmatprep.subr.bf16.mxu0 0
      %475 = vmatpush1.bf16.msra.mxu0 0
      %476 = vmatprep.subr.bf16.mxu0 0
      %477 = vmatpush1.bf16.msra.mxu0 0
      %478 = vmatprep.subr.bf16.mxu0 0
      %479 = vmatpush1.bf16.msra.mxu0 0
      %480 = vmatprep.subr.bf16.mxu0 0
      %481 = vmatpush1.bf16.msra.mxu0 0
      %482 = vmatprep.subr.bf16.mxu0 0
      %483 = vmatpush1.bf16.msra.mxu0 0
      %484 = vmatprep.subr.bf16.mxu0 0
      %485 = vmatpush1.bf16.msra.mxu0 0
      %486 = vmatprep.mubr.bf16.mxu0 0
      %487 = vmatmul.mubr.bf16.gmra.mrb[0].mxu0 %v449
      %v488 = vpop.f32.mrb[0].mxu0
      %v489 = vadd.f32 0.0, %v488
      %v490 = vpop.f32.mrb[0].mxu0
      %v491 = vpop.f32.mrb[0].mxu0
      %v492 = vpop.f32.mrb[0].mxu0
      %493 = vdwg.mxu0
      %494 = vrot.lane.b32.xlu0 %v159, 104
      %v495 = vpop.permute.xlu0 %494
      %496 = vrot.lane.b32.xlu0 %v160, 104
      %v497 = vpop.permute.xlu0 %496
      %v499 = vsel %vm161, %v495, 0
      %v502 = vsel %vm161, %v497, 0
      %504 = vmatprep.subr.bf16.mxu0 0
      %505 = vmatpush1.bf16.xpose.msra.mxu0 %v502
      %506 = vmatprep.subr.bf16.mxu0 0
      %507 = vmatpush1.bf16.xpose.msra.mxu0 0
      %508 = vmatprep.subr.bf16.mxu0 0
      %509 = vmatpush1.bf16.xpose.msra.mxu0 0
      %510 = vmatprep.subr.bf16.mxu0 0
      %511 = vmatpush1.bf16.xpose.msra.mxu0 0
      %512 = vmatprep.subr.bf16.mxu0 0
      %513 = vmatpush1.bf16.xpose.msra.mxu0 0
      %514 = vmatprep.subr.bf16.mxu0 0
      %515 = vmatpush1.bf16.xpose.msra.mxu0 0
      %516 = vmatprep.subr.bf16.mxu0 0
      %517 = vmatpush1.bf16.xpose.msra.mxu0 0
      %518 = vmatprep.subr.bf16.mxu0 0
      %519 = vmatpush1.bf16.xpose.msra.mxu0 0
      %520 = vmatprep.subr.bf16.mxu0 0
      %521 = vmatpush1.bf16.xpose.msra.mxu0 0
      %522 = vmatprep.subr.bf16.mxu0 0
      %523 = vmatpush1.bf16.xpose.msra.mxu0 0
      %524 = vmatprep.subr.bf16.mxu0 0
      %525 = vmatpush1.bf16.xpose.msra.mxu0 0
      %526 = vmatprep.subr.bf16.mxu0 0
      %527 = vmatpush1.bf16.xpose.msra.mxu0 0
      %528 = vmatprep.subr.bf16.mxu0 0
      %529 = vmatpush1.bf16.xpose.msra.mxu0 0
      %530 = vmatprep.subr.bf16.mxu0 0
      %531 = vmatpush1.bf16.xpose.msra.mxu0 0
      %532 = vmatprep.subr.bf16.mxu0 0
      %533 = vmatpush1.bf16.xpose.msra.mxu0 0
      %534 = vmatprep.subr.bf16.mxu0 0
      %535 = vmatpush1.bf16.xpose.msra.mxu0 0
      %536 = vmatprep.mubr.bf16.mxu0 0
      %537 = vmatmul.mubr.bf16.gmra.mrb[0].mxu0 %v499
      %v538 = vpop.f32.mrb[0].mxu0
      %v539 = vadd.f32 0.0, %v538
      %v540 = vpop.f32.mrb[0].mxu0
      %v541 = vpop.f32.mrb[0].mxu0
      %v542 = vpop.f32.mrb[0].mxu0
      %543 = vdwg.mxu0
      %v544 = vmul.f32 %v539, 0.35355338
      %v545 = vsel %vm161, %v544, -inf
      %546 = vmax.xlane.f32.xlu0 %v545
      %v547 = vpop.xlane.xlu0 %546
      %v548 = vsub.f32 %v544, %v547
      %v549 = vmul.f32 %v548, 1.442695
      %v550 = vpow.pop %v549
      %v551 = vsel %vm161, %v550, 0.0
      %552 = vadd.xlane.f32.xlu0 %v551
      %v553 = vpop.xlane.xlu0 %552
      %v554 = vrcp.pop %v553
      %v555 = vmul.f32 %v550, %v554
      %v556 = vpack.c.bf16 %v555, %v555
      %557 = vrot.lane.b32.xlu0 %v160, 72
      %v558 = vpop.permute.xlu0 %557
      %v560 = vsel %vm161, %v556, 0
      %v563 = vsel %vm227, %v558, 0
      %565 = vmatprep.subr.bf16.mxu0 0
      %566 = vmatpush1.bf16.msra.mxu0 %v563
      %567 = vmatprep.subr.bf16.mxu0 0
      %568 = vmatpush1.bf16.msra.mxu0 0
      %569 = vmatprep.subr.bf16.mxu0 0
      %570 = vmatpush1.bf16.msra.mxu0 0
      %571 = vmatprep.subr.bf16.mxu0 0
      %572 = vmatpush1.bf16.msra.mxu0 0
      %573 = vmatprep.subr.bf16.mxu0 0
      %574 = vmatpush1.bf16.msra.mxu0 0
      %575 = vmatprep.subr.bf16.mxu0 0
      %576 = vmatpush1.bf16.msra.mxu0 0
      %577 = vmatprep.subr.bf16.mxu0 0
      %578 = vmatpush1.bf16.msra.mxu0 0
      %579 = vmatprep.subr.bf16.mxu0 0
      %580 = vmatpush1.bf16.msra.mxu0 0
      %581 = vmatprep.subr.bf16.mxu0 0
      %582 = vmatpush1.bf16.msra.mxu0 0
      %583 = vmatprep.subr.bf16.mxu0 0
      %584 = vmatpush1.bf16.msra.mxu0 0
      %585 = vmatprep.subr.bf16.mxu0 0
      %586 = vmatpush1.bf16.msra.mxu0 0
      %587 = vmatprep.subr.bf16.mxu0 0
      %588 = vmatpush1.bf16.msra.mxu0 0
      %589 = vmatprep.subr.bf16.mxu0 0
      %590 = vmatpush1.bf16.msra.mxu0 0
      %591 = vmatprep.subr.bf16.mxu0 0
      %592 = vmatpush1.bf16.msra.mxu0 0
      %593 = vmatprep.subr.bf16.mxu0 0
      %594 = vmatpush1.bf16.msra.mxu0 0
      %595 = vmatprep.subr.bf16.mxu0 0
      %596 = vmatpush1.bf16.msra.mxu0 0
      %597 = vmatprep.mubr.bf16.mxu0 0
      %598 = vmatmul.mubr.bf16.gmra.mrb[0].mxu0 %v560
      %v599 = vpop.f32.mrb[0].mxu0
      %v600 = vadd.f32 0.0, %v599
      %v601 = vpop.f32.mrb[0].mxu0
      %v602 = vpop.f32.mrb[0].mxu0
      %v603 = vpop.f32.mrb[0].mxu0
      %604 = vdwg.mxu0
      %606 = vrot.lane.b32.xlu0 %v378, 8
      %v607 = vpop.permute.xlu0 %606
      %610 = vrot.lane.b32.xlu0 %v489, 16
      %v611 = vpop.permute.xlu0 %610
      %614 = vrot.lane.b32.xlu0 %v600, 24
      %v615 = vpop.permute.xlu0 %614
      %v617 = vsel %vm161, %v266, %v607
      %vm618 = vcmask 130048
      %v619 = vsel %vm618, %v617, %v611
      %vm620 = vcmask 195584
      %v621 = vsel %vm620, %v619, %v615
      %vm622 = vcmask 261120
      %623 = vst.msk [vmem:[%s155] sm:$0xff] %vm622, %v621
      %p624 = scmp.lt.s32.totalorder %s13, 1
      %s625 = scalar_select %p624, %s13, 1
      %s626 = smul.addr %s625, 8
      %s627 = scalar_lea.vmem %s2, %s626
      // Predicated region
      $region29: #{transformer_forward.21} parent=27 // pred_check
        %p628 = pneg %p83
      $region30: #{transformer_forward.21} parent=27 // pred_check_branch
        %630 = sbr.rel (%p628) target = $region32
      $region31: #{transformer_forward.21} parent=27 // pred_region
        _
      $region32: #{transformer_forward.21} parent=27 // pred_fallthru
        _
    $region28: #{transformer_forward.21} parent=5 // pred_fallthru
      _
    %p631 = scmp.le.s32.totalorder 2, %s8
    // Predicated region
    $region33: #{transformer_forward.21} parent=5 // pred_check
      %p632 = pneg %p631
    $region34: #{transformer_forward.21} parent=5 // pred_check_branch
      %634 = sbr.rel (%p632) target = $region36
    $region35: #{transformer_forward.21} parent=5 // pred_region
      %s635 = ssub.s32 %s8, 2
      // Predicated region
      $region37: #{transformer_forward.21} parent=35 // pred_check
        %p636 = pneg %p89
      $region38: #{transformer_forward.21} parent=35 // pred_check_branch
        %638 = sbr.rel (%p636) target = $region40
      $region39: #{transformer_forward.21} parent=35 // pred_region
        %p639 = scmp.lt.s32.totalorder %s14, 1
        %s640 = scalar_select %p639, %s14, 1
        %s641 = smul.addr %s640, 8
        %s642 = scalar_lea.vmem %s2, %s641
      $region40: #{transformer_forward.21} parent=35 // pred_fallthru
        _
    $region36: #{transformer_forward.21} parent=5 // pred_fallthru
      _
  $region6: #{transformer_forward.21} parent=0 // loop_footer
    %s12 = sadd.s32 1, %s8
  $region7: #{transformer_forward.21} parent=0 // loop_footer_branch
    %7 = sbr.rel target = $region3
  $region8: #{transformer_forward.21} parent=0 // loop_exit
    _

// kernel: transformer_forward.25
$region0: #{transformer_forward.25}
  #allocation0 [shape = 'u32[]', space=smem, size = 0x4, offset = 0x4, fixed_abs, tag = 'smem constant byte address 0x4 - core index']
  #allocation1 [shape = 'u32[144,128]{1,0:T(1,128)}', space=vmem, size = 0x12000, scoped, tag = 'internal scratch']
  #allocation2 [shape = 'f32[16,32]{1,0:T(8,128)}', space=vmem, size = 0x2000, scoped, tag = 'scratch operand']
  %s0 = inlined_call_operand.vmem [shape: f32[16,128], index: 0, kind: input, shape index: {}]
  %s1 = inlined_call_operand.vmem [shape: bf16[128,32], index: 1, kind: input, shape index: {}]
  %s2 = inlined_call_operand.vmem [shape: f32[1,32], index: 2, kind: input, shape index: {}]
  %s3 = inlined_call_operand.vmem [shape: f32[16,32], index: 3, kind: output, shape index: {}]
  %s4 = sld [smem:[#allocation0]]
  $region30: #{transformer_forward.25} parent=0
    _
  %s6 = ssub.s32 1, %s4
  %s7 = scalar_select 0, %s6, %s4
  // Predicated region
  $region2: #{transformer_forward.25} parent=0 // pred_check
    _
  $region3: #{transformer_forward.25} parent=0 // pred_check_branch
    %9 = sbr.rel (0) target = $region5
  $region4: #{transformer_forward.25} parent=0 // pred_region
    _
  $region5: #{transformer_forward.25} parent=0 // pred_fallthru
    _
  // Predicated region
  $region6: #{transformer_forward.25} parent=0 // pred_check
    _
  $region7: #{transformer_forward.25} parent=0 // pred_check_branch
    %11 = sbr.rel (0) target = $region9
  $region8: #{transformer_forward.25} parent=0 // pred_region
    _
  $region9: #{transformer_forward.25} parent=0 // pred_fallthru
    _
  // Predicated region
  $region10: #{transformer_forward.25} parent=0 // pred_check
    _
  $region11: #{transformer_forward.25} parent=0 // pred_check_branch
    %13 = sbr.rel (0) target = $region13
  $region12: #{transformer_forward.25} parent=0 // pred_region
    _
  $region13: #{transformer_forward.25} parent=0 // pred_fallthru
    _
  %p15 = scmp.eq.s32.totalorder 0, 0
  // Predicated region
  $region14: #{transformer_forward.25} parent=0 // pred_check
    %p16 = pneg %p15
  $region15: #{transformer_forward.25} parent=0 // pred_check_branch
    %18 = sbr.rel (%p16) target = $region17
  $region16: #{transformer_forward.25} parent=0 // pred_region
    %vm19 = vcmask 261120
    %20 = vst.msk [vmem:[#allocation2] sm:$0xff] %vm19, 0.0
    %21 = vst.msk [vmem:[#allocation2 + $0x8] sm:$0xff] %vm19, 0.0
  $region17: #{transformer_forward.25} parent=0 // pred_fallthru
    _
  %v22 = vld [vmem:[#allocation2] sm:$0xff]
  %v23 = vld [vmem:[#allocation2 + $0x8] sm:$0xff]
  %v24 = vld [vmem:[%s0] sm:$0xff]
  %v25 = vld [vmem:[%s0 + $0x8] sm:$0xff]
  %v26 = vpack.c.bf16 %v25, %v24
  %v27 = vld [vmem:[%s1] sm:$0xf]
  %v28 = vld [vmem:[%s1 + $0x4] sm:$0xf]
  %v29 = vld [vmem:[%s1 + $0x8] sm:$0xf]
  %v30 = vld [vmem:[%s1 + $0xc] sm:$0xf]
  %v31 = vld [vmem:[%s1 + $0x10] sm:$0xf]
  %v32 = vld [vmem:[%s1 + $0x14] sm:$0xf]
  %v33 = vld [vmem:[%s1 + $0x18] sm:$0xf]
  %v34 = vld [vmem:[%s1 + $0x1c] sm:$0xf]
  %v35 = vld [vmem:[%s1 + $0x20] sm:$0xf]
  %v36 = vld [vmem:[%s1 + $0x24] sm:$0xf]
  %v37 = vld [vmem:[%s1 + $0x28] sm:$0xf]
  %v38 = vld [vmem:[%s1 + $0x2c] sm:$0xf]
  %v39 = vld [vmem:[%s1 + $0x30] sm:$0xf]
  %v40 = vld [vmem:[%s1 + $0x34] sm:$0xf]
  %v41 = vld [vmem:[%s1 + $0x38] sm:$0xf]
  %v42 = vld [vmem:[%s1 + $0x3c] sm:$0xf]
  %v59 = vunpack.c.l.b16 %v27
  %v60 = vunpack.c.l.b16 %v28
  %v61 = vunpack.c.l.b16 %v29
  %v62 = vunpack.c.l.b16 %v30
  %v63 = vunpack.c.l.b16 %v31
  %v64 = vunpack.c.l.b16 %v32
  %v65 = vunpack.c.l.b16 %v33
  %v66 = vunpack.c.l.b16 %v34
  %v67 = vunpack.c.l.b16 %v35
  %v68 = vunpack.c.l.b16 %v36
  %v69 = vunpack.c.l.b16 %v37
  %v70 = vunpack.c.l.b16 %v38
  %v71 = vunpack.c.l.b16 %v39
  %v72 = vunpack.c.l.b16 %v40
  %v73 = vunpack.c.l.b16 %v41
  %v74 = vunpack.c.l.b16 %v42
  %v75 = vpack.c.b16 %v60, %v59
  %v76 = vpack.c.b16 %v62, %v61
  %v77 = vpack.c.b16 %v64, %v63
  %v78 = vpack.c.b16 %v66, %v65
  %v79 = vpack.c.b16 %v68, %v67
  %v80 = vpack.c.b16 %v70, %v69
  %v81 = vpack.c.b16 %v72, %v71
  %v82 = vpack.c.b16 %v74, %v73
  %91 = vmatprep.subr.bf16.mxu0 0
  %92 = vmatpush1.bf16.msra.mxu0 %v75
  %93 = vmatprep.subr.bf16.mxu0 0
  %94 = vmatpush1.bf16.msra.mxu0 %v76
  %95 = vmatprep.subr.bf16.mxu0 0
  %96 = vmatpush1.bf16.msra.mxu0 %v77
  %97 = vmatprep.subr.bf16.mxu0 0
  %98 = vmatpush1.bf16.msra.mxu0 %v78
  %99 = vmatprep.subr.bf16.mxu0 0
  %100 = vmatpush1.bf16.msra.mxu0 %v79
  %101 = vmatprep.subr.bf16.mxu0 0
  %102 = vmatpush1.bf16.msra.mxu0 %v80
  %103 = vmatprep.subr.bf16.mxu0 0
  %104 = vmatpush1.bf16.msra.mxu0 %v81
  %105 = vmatprep.subr.bf16.mxu0 0
  %106 = vmatpush1.bf16.msra.mxu0 %v82
  %107 = vmatprep.subr.bf16.mxu0 0
  %108 = vmatpush1.bf16.msra.mxu0 0
  %109 = vmatprep.subr.bf16.mxu0 0
  %110 = vmatpush1.bf16.msra.mxu0 0
  %111 = vmatprep.subr.bf16.mxu0 0
  %112 = vmatpush1.bf16.msra.mxu0 0
  %113 = vmatprep.subr.bf16.mxu0 0
  %114 = vmatpush1.bf16.msra.mxu0 0
  %115 = vmatprep.subr.bf16.mxu0 0
  %116 = vmatpush1.bf16.msra.mxu0 0
  %117 = vmatprep.subr.bf16.mxu0 0
  %118 = vmatpush1.bf16.msra.mxu0 0
  %119 = vmatprep.subr.bf16.mxu0 0
  %120 = vmatpush1.bf16.msra.mxu0 0
  %121 = vmatprep.subr.bf16.mxu0 0
  %122 = vmatpush1.bf16.msra.mxu0 0
  %123 = vmatprep.mubr.bf16.mxu0 0
  %124 = vmatmul.mubr.bf16.gmra.mrb[0].mxu0 %v26
  %v125 = vpop.f32.mrb[0].mxu0
  %v126 = vadd.f32 0.0, %v125
  %v127 = vpop.f32.mrb[0].mxu0
  %v128 = vpop.f32.mrb[0].mxu0
  %v129 = vadd.f32 0.0, %v128
  %v130 = vpop.f32.mrb[0].mxu0
  %131 = vdwg.mxu0
  %v132 = vadd.f32 %v22, %v126
  %v133 = vadd.f32 %v23, %v129
  %vm134 = vcmask 261120
  %135 = vst.msk [vmem:[#allocation2] sm:$0xff] %vm134, %v132
  %136 = vst.msk [vmem:[#allocation2 + $0x8] sm:$0xff] %vm134, %v133
  // Predicated region
  $region18: #{transformer_forward.25} parent=0 // pred_check
    %p137 = pneg %p15
  $region19: #{transformer_forward.25} parent=0 // pred_check_branch
    %139 = sbr.rel (%p137) target = $region21
  $region20: #{transformer_forward.25} parent=0 // pred_region
    %v140 = vld [vmem:[#allocation2] sm:$0xff]
    %v141 = vld [vmem:[#allocation2 + $0x8] sm:$0xff]
    %v142 = vld [vmem:[%s2] sm:$0x1]
    %v144 = vlaneseq
    %v145 = vshrl.u32 %v144, 7
    %v146 = vsub.s32 0, %v145
    %v147 = vrot.slane %v142, %v146
    %v149 = vadd.f32 %v140, %v147
    %v150 = vadd.f32 %v141, %v147
    %151 = vst.msk [vmem:[%s3] sm:$0xff] %vm134, %v149
    %152 = vst.msk [vmem:[%s3 + $0x8] sm:$0xff] %vm134, %v150
  $region21: #{transformer_forward.25} parent=0 // pred_fallthru
    _
  // Predicated region
  $region22: #{transformer_forward.25} parent=0 // pred_check
    _
  $region23: #{transformer_forward.25} parent=0 // pred_check_branch
    %154 = sbr.rel (0) target = $region25
  $region24: #{transformer_forward.25} parent=0 // pred_region
    _
  $region25: #{transformer_forward.25} parent=0 // pred_fallthru
    _
  // Predicated region
  $region26: #{transformer_forward.25} parent=0 // pred_check
    _
  $region27: #{transformer_forward.25} parent=0 // pred_check_branch
    %156 = sbr.rel (0) target = $region29
  $region28: #{transformer_forward.25} parent=0 // pred_region
    _
  $region29: #{transformer_forward.25} parent=0 // pred_fallthru
    _

// kernel: transformer_forward.32
$region0: #{transformer_forward.32}
  #allocation0 [shape = 'u32[]', space=smem, size = 0x4, offset = 0x4, fixed_abs, tag = 'smem constant byte address 0x4 - core index']
  #allocation1 [shape = 'u32[144,128]{1,0:T(1,128)}', space=vmem, size = 0x12000, scoped, tag = 'internal scratch']
  #allocation2 [shape = 'f32[16,64]{1,0:T(8,128)}', space=vmem, size = 0x2000, scoped, tag = 'scratch operand']
  %s0 = inlined_call_operand.vmem [shape: f32[16,32], index: 0, kind: input, shape index: {}]
  %s1 = inlined_call_operand.vmem [shape: bf16[32,64], index: 1, kind: input, shape index: {}]
  %s2 = inlined_call_operand.vmem [shape: f32[1,64], index: 2, kind: input, shape index: {}]
  %s3 = inlined_call_operand.vmem [shape: f32[16,64], index: 3, kind: output, shape index: {}]
  %s4 = sld [smem:[#allocation0]]
  $region30: #{transformer_forward.32} parent=0
    _
  %s6 = ssub.s32 1, %s4
  %s7 = scalar_select 0, %s6, %s4
  // Predicated region
  $region2: #{transformer_forward.32} parent=0 // pred_check
    _
  $region3: #{transformer_forward.32} parent=0 // pred_check_branch
    %9 = sbr.rel (0) target = $region5
  $region4: #{transformer_forward.32} parent=0 // pred_region
    _
  $region5: #{transformer_forward.32} parent=0 // pred_fallthru
    _
  // Predicated region
  $region6: #{transformer_forward.32} parent=0 // pred_check
    _
  $region7: #{transformer_forward.32} parent=0 // pred_check_branch
    %11 = sbr.rel (0) target = $region9
  $region8: #{transformer_forward.32} parent=0 // pred_region
    _
  $region9: #{transformer_forward.32} parent=0 // pred_fallthru
    _
  // Predicated region
  $region10: #{transformer_forward.32} parent=0 // pred_check
    _
  $region11: #{transformer_forward.32} parent=0 // pred_check_branch
    %13 = sbr.rel (0) target = $region13
  $region12: #{transformer_forward.32} parent=0 // pred_region
    _
  $region13: #{transformer_forward.32} parent=0 // pred_fallthru
    _
  %p15 = scmp.eq.s32.totalorder 0, 0
  // Predicated region
  $region14: #{transformer_forward.32} parent=0 // pred_check
    %p16 = pneg %p15
  $region15: #{transformer_forward.32} parent=0 // pred_check_branch
    %18 = sbr.rel (%p16) target = $region17
  $region16: #{transformer_forward.32} parent=0 // pred_region
    %vm19 = vcmask 523264
    %20 = vst.msk [vmem:[#allocation2] sm:$0xff] %vm19, 0.0
    %21 = vst.msk [vmem:[#allocation2 + $0x8] sm:$0xff] %vm19, 0.0
  $region17: #{transformer_forward.32} parent=0 // pred_fallthru
    _
  %v22 = vld [vmem:[#allocation2] sm:$0xff]
  %v23 = vld [vmem:[#allocation2 + $0x8] sm:$0xff]
  %v24 = vld [vmem:[%s0] sm:$0xff]
  %v25 = vld [vmem:[%s0 + $0x8] sm:$0xff]
  %v26 = vpack.c.bf16 %v25, %v24
  %v27 = vld [vmem:[%s1] sm:$0xf]
  %v28 = vld [vmem:[%s1 + $0x4] sm:$0xf]
  %v29 = vld [vmem:[%s1 + $0x8] sm:$0xf]
  %v30 = vld [vmem:[%s1 + $0xc] sm:$0xf]
  %v35 = vunpack.c.l.b16 %v27
  %v36 = vunpack.c.l.b16 %v28
  %v37 = vunpack.c.l.b16 %v29
  %v38 = vunpack.c.l.b16 %v30
  %v39 = vpack.c.b16 %v36, %v35
  %v40 = vpack.c.b16 %v38, %v37
  %vm43 = vcmask 261120
  %v45 = vsel %vm43, %v26, 0
  %47 = vmatprep.subr.bf16.mxu0 0
  %48 = vmatpush1.bf16.msra.mxu0 %v39
  %49 = vmatprep.subr.bf16.mxu0 0
  %50 = vmatpush1.bf16.msra.mxu0 %v40
  %51 = vmatprep.subr.bf16.mxu0 0
  %52 = vmatpush1.bf16.msra.mxu0 0
  %53 = vmatprep.subr.bf16.mxu0 0
  %54 = vmatpush1.bf16.msra.mxu0 0
  %55 = vmatprep.subr.bf16.mxu0 0
  %56 = vmatpush1.bf16.msra.mxu0 0
  %57 = vmatprep.subr.bf16.mxu0 0
  %58 = vmatpush1.bf16.msra.mxu0 0
  %59 = vmatprep.subr.bf16.mxu0 0
  %60 = vmatpush1.bf16.msra.mxu0 0
  %61 = vmatprep.subr.bf16.mxu0 0
  %62 = vmatpush1.bf16.msra.mxu0 0
  %63 = vmatprep.subr.bf16.mxu0 0
  %64 = vmatpush1.bf16.msra.mxu0 0
  %65 = vmatprep.subr.bf16.mxu0 0
  %66 = vmatpush1.bf16.msra.mxu0 0
  %67 = vmatprep.subr.bf16.mxu0 0
  %68 = vmatpush1.bf16.msra.mxu0 0
  %69 = vmatprep.subr.bf16.mxu0 0
  %70 = vmatpush1.bf16.msra.mxu0 0
  %71 = vmatprep.subr.bf16.mxu0 0
  %72 = vmatpush1.bf16.msra.mxu0 0
  %73 = vmatprep.subr.bf16.mxu0 0
  %74 = vmatpush1.bf16.msra.mxu0 0
  %75 = vmatprep.subr.bf16.mxu0 0
  %76 = vmatpush1.bf16.msra.mxu0 0
  %77 = vmatprep.subr.bf16.mxu0 0
  %78 = vmatpush1.bf16.msra.mxu0 0
  %79 = vmatprep.mubr.bf16.mxu0 0
  %80 = vmatmul.mubr.bf16.gmra.mrb[0].mxu0 %v45
  %v81 = vpop.f32.mrb[0].mxu0
  %v82 = vadd.f32 0.0, %v81
  %v83 = vpop.f32.mrb[0].mxu0
  %v84 = vpop.f32.mrb[0].mxu0
  %v85 = vadd.f32 0.0, %v84
  %v86 = vpop.f32.mrb[0].mxu0
  %87 = vdwg.mxu0
  %v88 = vadd.f32 %v22, %v82
  %v89 = vadd.f32 %v23, %v85
  %vm90 = vcmask 523264
  %91 = vst.msk [vmem:[#allocation2] sm:$0xff] %vm90, %v88
  %92 = vst.msk [vmem:[#allocation2 + $0x8] sm:$0xff] %vm90, %v89
  // Predicated region
  $region18: #{transformer_forward.32} parent=0 // pred_check
    %p93 = pneg %p15
  $region19: #{transformer_forward.32} parent=0 // pred_check_branch
    %95 = sbr.rel (%p93) target = $region21
  $region20: #{transformer_forward.32} parent=0 // pred_region
    %v96 = vld [vmem:[#allocation2] sm:$0xff]
    %v97 = vld [vmem:[#allocation2 + $0x8] sm:$0xff]
    %v98 = vld [vmem:[%s2] sm:$0x1]
    %v100 = vlaneseq
    %v101 = vshrl.u32 %v100, 7
    %v102 = vsub.s32 0, %v101
    %v103 = vrot.slane %v98, %v102
    %v105 = vadd.f32 %v96, %v103
    %v106 = vadd.f32 %v97, %v103
    %107 = vst.msk [vmem:[%s3] sm:$0xff] %vm90, %v105
    %108 = vst.msk [vmem:[%s3 + $0x8] sm:$0xff] %vm90, %v106
  $region21: #{transformer_forward.32} parent=0 // pred_fallthru
    _
  // Predicated region
  $region22: #{transformer_forward.32} parent=0 // pred_check
    _
  $region23: #{transformer_forward.32} parent=0 // pred_check_branch
    %110 = sbr.rel (0) target = $region25
  $region24: #{transformer_forward.32} parent=0 // pred_region
    _
  $region25: #{transformer_forward.32} parent=0 // pred_fallthru
    _
  // Predicated region
  $region26: #{transformer_forward.32} parent=0 // pred_check
    _
  $region27: #{transformer_forward.32} parent=0 // pred_check_branch
    %112 = sbr.rel (0) target = $region29
  $region28: #{transformer_forward.32} parent=0 // pred_region
    _
  $region29: #{transformer_forward.32} parent=0 // pred_fallthru
    _

// kernel: transformer_forward.24
$region0: #{transformer_forward.24}
  #allocation0 [shape = 'u32[]', space=smem, size = 0x4, offset = 0x4, fixed_abs, tag = 'smem constant byte address 0x4 - core index']
  #allocation1 [shape = 'u32[144,128]{1,0:T(1,128)}', space=vmem, size = 0x12000, scoped, tag = 'internal scratch']
  #allocation2 [shape = 'f32[16,128]{1,0:T(8,128)}', space=vmem, size = 0x2000, scoped, tag = 'scratch operand']
  %s0 = inlined_call_operand.vmem [shape: f32[16,32], index: 0, kind: input, shape index: {}]
  %s1 = inlined_call_operand.vmem [shape: bf16[32,128], index: 1, kind: input, shape index: {}]
  %s2 = inlined_call_operand.vmem [shape: f32[1,128], index: 2, kind: input, shape index: {}]
  %s3 = inlined_call_operand.vmem [shape: f32[16,128], index: 3, kind: output, shape index: {}]
  %s4 = sld [smem:[#allocation0]]
  $region30: #{transformer_forward.24} parent=0
    _
  %s6 = ssub.s32 1, %s4
  %s7 = scalar_select 0, %s6, %s4
  // Predicated region
  $region2: #{transformer_forward.24} parent=0 // pred_check
    _
  $region3: #{transformer_forward.24} parent=0 // pred_check_branch
    %9 = sbr.rel (0) target = $region5
  $region4: #{transformer_forward.24} parent=0 // pred_region
    _
  $region5: #{transformer_forward.24} parent=0 // pred_fallthru
    _
  // Predicated region
  $region6: #{transformer_forward.24} parent=0 // pred_check
    _
  $region7: #{transformer_forward.24} parent=0 // pred_check_branch
    %11 = sbr.rel (0) target = $region9
  $region8: #{transformer_forward.24} parent=0 // pred_region
    _
  $region9: #{transformer_forward.24} parent=0 // pred_fallthru
    _
  // Predicated region
  $region10: #{transformer_forward.24} parent=0 // pred_check
    _
  $region11: #{transformer_forward.24} parent=0 // pred_check_branch
    %13 = sbr.rel (0) target = $region13
  $region12: #{transformer_forward.24} parent=0 // pred_region
    _
  $region13: #{transformer_forward.24} parent=0 // pred_fallthru
    _
  %p15 = scmp.eq.s32.totalorder 0, 0
  // Predicated region
  $region14: #{transformer_forward.24} parent=0 // pred_check
    %p16 = pneg %p15
  $region15: #{transformer_forward.24} parent=0 // pred_check_branch
    %18 = sbr.rel (%p16) target = $region17
  $region16: #{transformer_forward.24} parent=0 // pred_region
    %19 = vst [vmem:[#allocation2] sm:$0xff] 0.0
    %20 = vst [vmem:[#allocation2 + $0x8] sm:$0xff] 0.0
  $region17: #{transformer_forward.24} parent=0 // pred_fallthru
    _
  %v21 = vld [vmem:[#allocation2] sm:$0xff]
  %v22 = vld [vmem:[#allocation2 + $0x8] sm:$0xff]
  %v23 = vld [vmem:[%s0] sm:$0xff]
  %v24 = vld [vmem:[%s0 + $0x8] sm:$0xff]
  %v25 = vpack.c.bf16 %v24, %v23
  %v26 = vld [vmem:[%s1] sm:$0xf]
  %v27 = vld [vmem:[%s1 + $0x4] sm:$0xf]
  %v28 = vld [vmem:[%s1 + $0x8] sm:$0xf]
  %v29 = vld [vmem:[%s1 + $0xc] sm:$0xf]
  %v34 = vunpack.c.l.b16 %v26
  %v35 = vunpack.c.l.b16 %v27
  %v36 = vunpack.c.l.b16 %v28
  %v37 = vunpack.c.l.b16 %v29
  %v38 = vpack.c.b16 %v35, %v34
  %v39 = vpack.c.b16 %v37, %v36
  %vm42 = vcmask 261120
  %v44 = vsel %vm42, %v25, 0
  %46 = vmatprep.subr.bf16.mxu0 0
  %47 = vmatpush1.bf16.msra.mxu0 %v38
  %48 = vmatprep.subr.bf16.mxu0 0
  %49 = vmatpush1.bf16.msra.mxu0 %v39
  %50 = vmatprep.subr.bf16.mxu0 0
  %51 = vmatpush1.bf16.msra.mxu0 0
  %52 = vmatprep.subr.bf16.mxu0 0
  %53 = vmatpush1.bf16.msra.mxu0 0
  %54 = vmatprep.subr.bf16.mxu0 0
  %55 = vmatpush1.bf16.msra.mxu0 0
  %56 = vmatprep.subr.bf16.mxu0 0
  %57 = vmatpush1.bf16.msra.mxu0 0
  %58 = vmatprep.subr.bf16.mxu0 0
  %59 = vmatpush1.bf16.msra.mxu0 0
  %60 = vmatprep.subr.bf16.mxu0 0
  %61 = vmatpush1.bf16.msra.mxu0 0
  %62 = vmatprep.subr.bf16.mxu0 0
  %63 = vmatpush1.bf16.msra.mxu0 0
  %64 = vmatprep.subr.bf16.mxu0 0
  %65 = vmatpush1.bf16.msra.mxu0 0
  %66 = vmatprep.subr.bf16.mxu0 0
  %67 = vmatpush1.bf16.msra.mxu0 0
  %68 = vmatprep.subr.bf16.mxu0 0
  %69 = vmatpush1.bf16.msra.mxu0 0
  %70 = vmatprep.subr.bf16.mxu0 0
  %71 = vmatpush1.bf16.msra.mxu0 0
  %72 = vmatprep.subr.bf16.mxu0 0
  %73 = vmatpush1.bf16.msra.mxu0 0
  %74 = vmatprep.subr.bf16.mxu0 0
  %75 = vmatpush1.bf16.msra.mxu0 0
  %76 = vmatprep.subr.bf16.mxu0 0
  %77 = vmatpush1.bf16.msra.mxu0 0
  %78 = vmatprep.mubr.bf16.mxu0 0
  %79 = vmatmul.mubr.bf16.gmra.mrb[0].mxu0 %v44
  %v80 = vpop.f32.mrb[0].mxu0
  %v81 = vadd.f32 0.0, %v80
  %v82 = vpop.f32.mrb[0].mxu0
  %v83 = vpop.f32.mrb[0].mxu0
  %v84 = vadd.f32 0.0, %v83
  %v85 = vpop.f32.mrb[0].mxu0
  %86 = vdwg.mxu0
  %v87 = vadd.f32 %v21, %v81
  %v88 = vadd.f32 %v22, %v84
  %89 = vst [vmem:[#allocation2] sm:$0xff] %v87
  %90 = vst [vmem:[#allocation2 + $0x8] sm:$0xff] %v88
  // Predicated region
  $region18: #{transformer_forward.24} parent=0 // pred_check
    %p91 = pneg %p15
  $region19: #{transformer_forward.24} parent=0 // pred_check_branch
    %93 = sbr.rel (%p91) target = $region21
  $region20: #{transformer_forward.24} parent=0 // pred_region
    %v94 = vld [vmem:[#allocation2] sm:$0xff]
    %v95 = vld [vmem:[#allocation2 + $0x8] sm:$0xff]
    %v96 = vld [vmem:[%s2] sm:$0x1]
    %v98 = vlaneseq
    %v99 = vshrl.u32 %v98, 7
    %v100 = vsub.s32 0, %v99
    %v101 = vrot.slane %v96, %v100
    %v103 = vadd.f32 %v94, %v101
    %v104 = vadd.f32 %v95, %v101
    %v105 = vmax.f32 %v103, 0.0
    %v106 = vmax.f32 %v104, 0.0
    %107 = vst [vmem:[%s3] sm:$0xff] %v105
    %108 = vst [vmem:[%s3 + $0x8] sm:$0xff] %v106
  $region21: #{transformer_forward.24} parent=0 // pred_fallthru
    _
  // Predicated region
  $region22: #{transformer_forward.24} parent=0 // pred_check
    _
  $region23: #{transformer_forward.24} parent=0 // pred_check_branch
    %110 = sbr.rel (0) target = $region25
  $region24: #{transformer_forward.24} parent=0 // pred_region
    _
  $region25: #{transformer_forward.24} parent=0 // pred_fallthru
    _
  // Predicated region
  $region26: #{transformer_forward.24} parent=0 // pred_check
    _
  $region27: #{transformer_forward.24} parent=0 // pred_check_branch
    %112 = sbr.rel (0) target = $region29
  $region28: #{transformer_forward.24} parent=0 // pred_region
    _
  $region29: #{transformer_forward.24} parent=0 // pred_fallthru
    _

// kernel: transformer_forward.28
$region0: #{transformer_forward.28}
  #allocation0 [shape = 'u32[]', space=smem, size = 0x4, offset = 0x4, fixed_abs, tag = 'smem constant byte address 0x4 - core index']
  #allocation1 [shape = 'u32[144,128]{1,0:T(1,128)}', space=vmem, size = 0x12000, scoped, tag = 'internal scratch']
  %s0 = inlined_call_operand.vmem [shape: f32[2,8,32], index: 0, kind: input, shape index: {}]
  %s1 = inlined_call_operand.vmem [shape: f32[2,8,64], index: 1, kind: input, shape index: {}]
  %s2 = inlined_call_operand.vmem [shape: f32[2,8,32], index: 2, kind: output, shape index: {}]
  %s3 = sld [smem:[#allocation0]]
  $region41: #{transformer_forward.28} parent=0
    _
  %s5 = ssub.s32 1, %s3
  %s6 = scalar_select 0, %s5, %s3
  loop: start=0, step=1, limit=4
  $region2: #{transformer_forward.28} parent=0 // loop_pre_header
    _
  $region3: #{transformer_forward.28} parent=0 // loop_header
    %s8 = sphi 0, %s12
    %p9 = scmp.ge.s32.totalorder %s8, 4
    %s18 = sphi 0, %s20
    %s21 = sphi 0, %s18
    %s22 = sphi 0, %s21
    %s38 = sphi 0, %s22
    %s44 = sphi 0, %s46
    %s47 = sphi 0, %s44
    %s48 = sphi 0, %s47
    %s64 = sphi 0, %s48
    %s70 = sphi 0, %s72
    %s73 = sphi 0, %s70
    %s74 = sphi 0, %s73
    %s90 = sphi 0, %s74
  $region4: #{transformer_forward.28} parent=0 // loop_header_branch
    %11 = sbr.rel (%p9) target = $region8
  $region5: #{transformer_forward.28} parent=0 // loop_body
    %s13 = ssub.s32 %s8, 1
    %s14 = ssub.s32 %s8, 2
    %s15 = sadd.s32 %s8, 1
    %s16 = ssub.s32 %s8, %s15
    %p17 = scmp.eq.s32.totalorder %s16, 0
    %s19 = sadd.s32 %s18, 1
    %s20 = scalar_select %p17, %s18, %s19
    %p23 = pneg %p17
    %p24 = scmp.eq.s32.totalorder %s8, 1
    %p25 = por %p23, %p24
    %p26 = scmp.ne.s32.totalorder %s18, %s21
    %p27 = scmp.eq.s32.totalorder %s8, 0
    %p28 = por %p26, %p27
    %p29 = scmp.ne.s32.totalorder %s18, %s21
    %p30 = scmp.eq.s32.totalorder %s13, 1
    %p31 = por %p29, %p30
    %p32 = scmp.ne.s32.totalorder %s21, %s22
    %p33 = scmp.eq.s32.totalorder %s13, 0
    %p34 = por %p32, %p33
    %p35 = scmp.ne.s32.totalorder %s21, %s22
    %p36 = scmp.eq.s32.totalorder %s14, 1
    %p37 = por %p35, %p36
    %p39 = scmp.ne.s32.totalorder %s22, %s38
    %p40 = scmp.eq.s32.totalorder %s14, 0
    %p41 = por %p39, %p40
    %s42 = ssub.s32 %s8, %s15
    %p43 = scmp.eq.s32.totalorder %s42, 0
    %s45 = sadd.s32 %s44, 1
    %s46 = scalar_select %p43, %s44, %s45
    %p49 = pneg %p43
    %p50 = scmp.eq.s32.totalorder %s8, 1
    %p51 = por %p49, %p50
    %p52 = scmp.ne.s32.totalorder %s44, %s47
    %p53 = scmp.eq.s32.totalorder %s8, 0
    %p54 = por %p52, %p53
    %p55 = scmp.ne.s32.totalorder %s44, %s47
    %p56 = scmp.eq.s32.totalorder %s13, 1
    %p57 = por %p55, %p56
    %p58 = scmp.ne.s32.totalorder %s47, %s48
    %p59 = scmp.eq.s32.totalorder %s13, 0
    %p60 = por %p58, %p59
    %p61 = scmp.ne.s32.totalorder %s47, %s48
    %p62 = scmp.eq.s32.totalorder %s14, 1
    %p63 = por %p61, %p62
    %p65 = scmp.ne.s32.totalorder %s48, %s64
    %p66 = scmp.eq.s32.totalorder %s14, 0
    %p67 = por %p65, %p66
    %s68 = ssub.s32 %s8, %s15
    %p69 = scmp.eq.s32.totalorder %s68, 0
    %s71 = sadd.s32 %s70, 1
    %s72 = scalar_select %p69, %s70, %s71
    %p75 = pneg %p69
    %p76 = scmp.eq.s32.totalorder %s8, 1
    %p77 = por %p75, %p76
    %p78 = scmp.ne.s32.totalorder %s70, %s73
    %p79 = scmp.eq.s32.totalorder %s8, 0
    %p80 = por %p78, %p79
    %p81 = scmp.ne.s32.totalorder %s70, %s73
    %p82 = scmp.eq.s32.totalorder %s13, 1
    %p83 = por %p81, %p82
    %p84 = scmp.ne.s32.totalorder %s73, %s74
    %p85 = scmp.eq.s32.totalorder %s13, 0
    %p86 = por %p84, %p85
    %p87 = scmp.ne.s32.totalorder %s73, %s74
    %p88 = scmp.eq.s32.totalorder %s14, 1
    %p89 = por %p87, %p88
    %p91 = scmp.ne.s32.totalorder %s74, %s90
    %p92 = scmp.eq.s32.totalorder %s14, 0
    %p93 = por %p91, %p92
    %p94 = scmp.le.s32.totalorder 1, %s8
    %p95 = scmp.lt.s32.totalorder %s8, 3
    %p96 = pnand %p94, %p95
    %p97 = pneg %p96
    // Predicated region
    $region9: #{transformer_forward.28} parent=5 // pred_check
      _
    $region10: #{transformer_forward.28} parent=5 // pred_check_branch
      %99 = sbr.rel (%p96) target = $region12
    $region11: #{transformer_forward.28} parent=5 // pred_region
      %s100 = ssub.s32 %s8, 1
    $region12: #{transformer_forward.28} parent=5 // pred_fallthru
      _
    %p101 = scmp.lt.s32.totalorder %s8, 2
    // Predicated region
    $region13: #{transformer_forward.28} parent=5 // pred_check
      %p102 = pneg %p101
    $region14: #{transformer_forward.28} parent=5 // pred_check_branch
      %104 = sbr.rel (%p102) target = $region16
    $region15: #{transformer_forward.28} parent=5 // pred_region
      // Predicated region
      $region17: #{transformer_forward.28} parent=15 // pred_check
        %p105 = pneg %p28
      $region18: #{transformer_forward.28} parent=15 // pred_check_branch
        %107 = sbr.rel (%p105) target = $region20
      $region19: #{transformer_forward.28} parent=15 // pred_region
        %p108 = scmp.lt.s32.totalorder %s8, 1
        %s109 = scalar_select %p108, %s8, 1
        %s110 = smul.addr %s109, 8
        %s111 = scalar_lea.vmem %s0, %s110
      $region20: #{transformer_forward.28} parent=15 // pred_fallthru
        _
      // Predicated region
      $region21: #{transformer_forward.28} parent=15 // pred_check
        %p112 = pneg %p54
      $region22: #{transformer_forward.28} parent=15 // pred_check_branch
        %114 = sbr.rel (%p112) target = $region24
      $region23: #{transformer_forward.28} parent=15 // pred_region
        %p115 = scmp.lt.s32.totalorder %s8, 1
        %s116 = scalar_select %p115, %s8, 1
        %s117 = smul.addr %s116, 8
        %s118 = scalar_lea.vmem %s1, %s117
      $region24: #{transformer_forward.28} parent=15 // pred_fallthru
        _
    $region16: #{transformer_forward.28} parent=5 // pred_fallthru
      _
    %p119 = scmp.le.s32.totalorder 1, %s8
    %p120 = scmp.lt.s32.totalorder %s8, 3
    %p121 = pnand %p119, %p120
    %p122 = pneg %p121
    // Predicated region
    $region25: #{transformer_forward.28} parent=5 // pred_check
      _
    $region26: #{transformer_forward.28} parent=5 // pred_check_branch
      %124 = sbr.rel (%p121) target = $region28
    $region27: #{transformer_forward.28} parent=5 // pred_region
      %s125 = ssub.s32 %s8, 1
      %p126 = scmp.lt.s32.totalorder %s13, 1
      %s127 = scalar_select %p126, %s13, 1
      %s128 = smul.addr %s127, 8
      %s129 = scalar_lea.vmem %s0, %s128
      %p130 = pneg %p34
      %p131 = pneg %p31
      %p132 = scmp.lt.s32.totalorder %s13, 1
      %s133 = scalar_select %p132, %s13, 1
      %s134 = smul.addr %s133, 8
      %s135 = scalar_lea.vmem %s1, %s134
      %p136 = pneg %p60
      %p137 = pneg %p57
      %p138 = pneg %p86
      %p139 = pneg %p83
      %p140 = scmp.lt.s32.totalorder %s13, 1
      %s141 = scalar_select %p140, %s13, 1
      %s142 = smul.addr %s141, 8
      %s143 = scalar_lea.vmem %s2, %s142
      %p144 = scmp.lt.s32.totalorder %s13, 1
      %s145 = scalar_select %p144, %s13, 1
      %s146 = smul.addr %s145, 8
      %s147 = scalar_lea.vmem %s0, %s146
      %p148 = scmp.lt.s32.totalorder %s13, 1
      %s149 = scalar_select %p148, %s13, 1
      %s150 = smul.addr %s149, 8
      %s151 = scalar_lea.vmem %s1, %s150
      %p152 = scmp.lt.s32.totalorder %s13, 1
      %s153 = scalar_select %p152, %s13, 1
      %s154 = smul.addr %s153, 8
      %s155 = scalar_lea.vmem %s2, %s154
      %v157 = vld [vmem:[%s147] sm:$0xff]
      %v158 = vld [vmem:[%s151] sm:$0xff]
      %v159 = vlaneseq
      %v160 = vshrl.u32 %v159, 7
      %v161 = vlaneseq
      %v162 = vand.u32 %v161, 127
      %vm163 = vcmp.gt.s32.totalorder %v162, %v160
      %v164 = vsel %vm163, -1e+09, 0.0
      %v165 = vpack.c.bf16 %v157, %v157
      %v166 = vpack.c.bf16 %v158, %v158
      %vm167 = vcmask 64512
      %v169 = vsel %vm167, %v165, 0
      %v172 = vsel %vm167, %v166, 0
      %174 = vmatprep.subr.bf16.mxu0 0
      %175 = vmatpush1.bf16.xpose.msra.mxu0 %v172
      %176 = vmatprep.subr.bf16.mxu0 0
      %177 = vmatpush1.bf16.xpose.msra.mxu0 0
      %178 = vmatprep.subr.bf16.mxu0 0
      %179 = vmatpush1.bf16.xpose.msra.mxu0 0
      %180 = vmatprep.subr.bf16.mxu0 0
      %181 = vmatpush1.bf16.xpose.msra.mxu0 0
      %182 = vmatprep.subr.bf16.mxu0 0
      %183 = vmatpush1.bf16.xpose.msra.mxu0 0
      %184 = vmatprep.subr.bf16.mxu0 0
      %185 = vmatpush1.bf16.xpose.msra.mxu0 0
      %186 = vmatprep.subr.bf16.mxu0 0
      %187 = vmatpush1.bf16.xpose.msra.mxu0 0
      %188 = vmatprep.subr.bf16.mxu0 0
      %189 = vmatpush1.bf16.xpose.msra.mxu0 0
      %190 = vmatprep.subr.bf16.mxu0 0
      %191 = vmatpush1.bf16.xpose.msra.mxu0 0
      %192 = vmatprep.subr.bf16.mxu0 0
      %193 = vmatpush1.bf16.xpose.msra.mxu0 0
      %194 = vmatprep.subr.bf16.mxu0 0
      %195 = vmatpush1.bf16.xpose.msra.mxu0 0
      %196 = vmatprep.subr.bf16.mxu0 0
      %197 = vmatpush1.bf16.xpose.msra.mxu0 0
      %198 = vmatprep.subr.bf16.mxu0 0
      %199 = vmatpush1.bf16.xpose.msra.mxu0 0
      %200 = vmatprep.subr.bf16.mxu0 0
      %201 = vmatpush1.bf16.xpose.msra.mxu0 0
      %202 = vmatprep.subr.bf16.mxu0 0
      %203 = vmatpush1.bf16.xpose.msra.mxu0 0
      %204 = vmatprep.subr.bf16.mxu0 0
      %205 = vmatpush1.bf16.xpose.msra.mxu0 0
      %206 = vmatprep.mubr.bf16.mxu0 0
      %207 = vmatmul.mubr.bf16.gmra.mrb[0].mxu0 %v169
      %v208 = vpop.f32.mrb[0].mxu0
      %v209 = vadd.f32 0.0, %v208
      %v210 = vpop.f32.mrb[0].mxu0
      %v211 = vpop.f32.mrb[0].mxu0
      %v212 = vpop.f32.mrb[0].mxu0
      %213 = vdwg.mxu0
      %v214 = vmul.f32 %v209, 0.35355338
      %v215 = vadd.f32 %v214, %v164
      %v216 = vsel %vm167, %v215, -inf
      %217 = vmax.xlane.f32.xlu0 %v216
      %v218 = vpop.xlane.xlu0 %217
      %v219 = vsub.f32 %v215, %v218
      %v220 = vmul.f32 %v219, 1.442695
      %v221 = vpow.pop %v220
      %v222 = vsel %vm167, %v221, 0.0
      %223 = vadd.xlane.f32.xlu0 %v222
      %v224 = vpop.xlane.xlu0 %223
      %v225 = vrcp.pop %v224
      %v226 = vmul.f32 %v221, %v225
      %v227 = vpack.c.bf16 %v226, %v226
      %229 = vrot.lane.b32.xlu0 %v166, 96
      %v230 = vpop.permute.xlu0 %229
      %v232 = vsel %vm167, %v227, 0
      %vm234 = vcmask 1043456
      %v236 = vsel %vm234, %v230, 0
      %238 = vmatprep.subr.bf16.mxu0 0
      %239 = vmatpush1.bf16.msra.mxu0 %v236
      %240 = vmatprep.subr.bf16.mxu0 0
      %241 = vmatpush1.bf16.msra.mxu0 0
      %242 = vmatprep.subr.bf16.mxu0 0
      %243 = vmatpush1.bf16.msra.mxu0 0
      %244 = vmatprep.subr.bf16.mxu0 0
      %245 = vmatpush1.bf16.msra.mxu0 0
      %246 = vmatprep.subr.bf16.mxu0 0
      %247 = vmatpush1.bf16.msra.mxu0 0
      %248 = vmatprep.subr.bf16.mxu0 0
      %249 = vmatpush1.bf16.msra.mxu0 0
      %250 = vmatprep.subr.bf16.mxu0 0
      %251 = vmatpush1.bf16.msra.mxu0 0
      %252 = vmatprep.subr.bf16.mxu0 0
      %253 = vmatpush1.bf16.msra.mxu0 0
      %254 = vmatprep.subr.bf16.mxu0 0
      %255 = vmatpush1.bf16.msra.mxu0 0
      %256 = vmatprep.subr.bf16.mxu0 0
      %257 = vmatpush1.bf16.msra.mxu0 0
      %258 = vmatprep.subr.bf16.mxu0 0
      %259 = vmatpush1.bf16.msra.mxu0 0
      %260 = vmatprep.subr.bf16.mxu0 0
      %261 = vmatpush1.bf16.msra.mxu0 0
      %262 = vmatprep.subr.bf16.mxu0 0
      %263 = vmatpush1.bf16.msra.mxu0 0
      %264 = vmatprep.subr.bf16.mxu0 0
      %265 = vmatpush1.bf16.msra.mxu0 0
      %266 = vmatprep.subr.bf16.mxu0 0
      %267 = vmatpush1.bf16.msra.mxu0 0
      %268 = vmatprep.subr.bf16.mxu0 0
      %269 = vmatpush1.bf16.msra.mxu0 0
      %270 = vmatprep.mubr.bf16.mxu0 0
      %271 = vmatmul.mubr.bf16.gmra.mrb[0].mxu0 %v232
      %v272 = vpop.f32.mrb[0].mxu0
      %v273 = vadd.f32 0.0, %v272
      %v274 = vpop.f32.mrb[0].mxu0
      %v275 = vpop.f32.mrb[0].mxu0
      %v276 = vpop.f32.mrb[0].mxu0
      %277 = vdwg.mxu0
      %279 = vrot.lane.b32.xlu0 %v165, 120
      %v280 = vpop.permute.xlu0 %279
      %281 = vrot.lane.b32.xlu0 %v166, 120
      %v282 = vpop.permute.xlu0 %281
      %v284 = vsel %vm167, %v280, 0
      %v287 = vsel %vm167, %v282, 0
      %289 = vmatprep.subr.bf16.mxu0 0
      %290 = vmatpush1.bf16.xpose.msra.mxu0 %v287
      %291 = vmatprep.subr.bf16.mxu0 0
      %292 = vmatpush1.bf16.xpose.msra.mxu0 0
      %293 = vmatprep.subr.bf16.mxu0 0
      %294 = vmatpush1.bf16.xpose.msra.mxu0 0
      %295 = vmatprep.subr.bf16.mxu0 0
      %296 = vmatpush1.bf16.xpose.msra.mxu0 0
      %297 = vmatprep.subr.bf16.mxu0 0
      %298 = vmatpush1.bf16.xpose.msra.mxu0 0
      %299 = vmatprep.subr.bf16.mxu0 0
      %300 = vmatpush1.bf16.xpose.msra.mxu0 0
      %301 = vmatprep.subr.bf16.mxu0 0
      %302 = vmatpush1.bf16.xpose.msra.mxu0 0
      %303 = vmatprep.subr.bf16.mxu0 0
      %304 = vmatpush1.bf16.xpose.msra.mxu0 0
      %305 = vmatprep.subr.bf16.mxu0 0
      %306 = vmatpush1.bf16.xpose.msra.mxu0 0
      %307 = vmatprep.subr.bf16.mxu0 0
      %308 = vmatpush1.bf16.xpose.msra.mxu0 0
      %309 = vmatprep.subr.bf16.mxu0 0
      %310 = vmatpush1.bf16.xpose.msra.mxu0 0
      %311 = vmatprep.subr.bf16.mxu0 0
      %312 = vmatpush1.bf16.xpose.msra.mxu0 0
      %313 = vmatprep.subr.bf16.mxu0 0
      %314 = vmatpush1.bf16.xpose.msra.mxu0 0
      %315 = vmatprep.subr.bf16.mxu0 0
      %316 = vmatpush1.bf16.xpose.msra.mxu0 0
      %317 = vmatprep.subr.bf16.mxu0 0
      %318 = vmatpush1.bf16.xpose.msra.mxu0 0
      %319 = vmatprep.subr.bf16.mxu0 0
      %320 = vmatpush1.bf16.xpose.msra.mxu0 0
      %321 = vmatprep.mubr.bf16.mxu0 0
      %322 = vmatmul.mubr.bf16.gmra.mrb[0].mxu0 %v284
      %v323 = vpop.f32.mrb[0].mxu0
      %v324 = vadd.f32 0.0, %v323
      %v325 = vpop.f32.mrb[0].mxu0
      %v326 = vpop.f32.mrb[0].mxu0
      %v327 = vpop.f32.mrb[0].mxu0
      %328 = vdwg.mxu0
      %v329 = vmul.f32 %v324, 0.35355338
      %v330 = vadd.f32 %v329, %v164
      %v331 = vsel %vm167, %v330, -inf
      %332 = vmax.xlane.f32.xlu0 %v331
      %v333 = vpop.xlane.xlu0 %332
      %v334 = vsub.f32 %v330, %v333
      %v335 = vmul.f32 %v334, 1.442695
      %v336 = vpow.pop %v335
      %v337 = vsel %vm167, %v336, 0.0
      %338 = vadd.xlane.f32.xlu0 %v337
      %v339 = vpop.xlane.xlu0 %338
      %v340 = vrcp.pop %v339
      %v341 = vmul.f32 %v336, %v340
      %v342 = vpack.c.bf16 %v341, %v341
      %343 = vrot.lane.b32.xlu0 %v166, 88
      %v344 = vpop.permute.xlu0 %343
      %v346 = vsel %vm167, %v342, 0
      %v349 = vsel %vm234, %v344, 0
      %351 = vmatprep.subr.bf16.mxu0 0
      %352 = vmatpush1.bf16.msra.mxu0 %v349
      %353 = vmatprep.subr.bf16.mxu0 0
      %354 = vmatpush1.bf16.msra.mxu0 0
      %355 = vmatprep.subr.bf16.mxu0 0
      %356 = vmatpush1.bf16.msra.mxu0 0
      %357 = vmatprep.subr.bf16.mxu0 0
      %358 = vmatpush1.bf16.msra.mxu0 0
      %359 = vmatprep.subr.bf16.mxu0 0
      %360 = vmatpush1.bf16.msra.mxu0 0
      %361 = vmatprep.subr.bf16.mxu0 0
      %362 = vmatpush1.bf16.msra.mxu0 0
      %363 = vmatprep.subr.bf16.mxu0 0
      %364 = vmatpush1.bf16.msra.mxu0 0
      %365 = vmatprep.subr.bf16.mxu0 0
      %366 = vmatpush1.bf16.msra.mxu0 0
      %367 = vmatprep.subr.bf16.mxu0 0
      %368 = vmatpush1.bf16.msra.mxu0 0
      %369 = vmatprep.subr.bf16.mxu0 0
      %370 = vmatpush1.bf16.msra.mxu0 0
      %371 = vmatprep.subr.bf16.mxu0 0
      %372 = vmatpush1.bf16.msra.mxu0 0
      %373 = vmatprep.subr.bf16.mxu0 0
      %374 = vmatpush1.bf16.msra.mxu0 0
      %375 = vmatprep.subr.bf16.mxu0 0
      %376 = vmatpush1.bf16.msra.mxu0 0
      %377 = vmatprep.subr.bf16.mxu0 0
      %378 = vmatpush1.bf16.msra.mxu0 0
      %379 = vmatprep.subr.bf16.mxu0 0
      %380 = vmatpush1.bf16.msra.mxu0 0
      %381 = vmatprep.subr.bf16.mxu0 0
      %382 = vmatpush1.bf16.msra.mxu0 0
      %383 = vmatprep.mubr.bf16.mxu0 0
      %384 = vmatmul.mubr.bf16.gmra.mrb[0].mxu0 %v346
      %v385 = vpop.f32.mrb[0].mxu0
      %v386 = vadd.f32 0.0, %v385
      %v387 = vpop.f32.mrb[0].mxu0
      %v388 = vpop.f32.mrb[0].mxu0
      %v389 = vpop.f32.mrb[0].mxu0
      %390 = vdwg.mxu0
      %391 = vrot.lane.b32.xlu0 %v165, 112
      %v392 = vpop.permute.xlu0 %391
      %393 = vrot.lane.b32.xlu0 %v166, 112
      %v394 = vpop.permute.xlu0 %393
      %v396 = vsel %vm167, %v392, 0
      %v399 = vsel %vm167, %v394, 0
      %401 = vmatprep.subr.bf16.mxu0 0
      %402 = vmatpush1.bf16.xpose.msra.mxu0 %v399
      %403 = vmatprep.subr.bf16.mxu0 0
      %404 = vmatpush1.bf16.xpose.msra.mxu0 0
      %405 = vmatprep.subr.bf16.mxu0 0
      %406 = vmatpush1.bf16.xpose.msra.mxu0 0
      %407 = vmatprep.subr.bf16.mxu0 0
      %408 = vmatpush1.bf16.xpose.msra.mxu0 0
      %409 = vmatprep.subr.bf16.mxu0 0
      %410 = vmatpush1.bf16.xpose.msra.mxu0 0
      %411 = vmatprep.subr.bf16.mxu0 0
      %412 = vmatpush1.bf16.xpose.msra.mxu0 0
      %413 = vmatprep.subr.bf16.mxu0 0
      %414 = vmatpush1.bf16.xpose.msra.mxu0 0
      %415 = vmatprep.subr.bf16.mxu0 0
      %416 = vmatpush1.bf16.xpose.msra.mxu0 0
      %417 = vmatprep.subr.bf16.mxu0 0
      %418 = vmatpush1.bf16.xpose.msra.mxu0 0
      %419 = vmatprep.subr.bf16.mxu0 0
      %420 = vmatpush1.bf16.xpose.msra.mxu0 0
      %421 = vmatprep.subr.bf16.mxu0 0
      %422 = vmatpush1.bf16.xpose.msra.mxu0 0
      %423 = vmatprep.subr.bf16.mxu0 0
      %424 = vmatpush1.bf16.xpose.msra.mxu0 0
      %425 = vmatprep.subr.bf16.mxu0 0
      %426 = vmatpush1.bf16.xpose.msra.mxu0 0
      %427 = vmatprep.subr.bf16.mxu0 0
      %428 = vmatpush1.bf16.xpose.msra.mxu0 0
      %429 = vmatprep.subr.bf16.mxu0 0
      %430 = vmatpush1.bf16.xpose.msra.mxu0 0
      %431 = vmatprep.subr.bf16.mxu0 0
      %432 = vmatpush1.bf16.xpose.msra.mxu0 0
      %433 = vmatprep.mubr.bf16.mxu0 0
      %434 = vmatmul.mubr.bf16.gmra.mrb[0].mxu0 %v396
      %v435 = vpop.f32.mrb[0].mxu0
      %v436 = vadd.f32 0.0, %v435
      %v437 = vpop.f32.mrb[0].mxu0
      %v438 = vpop.f32.mrb[0].mxu0
      %v439 = vpop.f32.mrb[0].mxu0
      %440 = vdwg.mxu0
      %v441 = vmul.f32 %v436, 0.35355338
      %v442 = vadd.f32 %v441, %v164
      %v443 = vsel %vm167, %v442, -inf
      %444 = vmax.xlane.f32.xlu0 %v443
      %v445 = vpop.xlane.xlu0 %444
      %v446 = vsub.f32 %v442, %v445
      %v447 = vmul.f32 %v446, 1.442695
      %v448 = vpow.pop %v447
      %v449 = vsel %vm167, %v448, 0.0
      %450 = vadd.xlane.f32.xlu0 %v449
      %v451 = vpop.xlane.xlu0 %450
      %v452 = vrcp.pop %v451
      %v453 = vmul.f32 %v448, %v452
      %v454 = vpack.c.bf16 %v453, %v453
      %455 = vrot.lane.b32.xlu0 %v166, 80
      %v456 = vpop.permute.xlu0 %455
      %v458 = vsel %vm167, %v454, 0
      %v461 = vsel %vm234, %v456, 0
      %463 = vmatprep.subr.bf16.mxu0 0
      %464 = vmatpush1.bf16.msra.mxu0 %v461
      %465 = vmatprep.subr.bf16.mxu0 0
      %466 = vmatpush1.bf16.msra.mxu0 0
      %467 = vmatprep.subr.bf16.mxu0 0
      %468 = vmatpush1.bf16.msra.mxu0 0
      %469 = vmatprep.subr.bf16.mxu0 0
      %470 = vmatpush1.bf16.msra.mxu0 0
      %471 = vmatprep.subr.bf16.mxu0 0
      %472 = vmatpush1.bf16.msra.mxu0 0
      %473 = vmatprep.subr.bf16.mxu0 0
      %474 = vmatpush1.bf16.msra.mxu0 0
      %475 = vmatprep.subr.bf16.mxu0 0
      %476 = vmatpush1.bf16.msra.mxu0 0
      %477 = vmatprep.subr.bf16.mxu0 0
      %478 = vmatpush1.bf16.msra.mxu0 0
      %479 = vmatprep.subr.bf16.mxu0 0
      %480 = vmatpush1.bf16.msra.mxu0 0
      %481 = vmatprep.subr.bf16.mxu0 0
      %482 = vmatpush1.bf16.msra.mxu0 0
      %483 = vmatprep.subr.bf16.mxu0 0
      %484 = vmatpush1.bf16.msra.mxu0 0
      %485 = vmatprep.subr.bf16.mxu0 0
      %486 = vmatpush1.bf16.msra.mxu0 0
      %487 = vmatprep.subr.bf16.mxu0 0
      %488 = vmatpush1.bf16.msra.mxu0 0
      %489 = vmatprep.subr.bf16.mxu0 0
      %490 = vmatpush1.bf16.msra.mxu0 0
      %491 = vmatprep.subr.bf16.mxu0 0
      %492 = vmatpush1.bf16.msra.mxu0 0
      %493 = vmatprep.subr.bf16.mxu0 0
      %494 = vmatpush1.bf16.msra.mxu0 0
      %495 = vmatprep.mubr.bf16.mxu0 0
      %496 = vmatmul.mubr.bf16.gmra.mrb[0].mxu0 %v458
      %v497 = vpop.f32.mrb[0].mxu0
      %v498 = vadd.f32 0.0, %v497
      %v499 = vpop.f32.mrb[0].mxu0
      %v500 = vpop.f32.mrb[0].mxu0
      %v501 = vpop.f32.mrb[0].mxu0
      %502 = vdwg.mxu0
      %503 = vrot.lane.b32.xlu0 %v165, 104
      %v504 = vpop.permute.xlu0 %503
      %505 = vrot.lane.b32.xlu0 %v166, 104
      %v506 = vpop.permute.xlu0 %505
      %v508 = vsel %vm167, %v504, 0
      %v511 = vsel %vm167, %v506, 0
      %513 = vmatprep.subr.bf16.mxu0 0
      %514 = vmatpush1.bf16.xpose.msra.mxu0 %v511
      %515 = vmatprep.subr.bf16.mxu0 0
      %516 = vmatpush1.bf16.xpose.msra.mxu0 0
      %517 = vmatprep.subr.bf16.mxu0 0
      %518 = vmatpush1.bf16.xpose.msra.mxu0 0
      %519 = vmatprep.subr.bf16.mxu0 0
      %520 = vmatpush1.bf16.xpose.msra.mxu0 0
      %521 = vmatprep.subr.bf16.mxu0 0
      %522 = vmatpush1.bf16.xpose.msra.mxu0 0
      %523 = vmatprep.subr.bf16.mxu0 0
      %524 = vmatpush1.bf16.xpose.msra.mxu0 0
      %525 = vmatprep.subr.bf16.mxu0 0
      %526 = vmatpush1.bf16.xpose.msra.mxu0 0
      %527 = vmatprep.subr.bf16.mxu0 0
      %528 = vmatpush1.bf16.xpose.msra.mxu0 0
      %529 = vmatprep.subr.bf16.mxu0 0
      %530 = vmatpush1.bf16.xpose.msra.mxu0 0
      %531 = vmatprep.subr.bf16.mxu0 0
      %532 = vmatpush1.bf16.xpose.msra.mxu0 0
      %533 = vmatprep.subr.bf16.mxu0 0
      %534 = vmatpush1.bf16.xpose.msra.mxu0 0
      %535 = vmatprep.subr.bf16.mxu0 0
      %536 = vmatpush1.bf16.xpose.msra.mxu0 0
      %537 = vmatprep.subr.bf16.mxu0 0
      %538 = vmatpush1.bf16.xpose.msra.mxu0 0
      %539 = vmatprep.subr.bf16.mxu0 0
      %540 = vmatpush1.bf16.xpose.msra.mxu0 0
      %541 = vmatprep.subr.bf16.mxu0 0
      %542 = vmatpush1.bf16.xpose.msra.mxu0 0
      %543 = vmatprep.subr.bf16.mxu0 0
      %544 = vmatpush1.bf16.xpose.msra.mxu0 0
      %545 = vmatprep.mubr.bf16.mxu0 0
      %546 = vmatmul.mubr.bf16.gmra.mrb[0].mxu0 %v508
      %v547 = vpop.f32.mrb[0].mxu0
      %v548 = vadd.f32 0.0, %v547
      %v549 = vpop.f32.mrb[0].mxu0
      %v550 = vpop.f32.mrb[0].mxu0
      %v551 = vpop.f32.mrb[0].mxu0
      %552 = vdwg.mxu0
      %v553 = vmul.f32 %v548, 0.35355338
      %v554 = vadd.f32 %v553, %v164
      %v555 = vsel %vm167, %v554, -inf
      %556 = vmax.xlane.f32.xlu0 %v555
      %v557 = vpop.xlane.xlu0 %556
      %v558 = vsub.f32 %v554, %v557
      %v559 = vmul.f32 %v558, 1.442695
      %v560 = vpow.pop %v559
      %v561 = vsel %vm167, %v560, 0.0
      %562 = vadd.xlane.f32.xlu0 %v561
      %v563 = vpop.xlane.xlu0 %562
      %v564 = vrcp.pop %v563
      %v565 = vmul.f32 %v560, %v564
      %v566 = vpack.c.bf16 %v565, %v565
      %567 = vrot.lane.b32.xlu0 %v166, 72
      %v568 = vpop.permute.xlu0 %567
      %v570 = vsel %vm167, %v566, 0
      %v573 = vsel %vm234, %v568, 0
      %575 = vmatprep.subr.bf16.mxu0 0
      %576 = vmatpush1.bf16.msra.mxu0 %v573
      %577 = vmatprep.subr.bf16.mxu0 0
      %578 = vmatpush1.bf16.msra.mxu0 0
      %579 = vmatprep.subr.bf16.mxu0 0
      %580 = vmatpush1.bf16.msra.mxu0 0
      %581 = vmatprep.subr.bf16.mxu0 0
      %582 = vmatpush1.bf16.msra.mxu0 0
      %583 = vmatprep.subr.bf16.mxu0 0
      %584 = vmatpush1.bf16.msra.mxu0 0
      %585 = vmatprep.subr.bf16.mxu0 0
      %586 = vmatpush1.bf16.msra.mxu0 0
      %587 = vmatprep.subr.bf16.mxu0 0
      %588 = vmatpush1.bf16.msra.mxu0 0
      %589 = vmatprep.subr.bf16.mxu0 0
      %590 = vmatpush1.bf16.msra.mxu0 0
      %591 = vmatprep.subr.bf16.mxu0 0
      %592 = vmatpush1.bf16.msra.mxu0 0
      %593 = vmatprep.subr.bf16.mxu0 0
      %594 = vmatpush1.bf16.msra.mxu0 0
      %595 = vmatprep.subr.bf16.mxu0 0
      %596 = vmatpush1.bf16.msra.mxu0 0
      %597 = vmatprep.subr.bf16.mxu0 0
      %598 = vmatpush1.bf16.msra.mxu0 0
      %599 = vmatprep.subr.bf16.mxu0 0
      %600 = vmatpush1.bf16.msra.mxu0 0
      %601 = vmatprep.subr.bf16.mxu0 0
      %602 = vmatpush1.bf16.msra.mxu0 0
      %603 = vmatprep.subr.bf16.mxu0 0
      %604 = vmatpush1.bf16.msra.mxu0 0
      %605 = vmatprep.subr.bf16.mxu0 0
      %606 = vmatpush1.bf16.msra.mxu0 0
      %607 = vmatprep.mubr.bf16.mxu0 0
      %608 = vmatmul.mubr.bf16.gmra.mrb[0].mxu0 %v570
      %v609 = vpop.f32.mrb[0].mxu0
      %v610 = vadd.f32 0.0, %v609
      %v611 = vpop.f32.mrb[0].mxu0
      %v612 = vpop.f32.mrb[0].mxu0
      %v613 = vpop.f32.mrb[0].mxu0
      %614 = vdwg.mxu0
      %616 = vrot.lane.b32.xlu0 %v386, 8
      %v617 = vpop.permute.xlu0 %616
      %620 = vrot.lane.b32.xlu0 %v498, 16
      %v621 = vpop.permute.xlu0 %620
      %624 = vrot.lane.b32.xlu0 %v610, 24
      %v625 = vpop.permute.xlu0 %624
      %v627 = vsel %vm167, %v273, %v617
      %vm628 = vcmask 130048
      %v629 = vsel %vm628, %v627, %v621
      %vm630 = vcmask 195584
      %v631 = vsel %vm630, %v629, %v625
      %vm632 = vcmask 261120
      %633 = vst.msk [vmem:[%s155] sm:$0xff] %vm632, %v631
      %p634 = scmp.lt.s32.totalorder %s13, 1
      %s635 = scalar_select %p634, %s13, 1
      %s636 = smul.addr %s635, 8
      %s637 = scalar_lea.vmem %s2, %s636
      // Predicated region
      $region29: #{transformer_forward.28} parent=27 // pred_check
        %p638 = pneg %p83
      $region30: #{transformer_forward.28} parent=27 // pred_check_branch
        %640 = sbr.rel (%p638) target = $region32
      $region31: #{transformer_forward.28} parent=27 // pred_region
        _
      $region32: #{transformer_forward.28} parent=27 // pred_fallthru
        _
    $region28: #{transformer_forward.28} parent=5 // pred_fallthru
      _
    %p641 = scmp.le.s32.totalorder 2, %s8
    // Predicated region
    $region33: #{transformer_forward.28} parent=5 // pred_check
      %p642 = pneg %p641
    $region34: #{transformer_forward.28} parent=5 // pred_check_branch
      %644 = sbr.rel (%p642) target = $region36
    $region35: #{transformer_forward.28} parent=5 // pred_region
      %s645 = ssub.s32 %s8, 2
      // Predicated region
      $region37: #{transformer_forward.28} parent=35 // pred_check
        %p646 = pneg %p89
      $region38: #{transformer_forward.28} parent=35 // pred_check_branch
        %648 = sbr.rel (%p646) target = $region40
      $region39: #{transformer_forward.28} parent=35 // pred_region
        %p649 = scmp.lt.s32.totalorder %s14, 1
        %s650 = scalar_select %p649, %s14, 1
        %s651 = smul.addr %s650, 8
        %s652 = scalar_lea.vmem %s2, %s651
      $region40: #{transformer_forward.28} parent=35 // pred_fallthru
        _
    $region36: #{transformer_forward.28} parent=5 // pred_fallthru
      _
  $region6: #{transformer_forward.28} parent=0 // loop_footer
    %s12 = sadd.s32 1, %s8
  $region7: #{transformer_forward.28} parent=0 // loop_footer_branch
    %7 = sbr.rel target = $region3
  $region8: #{transformer_forward.28} parent=0 // loop_exit
    _

// kernel: transformer_forward.39
$region0: #{transformer_forward.39}
  #allocation0 [shape = 'u32[]', space=smem, size = 0x4, offset = 0x4, fixed_abs, tag = 'smem constant byte address 0x4 - core index']
  #allocation1 [shape = 'u32[144,128]{1,0:T(1,128)}', space=vmem, size = 0x12000, scoped, tag = 'internal scratch']
  #allocation2 [shape = 'f32[16,64]{1,0:T(8,128)}', space=vmem, size = 0x2000, scoped, tag = 'scratch operand']
  %s0 = inlined_call_operand.vmem [shape: f32[16,32], index: 0, kind: input, shape index: {}]
  %s1 = inlined_call_operand.vmem [shape: bf16[32,64], index: 1, kind: input, shape index: {}]
  %s2 = inlined_call_operand.vmem [shape: f32[1,64], index: 2, kind: input, shape index: {}]
  %s3 = inlined_call_operand.hbm [shape: f32[16,64], index: 3, kind: output, shape index: {}]
  %s4 = sld [smem:[#allocation0]]
  $region30: #{transformer_forward.39} parent=0
    _
  %s6 = ssub.s32 1, %s4
  %s7 = scalar_select 0, %s6, %s4
  $region1: #{transformer_forward.39} parent=0
    #allocation3 [shape = 'u8[8192]{0}', space=vmem, size = 0x2000, scoped, tag = 'output window, operand 0, single buffered']
    #allocation4 [shape = 's32[1]{0}', space=sflag, size = 0x4, scoped, tag = 'scoped memory for transformer_forward.39']
    %8 = vsyncpa [#allocation4], 0
    // Predicated region
    $region2: #{transformer_forward.39} parent=1 // pred_check
      _
    $region3: #{transformer_forward.39} parent=1 // pred_check_branch
      %10 = sbr.rel (0) target = $region5
    $region4: #{transformer_forward.39} parent=1 // pred_region
      _
    $region5: #{transformer_forward.39} parent=1 // pred_fallthru
      _
    // Predicated region
    $region6: #{transformer_forward.39} parent=1 // pred_check
      _
    $region7: #{transformer_forward.39} parent=1 // pred_check_branch
      %12 = sbr.rel (0) target = $region9
    $region8: #{transformer_forward.39} parent=1 // pred_region
      _
    $region9: #{transformer_forward.39} parent=1 // pred_fallthru
      _
    // Predicated region
    $region10: #{transformer_forward.39} parent=1 // pred_check
      _
    $region11: #{transformer_forward.39} parent=1 // pred_check_branch
      %14 = sbr.rel (0) target = $region13
    $region12: #{transformer_forward.39} parent=1 // pred_region
      _
    $region13: #{transformer_forward.39} parent=1 // pred_fallthru
      _
    %p16 = scmp.eq.s32.totalorder 0, 0
    // Predicated region
    $region14: #{transformer_forward.39} parent=1 // pred_check
      %p17 = pneg %p16
    $region15: #{transformer_forward.39} parent=1 // pred_check_branch
      %19 = sbr.rel (%p17) target = $region17
    $region16: #{transformer_forward.39} parent=1 // pred_region
      %vm20 = vcmask 523264
      %21 = vst.msk [vmem:[#allocation2] sm:$0xff] %vm20, 0.0
      %22 = vst.msk [vmem:[#allocation2 + $0x8] sm:$0xff] %vm20, 0.0
    $region17: #{transformer_forward.39} parent=1 // pred_fallthru
      _
    %v23 = vld [vmem:[#allocation2] sm:$0xff]
    %v24 = vld [vmem:[#allocation2 + $0x8] sm:$0xff]
    %v25 = vld [vmem:[%s0] sm:$0xff]
    %v26 = vld [vmem:[%s0 + $0x8] sm:$0xff]
    %v27 = vpack.c.bf16 %v26, %v25
    %v28 = vld [vmem:[%s1] sm:$0xf]
    %v29 = vld [vmem:[%s1 + $0x4] sm:$0xf]
    %v30 = vld [vmem:[%s1 + $0x8] sm:$0xf]
    %v31 = vld [vmem:[%s1 + $0xc] sm:$0xf]
    %v36 = vunpack.c.l.b16 %v28
    %v37 = vunpack.c.l.b16 %v29
    %v38 = vunpack.c.l.b16 %v30
    %v39 = vunpack.c.l.b16 %v31
    %v40 = vpack.c.b16 %v37, %v36
    %v41 = vpack.c.b16 %v39, %v38
    %vm44 = vcmask 261120
    %v46 = vsel %vm44, %v27, 0
    %48 = vmatprep.subr.bf16.mxu0 0
    %49 = vmatpush1.bf16.msra.mxu0 %v40
    %50 = vmatprep.subr.bf16.mxu0 0
    %51 = vmatpush1.bf16.msra.mxu0 %v41
    %52 = vmatprep.subr.bf16.mxu0 0
    %53 = vmatpush1.bf16.msra.mxu0 0
    %54 = vmatprep.subr.bf16.mxu0 0
    %55 = vmatpush1.bf16.msra.mxu0 0
    %56 = vmatprep.subr.bf16.mxu0 0
    %57 = vmatpush1.bf16.msra.mxu0 0
    %58 = vmatprep.subr.bf16.mxu0 0
    %59 = vmatpush1.bf16.msra.mxu0 0
    %60 = vmatprep.subr.bf16.mxu0 0
    %61 = vmatpush1.bf16.msra.mxu0 0
    %62 = vmatprep.subr.bf16.mxu0 0
    %63 = vmatpush1.bf16.msra.mxu0 0
    %64 = vmatprep.subr.bf16.mxu0 0
    %65 = vmatpush1.bf16.msra.mxu0 0
    %66 = vmatprep.subr.bf16.mxu0 0
    %67 = vmatpush1.bf16.msra.mxu0 0
    %68 = vmatprep.subr.bf16.mxu0 0
    %69 = vmatpush1.bf16.msra.mxu0 0
    %70 = vmatprep.subr.bf16.mxu0 0
    %71 = vmatpush1.bf16.msra.mxu0 0
    %72 = vmatprep.subr.bf16.mxu0 0
    %73 = vmatpush1.bf16.msra.mxu0 0
    %74 = vmatprep.subr.bf16.mxu0 0
    %75 = vmatpush1.bf16.msra.mxu0 0
    %76 = vmatprep.subr.bf16.mxu0 0
    %77 = vmatpush1.bf16.msra.mxu0 0
    %78 = vmatprep.subr.bf16.mxu0 0
    %79 = vmatpush1.bf16.msra.mxu0 0
    %80 = vmatprep.mubr.bf16.mxu0 0
    %81 = vmatmul.mubr.bf16.gmra.mrb[0].mxu0 %v46
    %v82 = vpop.f32.mrb[0].mxu0
    %v83 = vadd.f32 0.0, %v82
    %v84 = vpop.f32.mrb[0].mxu0
    %v85 = vpop.f32.mrb[0].mxu0
    %v86 = vadd.f32 0.0, %v85
    %v87 = vpop.f32.mrb[0].mxu0
    %88 = vdwg.mxu0
    %v89 = vadd.f32 %v23, %v83
    %v90 = vadd.f32 %v24, %v86
    %vm91 = vcmask 523264
    %92 = vst.msk [vmem:[#allocation2] sm:$0xff] %vm91, %v89
    %93 = vst.msk [vmem:[#allocation2 + $0x8] sm:$0xff] %vm91, %v90
    // Predicated region
    $region18: #{transformer_forward.39} parent=1 // pred_check
      %p94 = pneg %p16
    $region19: #{transformer_forward.39} parent=1 // pred_check_branch
      %96 = sbr.rel (%p94) target = $region21
    $region20: #{transformer_forward.39} parent=1 // pred_region
      %v97 = vld [vmem:[#allocation2] sm:$0xff]
      %v98 = vld [vmem:[#allocation2 + $0x8] sm:$0xff]
      %v99 = vld [vmem:[%s2] sm:$0x1]
      %v101 = vlaneseq
      %v102 = vshrl.u32 %v101, 7
      %v103 = vsub.s32 0, %v102
      %v104 = vrot.slane %v99, %v103
      %v106 = vadd.f32 %v97, %v104
      %v107 = vadd.f32 %v98, %v104
      %108 = vst.msk [vmem:[#allocation3] sm:$0xff] %vm91, %v106
      %109 = vst.msk [vmem:[#allocation3 + $0x8] sm:$0xff] %vm91, %v107
    $region21: #{transformer_forward.39} parent=1 // pred_fallthru
      _
    // Predicated region
    $region22: #{transformer_forward.39} parent=1 // pred_check
      _
    $region23: #{transformer_forward.39} parent=1 // pred_check_branch
      %111 = sbr.rel (0) target = $region25
    $region24: #{transformer_forward.39} parent=1 // pred_region
      %s113 = ssub.s32 256, 256
      %114 = vsyncadd [#allocation4], %s113
      %s115 = sshll.u32 [#allocation3], 4
      %s116 = int_to_ptr.vmem [resolvable:$true] %s115
      %121 = dma.vmem_to_hbm [thread:$0]  %s116, 256, %s3, [#allocation4], 128, 128, 8
    $region25: #{transformer_forward.39} parent=1 // pred_fallthru
      _
    // Predicated region
    $region26: #{transformer_forward.39} parent=1 // pred_check
      _
    $region27: #{transformer_forward.39} parent=1 // pred_check_branch
      %123 = sbr.rel (0) target = $region29
    $region28: #{transformer_forward.39} parent=1 // pred_region
      %124 = dma.done [#allocation4], 256
    $region29: #{transformer_forward.39} parent=1 // pred_fallthru
      _
    %125 = vsyncpa [#allocation4], 1

</llo_original>
